<compile_context>
chip_gen: v7x
topology: tpu7x:2x2x1
jax: 0.10.0
libtpu: 0.0.40
codegen_flags: <defaults>
</compile_context>

<pallas_src>
import functools

import jax
import jax.numpy as jnp
from jax import lax
from jax.experimental import pallas as pl
from jax.experimental.pallas import tpu as pltpu

raw_text = ('We are about to study the idea of a computational process.\n'
            'Computational processes are abstract beings that inhabit computers.\n'
            'As they evolve, processes manipulate other abstract things called data.\n'
            'The evolution of a process is directed by a pattern of rules\n'
            'called a program. People create programs to direct processes. In effect,\n'
            'we conjure the spirits of the computer with our spells.').split()

vocab = sorted(set(raw_text))            # sorted for determinism
VOCAB_SIZE = len(vocab)
VOCAB_PAD = ((VOCAB_SIZE + 127) // 128) * 128   # lane-dense padded vocab width
EMBEDDING_DIM = 16
HIDDEN = 128
CTX = 4                                   # 2 words left + 2 words right

NEG_LARGE = -1e30                         # finite -inf stand-in for padded logits (f32 only)


def _device_kind():
    try:
        return jax.devices()[0].device_kind.lower()
    except Exception:
        return ""


def pick_batch_tile(B):
    kind = _device_kind()
    if "v7" in kind:
        # Keep >= 2 grid steps at small B so both v7x TensorCores get work.
        tb = 256 if B >= 512 else 128
    else:
        # v6e: fill the 256-wide MXU M dim; v5e: fewer ~600-cycle grid steps.
        tb = 256
    tb = min(tb, B)
    while tb > 8 and B % tb != 0:
        tb //= 2
    return tb


def pick_counts_dtype():
    # v5e has no bf16 VPU -> accumulate the one-hot counts in f32 there.
    return jnp.float32 if "v5" in _device_kind() else jnp.bfloat16


def cbow_kernel(counts_dtype, idx_ref, ew1_ref, b1_ref, w2_ref, b2_ref, out_ref):
    tb = idx_ref.shape[0]
    vp = ew1_ref.shape[0]

    # ---- embedding gather + sum over context, fused with linear1 ----
    # Build a (TB, Vp) one-hot count matrix and multiply by the precomputed
    # (emb @ w1^T) table on the MXU: counts @ emb_w1 == linear1(sum of rows).
    ids = idx_ref[...]                                          # (TB, CTX) int32
    vocab_iota = lax.broadcasted_iota(jnp.int32, (tb, vp), 1)   # (TB, Vp)
    counts = jnp.zeros((tb, vp), counts_dtype)
    for i in range(CTX):                                        # CTX static -> unrolled
        counts += (vocab_iota == ids[:, i:i + 1]).astype(counts_dtype)

    h = jnp.dot(counts.astype(ew1_ref.dtype), ew1_ref[...],
                preferred_element_type=jnp.float32) + b1_ref[...]   # (TB, 128) f32
    h = jnp.maximum(h, 0.0)

    # ---- linear2 ----
    # Padded vocab lanes: w2 pad columns are 0 and b2 pad lanes are NEG_LARGE,
    # so o_pad == -1e30 without any in-kernel mask.
    o = jnp.dot(h.astype(w2_ref.dtype), w2_ref[...],
                preferred_element_type=jnp.float32) + b2_ref[...]   # (TB, Vp) f32

    # ---- log_softmax along last dim (f32); pads contribute exp(~-1e30) = 0 ----
    m = jnp.max(o, axis=-1, keepdims=True)
    shifted = o - m
    lse = jnp.log(jnp.sum(jnp.exp(shifted), axis=-1, keepdims=True))
    out_ref[...] = shifted - lse


def prepare_cbow_params(emb, w1_t, b1, w2_t, b2):
    """One-time weight prep (padding / casting / fusion) hoisted out of the call path."""
    V, E = emb.shape
    assert V == VOCAB_SIZE and E == EMBEDDING_DIM
    Vp = VOCAB_PAD
    # Fused embedding @ linear1 weight: f32 compute, bf16 store, padded rows = 0
    # (harmless: padded vocab ids never occur, so their counts are always 0).
    emb_w1 = jnp.dot(emb, w1_t, preferred_element_type=jnp.float32)        # (V, 128)
    ew1_p = jnp.zeros((Vp, HIDDEN), jnp.bfloat16).at[:V, :].set(emb_w1.astype(jnp.bfloat16))
    w2_p = jnp.zeros((HIDDEN, Vp), jnp.bfloat16).at[:, :V].set(w2_t.astype(jnp.bfloat16))
    # NEG_LARGE folded into the padded bias lanes; MUST stay f32 (-1e30 overflows bf16).
    b2_p = jnp.full((1, Vp), NEG_LARGE, jnp.float32).at[:, :V].set(b2.astype(jnp.float32))
    b1_p = b1.astype(jnp.float32).reshape(1, HIDDEN)
    return ew1_p, b1_p, w2_p, b2_p


def _cbow_call(B, tb, counts_dtype, buffered_weights):
    Vp = VOCAB_PAD

    def wspec(shape):
        # Resident weights: constant index_map -> fetched once; single-buffer them.
        kw = {"pipeline_mode": pl.Buffered(1)} if buffered_weights else {}
        return pl.BlockSpec(shape, lambda i: (0, 0), **kw)

    # TODO(synk): for realistic vocab sizes, tile Vp over a second grid axis with an
    # online logsumexp epilogue (size it against v7x's 64 MiB VMEM first) and keep the
    # embedding table in memory_space=pl.ANY with a DMA row gather.
    return pl.pallas_call(
        functools.partial(cbow_kernel, counts_dtype),
        out_shape=jax.ShapeDtypeStruct((B, Vp), jnp.float32),
        grid=(B // tb,),
        in_specs=[
            pl.BlockSpec((tb, CTX), lambda i: (i, 0)),    # context ids tile
            wspec((Vp, HIDDEN)),                          # fused emb @ w1^T (bf16)
            wspec((1, HIDDEN)),                           # b1 (f32)
            wspec((HIDDEN, Vp)),                          # w2^T (bf16, padded)
            wspec((1, Vp)),                               # b2 (f32, pads = -1e30)
        ],
        out_specs=pl.BlockSpec((tb, Vp), lambda i: (i, 0)),   # lane-dense output
        compiler_params=pltpu.CompilerParams(
            dimension_semantics=("parallel",)),
    )


def cbow_forward(context_ids, params, *, tb=None):
    """Returns padded (B, Vp) log-probs; valid columns are [:, :VOCAB_SIZE]."""
    ew1_p, b1_p, w2_p, b2_p = params
    B, ctx = context_ids.shape
    assert ctx == CTX
    if tb is None:
        tb = pick_batch_tile(B)
    assert B % tb == 0, "batch must be a multiple of the batch tile"
    counts_dtype = pick_counts_dtype()
    try:
        return _cbow_call(B, tb, counts_dtype, True)(context_ids, ew1_p, b1_p, w2_p, b2_p)
    except Exception:
        # Fallback if single-buffered (Buffered(1)) weight specs are not supported.
        return _cbow_call(B, tb, counts_dtype, False)(context_ids, ew1_p, b1_p, w2_p, b2_p)


def cbow_reference(context_ids, emb, w1_t, b1, w2_t, b2):
    # Pure-JAX reference with the same fused bf16 weight path as the kernel.
    emb_w1 = jnp.dot(emb, w1_t, preferred_element_type=jnp.float32).astype(jnp.bfloat16)
    h = jnp.sum(emb_w1[context_ids].astype(jnp.float32), axis=1) + b1        # (B, 128)
    h = jnp.maximum(h, 0.0)
    o = jnp.dot(h.astype(jnp.bfloat16), w2_t.astype(jnp.bfloat16),
                preferred_element_type=jnp.float32) + b2
    return jax.nn.log_softmax(o, axis=-1)


if __name__ == "__main__":
    key = jax.random.PRNGKey(0)
    k_emb, k_w1, k_b1, k_w2, k_b2, k_ctx = jax.random.split(key, 6)

    # Deterministic parameter init (shapes from the module __init__).
    emb = jax.random.normal(k_emb, (VOCAB_SIZE, EMBEDDING_DIM), jnp.float32) * 0.1
    w1_t = jax.random.normal(k_w1, (EMBEDDING_DIM, HIDDEN), jnp.float32) * 0.1
    b1 = jax.random.normal(k_b1, (1, HIDDEN), jnp.float32) * 0.1
    w2_t = jax.random.normal(k_w2, (HIDDEN, VOCAB_SIZE), jnp.float32) * 0.1
    b2 = jax.random.normal(k_b2, (1, VOCAB_SIZE), jnp.float32) * 0.1

    # Batch of contexts: each row is one CBOW forward pass of the module.
    B = 256
    context_ids = jax.random.randint(k_ctx, (B, CTX), 0, VOCAB_SIZE, jnp.int32)

    # One-time weight prep (hoisted out of the per-call path).
    params = jax.block_until_ready(prepare_cbow_params(emb, w1_t, b1, w2_t, b2))

    out_p = cbow_forward(context_ids, params)
    out_p = jax.block_until_ready(out_p)
    out = out_p[:, :VOCAB_SIZE]           # slice only at the consumer

    ref = cbow_reference(context_ids, emb, w1_t, b1, w2_t, b2)
    assert out.shape == (B, VOCAB_SIZE)
    assert jnp.allclose(out, ref, atol=1e-2, rtol=1e-2), "mismatch vs reference"
    # rows are valid log-probability distributions
    assert jnp.allclose(jnp.sum(jnp.exp(out), axis=-1), 1.0, atol=1e-3)

    print("KERNEL_OK")
</pallas_src>

<mosaic_0001>
module attributes {stable_mosaic.version = 11 : i64} {
  func.func @cbow_kernel(%arg0: i32, %arg1: memref<256x4xi32, #tpu.memory_space<vmem>>, %arg2: memref<128x128xbf16, #tpu.memory_space<vmem>>, %arg3: memref<1x128xf32, #tpu.memory_space<vmem>>, %arg4: memref<128x128xbf16, #tpu.memory_space<vmem>>, %arg5: memref<1x128xf32, #tpu.memory_space<vmem>>, %arg6: memref<256x128xf32, #tpu.memory_space<vmem>>) attributes {dimension_semantics = [#tpu.dimension_semantics<parallel>], iteration_bounds = array<i64: 1>, scalar_prefetch = 0 : i64, scratch_operands = 0 : i64, tpu.core_type = #tpu.core_type<tc>, window_params = [{transform_indices = @transform_0, window_bounds = array<i64: 256, 4>}, {pipeline_mode = #tpu.pipeline_mode<synchronous>, transform_indices = @transform_1, window_bounds = array<i64: 128, 128>}, {pipeline_mode = #tpu.pipeline_mode<synchronous>, transform_indices = @transform_2, window_bounds = array<i64: 1, 128>}, {pipeline_mode = #tpu.pipeline_mode<synchronous>, transform_indices = @transform_3, window_bounds = array<i64: 128, 128>}, {pipeline_mode = #tpu.pipeline_mode<synchronous>, transform_indices = @transform_4, window_bounds = array<i64: 1, 128>}, {transform_indices = @transform_5, window_bounds = array<i64: 256, 128>}]} {
    %c0 = arith.constant 0 : index
    %c0_0 = arith.constant 0 : index
    %0 = vector.load %arg1[%c0, %c0_0] : memref<256x4xi32, #tpu.memory_space<vmem>>, vector<256x4xi32>
    %1 = tpu.iota {dimensions = array<i32: 1>} : vector<256x128xi32>
    %cst = arith.constant 0.000000e+00 : bf16
    %2 = vector.broadcast %cst : bf16 to vector<256x128xbf16>
    %3 = vector.extract_strided_slice %0 {offsets = [0, 0], sizes = [256, 1], strides = [1, 1]} : vector<256x4xi32> to vector<256x1xi32>
    %4 = vector.broadcast %3 : vector<256x1xi32> to vector<256x128xi32>
    %5 = arith.cmpi eq, %1, %4 : vector<256x128xi32>
    %6 = arith.extui %5 : vector<256x128xi1> to vector<256x128xi32>
    %7 = arith.sitofp %6 : vector<256x128xi32> to vector<256x128xf32>
    %8 = arith.truncf %7 : vector<256x128xf32> to vector<256x128xbf16>
    %9 = arith.addf %2, %8 : vector<256x128xbf16>
    %10 = vector.extract_strided_slice %0 {offsets = [0, 1], sizes = [256, 1], strides = [1, 1]} : vector<256x4xi32> to vector<256x1xi32>
    %11 = vector.broadcast %10 : vector<256x1xi32> to vector<256x128xi32>
    %12 = arith.cmpi eq, %1, %11 : vector<256x128xi32>
    %13 = arith.extui %12 : vector<256x128xi1> to vector<256x128xi32>
    %14 = arith.sitofp %13 : vector<256x128xi32> to vector<256x128xf32>
    %15 = arith.truncf %14 : vector<256x128xf32> to vector<256x128xbf16>
    %16 = arith.addf %9, %15 : vector<256x128xbf16>
    %17 = vector.extract_strided_slice %0 {offsets = [0, 2], sizes = [256, 1], strides = [1, 1]} : vector<256x4xi32> to vector<256x1xi32>
    %18 = vector.broadcast %17 : vector<256x1xi32> to vector<256x128xi32>
    %19 = arith.cmpi eq, %1, %18 : vector<256x128xi32>
    %20 = arith.extui %19 : vector<256x128xi1> to vector<256x128xi32>
    %21 = arith.sitofp %20 : vector<256x128xi32> to vector<256x128xf32>
    %22 = arith.truncf %21 : vector<256x128xf32> to vector<256x128xbf16>
    %23 = arith.addf %16, %22 : vector<256x128xbf16>
    %24 = vector.extract_strided_slice %0 {offsets = [0, 3], sizes = [256, 1], strides = [1, 1]} : vector<256x4xi32> to vector<256x1xi32>
    %25 = vector.broadcast %24 : vector<256x1xi32> to vector<256x128xi32>
    %26 = arith.cmpi eq, %1, %25 : vector<256x128xi32>
    %27 = arith.extui %26 : vector<256x128xi1> to vector<256x128xi32>
    %28 = arith.sitofp %27 : vector<256x128xi32> to vector<256x128xf32>
    %29 = arith.truncf %28 : vector<256x128xf32> to vector<256x128xbf16>
    %30 = arith.addf %23, %29 : vector<256x128xbf16>
    %c0_1 = arith.constant 0 : index
    %c0_2 = arith.constant 0 : index
    %31 = vector.load %arg2[%c0_1, %c0_2] : memref<128x128xbf16, #tpu.memory_space<vmem>>, vector<128x128xbf16>
    %cst_3 = arith.constant dense<0.000000e+00> : vector<256x128xf32>
    %32 = tpu.matmul %30, %31, %cst_3 {dimension_numbers = #tpu.dot_dimension_numbers<[1], [0], [0], [1], [0, 0, 1, 1], [], []>} : vector<256x128xbf16>, vector<128x128xbf16>, vector<256x128xf32> -> vector<256x128xf32>
    %c0_4 = arith.constant 0 : index
    %c0_5 = arith.constant 0 : index
    %33 = vector.load %arg3[%c0_4, %c0_5] : memref<1x128xf32, #tpu.memory_space<vmem>>, vector<1x128xf32>
    %34 = vector.broadcast %33 : vector<1x128xf32> to vector<256x128xf32>
    %35 = arith.addf %32, %34 : vector<256x128xf32>
    %cst_6 = arith.constant 0.000000e+00 : f32
    %36 = vector.broadcast %cst_6 : f32 to vector<256x128xf32>
    %37 = arith.maximumf %35, %36 : vector<256x128xf32>
    %38 = arith.truncf %37 : vector<256x128xf32> to vector<256x128xbf16>
    %c0_7 = arith.constant 0 : index
    %c0_8 = arith.constant 0 : index
    %39 = vector.load %arg4[%c0_7, %c0_8] : memref<128x128xbf16, #tpu.memory_space<vmem>>, vector<128x128xbf16>
    %cst_9 = arith.constant dense<0.000000e+00> : vector<256x128xf32>
    %40 = tpu.matmul %38, %39, %cst_9 {dimension_numbers = #tpu.dot_dimension_numbers<[1], [0], [0], [1], [0, 0, 1, 1], [], []>} : vector<256x128xbf16>, vector<128x128xbf16>, vector<256x128xf32> -> vector<256x128xf32>
    %c0_10 = arith.constant 0 : index
    %c0_11 = arith.constant 0 : index
    %41 = vector.load %arg5[%c0_10, %c0_11] : memref<1x128xf32, #tpu.memory_space<vmem>>, vector<1x128xf32>
    %42 = vector.broadcast %41 : vector<1x128xf32> to vector<256x128xf32>
    %43 = arith.addf %40, %42 : vector<256x128xf32>
    %cst_12 = arith.constant dense<0xFF800000> : vector<256xf32>
    %44 = vector.multi_reduction <maximumf>, %43, %cst_12 [1] : vector<256x128xf32> to vector<256xf32>
    %45 = vector.shape_cast %44 : vector<256xf32> to vector<256x1xf32>
    %46 = vector.broadcast %45 : vector<256x1xf32> to vector<256x128xf32>
    %47 = arith.subf %43, %46 : vector<256x128xf32>
    %48 = math.exp %47 : vector<256x128xf32>
    %cst_13 = arith.constant dense<0.000000e+00> : vector<256xf32>
    %49 = vector.multi_reduction <add>, %48, %cst_13 [1] : vector<256x128xf32> to vector<256xf32>
    %50 = vector.shape_cast %49 : vector<256xf32> to vector<256x1xf32>
    %51 = math.log %50 : vector<256x1xf32>
    %52 = vector.broadcast %51 : vector<256x1xf32> to vector<256x128xf32>
    %53 = arith.subf %47, %52 : vector<256x128xf32>
    %c0_14 = arith.constant 0 : index
    %c0_15 = arith.constant 0 : index
    %54 = vector.load %arg6[%c0_14, %c0_15] : memref<256x128xf32, #tpu.memory_space<vmem>>, vector<256x128xf32>
    tpu.vector_store %arg6[%c0_14, %c0_15], %53 {strides = array<i32>} : memref<256x128xf32, #tpu.memory_space<vmem>>, vector<256x128xf32>,
    return
  }
  func.func @transform_0(%arg0: i32) -> (i32, i32) {
    %c0_i32 = arith.constant 0 : i32
    %c0_i32_0 = arith.constant 0 : i32
    return %arg0, %c0_i32 : i32, i32
  }
  func.func @transform_1(%arg0: i32) -> (i32, i32) {
    %c0_i32 = arith.constant 0 : i32
    %c0_i32_0 = arith.constant 0 : i32
    %c0_i32_1 = arith.constant 0 : i32
    return %c0_i32, %c0_i32_0 : i32, i32
  }
  func.func @transform_2(%arg0: i32) -> (i32, i32) {
    %c0_i32 = arith.constant 0 : i32
    %c0_i32_0 = arith.constant 0 : i32
    %c0_i32_1 = arith.constant 0 : i32
    return %c0_i32, %c0_i32_0 : i32, i32
  }
  func.func @transform_3(%arg0: i32) -> (i32, i32) {
    %c0_i32 = arith.constant 0 : i32
    %c0_i32_0 = arith.constant 0 : i32
    %c0_i32_1 = arith.constant 0 : i32
    return %c0_i32, %c0_i32_0 : i32, i32
  }
  func.func @transform_4(%arg0: i32) -> (i32, i32) {
    %c0_i32 = arith.constant 0 : i32
    %c0_i32_0 = arith.constant 0 : i32
    %c0_i32_1 = arith.constant 0 : i32
    return %c0_i32, %c0_i32_0 : i32, i32
  }
  func.func @transform_5(%arg0: i32) -> (i32, i32) {
    %c0_i32 = arith.constant 0 : i32
    %c0_i32_0 = arith.constant 0 : i32
    return %arg0, %c0_i32 : i32, i32
  }
}

module attributes {stable_mosaic.version = 11 : i64} {
  func.func @cbow_kernel(%arg0: i32, %arg1: memref<256x4xi32, #tpu.memory_space<vmem>>, %arg2: memref<128x128xbf16, #tpu.memory_space<vmem>>, %arg3: memref<1x128xf32, #tpu.memory_space<vmem>>, %arg4: memref<128x128xbf16, #tpu.memory_space<vmem>>, %arg5: memref<1x128xf32, #tpu.memory_space<vmem>>, %arg6: memref<256x128xf32, #tpu.memory_space<vmem>>) attributes {dimension_semantics = [#tpu.dimension_semantics<parallel>], iteration_bounds = array<i64: 1>, scalar_prefetch = 0 : i64, scratch_operands = 0 : i64, tpu.core_type = #tpu.core_type<tc>, window_params = [{transform_indices = @transform_0, window_bounds = array<i64: 256, 4>}, {pipeline_mode = #tpu.pipeline_mode<synchronous>, transform_indices = @transform_1, window_bounds = array<i64: 128, 128>}, {pipeline_mode = #tpu.pipeline_mode<synchronous>, transform_indices = @transform_2, window_bounds = array<i64: 1, 128>}, {pipeline_mode = #tpu.pipeline_mode<synchronous>, transform_indices = @transform_3, window_bounds = array<i64: 128, 128>}, {pipeline_mode = #tpu.pipeline_mode<synchronous>, transform_indices = @transform_4, window_bounds = array<i64: 1, 128>}, {transform_indices = @transform_5, window_bounds = array<i64: 256, 128>}]} {
    %c0 = arith.constant 0 : index
    %c0_0 = arith.constant 0 : index
    %0 = vector.load %arg1[%c0, %c0_0] : memref<256x4xi32, #tpu.memory_space<vmem>>, vector<256x4xi32>
    %1 = tpu.iota {dimensions = array<i32: 1>} : vector<256x128xi32>
    %cst = arith.constant 0.000000e+00 : bf16
    %2 = vector.broadcast %cst : bf16 to vector<256x128xbf16>
    %3 = vector.extract_strided_slice %0 {offsets = [0, 0], sizes = [256, 1], strides = [1, 1]} : vector<256x4xi32> to vector<256x1xi32>
    %4 = vector.broadcast %3 : vector<256x1xi32> to vector<256x128xi32>
    %5 = arith.cmpi eq, %1, %4 : vector<256x128xi32>
    %6 = arith.extui %5 : vector<256x128xi1> to vector<256x128xi32>
    %7 = arith.sitofp %6 : vector<256x128xi32> to vector<256x128xf32>
    %8 = arith.truncf %7 : vector<256x128xf32> to vector<256x128xbf16>
    %9 = arith.addf %2, %8 : vector<256x128xbf16>
    %10 = vector.extract_strided_slice %0 {offsets = [0, 1], sizes = [256, 1], strides = [1, 1]} : vector<256x4xi32> to vector<256x1xi32>
    %11 = vector.broadcast %10 : vector<256x1xi32> to vector<256x128xi32>
    %12 = arith.cmpi eq, %1, %11 : vector<256x128xi32>
    %13 = arith.extui %12 : vector<256x128xi1> to vector<256x128xi32>
    %14 = arith.sitofp %13 : vector<256x128xi32> to vector<256x128xf32>
    %15 = arith.truncf %14 : vector<256x128xf32> to vector<256x128xbf16>
    %16 = arith.addf %9, %15 : vector<256x128xbf16>
    %17 = vector.extract_strided_slice %0 {offsets = [0, 2], sizes = [256, 1], strides = [1, 1]} : vector<256x4xi32> to vector<256x1xi32>
    %18 = vector.broadcast %17 : vector<256x1xi32> to vector<256x128xi32>
    %19 = arith.cmpi eq, %1, %18 : vector<256x128xi32>
    %20 = arith.extui %19 : vector<256x128xi1> to vector<256x128xi32>
    %21 = arith.sitofp %20 : vector<256x128xi32> to vector<256x128xf32>
    %22 = arith.truncf %21 : vector<256x128xf32> to vector<256x128xbf16>
    %23 = arith.addf %16, %22 : vector<256x128xbf16>
    %24 = vector.extract_strided_slice %0 {offsets = [0, 3], sizes = [256, 1], strides = [1, 1]} : vector<256x4xi32> to vector<256x1xi32>
    %25 = vector.broadcast %24 : vector<256x1xi32> to vector<256x128xi32>
    %26 = arith.cmpi eq, %1, %25 : vector<256x128xi32>
    %27 = arith.extui %26 : vector<256x128xi1> to vector<256x128xi32>
    %28 = arith.sitofp %27 : vector<256x128xi32> to vector<256x128xf32>
    %29 = arith.truncf %28 : vector<256x128xf32> to vector<256x128xbf16>
    %30 = arith.addf %23, %29 : vector<256x128xbf16>
    %c0_1 = arith.constant 0 : index
    %c0_2 = arith.constant 0 : index
    %31 = vector.load %arg2[%c0_1, %c0_2] : memref<128x128xbf16, #tpu.memory_space<vmem>>, vector<128x128xbf16>
    %cst_3 = arith.constant dense<0.000000e+00> : vector<256x128xf32>
    %32 = tpu.matmul %30, %31, %cst_3 {dimension_numbers = #tpu.dot_dimension_numbers<[1], [0], [0], [1], [0, 0, 1, 1], [], []>} : vector<256x128xbf16>, vector<128x128xbf16>, vector<256x128xf32> -> vector<256x128xf32>
    %c0_4 = arith.constant 0 : index
    %c0_5 = arith.constant 0 : index
    %33 = vector.load %arg3[%c0_4, %c0_5] : memref<1x128xf32, #tpu.memory_space<vmem>>, vector<1x128xf32>
    %34 = vector.broadcast %33 : vector<1x128xf32> to vector<256x128xf32>
    %35 = arith.addf %32, %34 : vector<256x128xf32>
    %cst_6 = arith.constant 0.000000e+00 : f32
    %36 = vector.broadcast %cst_6 : f32 to vector<256x128xf32>
    %37 = arith.maximumf %35, %36 : vector<256x128xf32>
    %38 = arith.truncf %37 : vector<256x128xf32> to vector<256x128xbf16>
    %c0_7 = arith.constant 0 : index
    %c0_8 = arith.constant 0 : index
    %39 = vector.load %arg4[%c0_7, %c0_8] : memref<128x128xbf16, #tpu.memory_space<vmem>>, vector<128x128xbf16>
    %cst_9 = arith.constant dense<0.000000e+00> : vector<256x128xf32>
    %40 = tpu.matmul %38, %39, %cst_9 {dimension_numbers = #tpu.dot_dimension_numbers<[1], [0], [0], [1], [0, 0, 1, 1], [], []>} : vector<256x128xbf16>, vector<128x128xbf16>, vector<256x128xf32> -> vector<256x128xf32>
    %c0_10 = arith.constant 0 : index
    %c0_11 = arith.constant 0 : index
    %41 = vector.load %arg5[%c0_10, %c0_11] : memref<1x128xf32, #tpu.memory_space<vmem>>, vector<1x128xf32>
    %42 = vector.broadcast %41 : vector<1x128xf32> to vector<256x128xf32>
    %43 = arith.addf %40, %42 : vector<256x128xf32>
    %cst_12 = arith.constant dense<0xFF800000> : vector<256xf32>
    %44 = vector.multi_reduction <maximumf>, %43, %cst_12 [1] : vector<256x128xf32> to vector<256xf32>
    %45 = vector.shape_cast %44 : vector<256xf32> to vector<256x1xf32>
    %46 = vector.broadcast %45 : vector<256x1xf32> to vector<256x128xf32>
    %47 = arith.subf %43, %46 : vector<256x128xf32>
    %48 = math.exp %47 : vector<256x128xf32>
    %cst_13 = arith.constant dense<0.000000e+00> : vector<256xf32>
    %49 = vector.multi_reduction <add>, %48, %cst_13 [1] : vector<256x128xf32> to vector<256xf32>
    %50 = vector.shape_cast %49 : vector<256xf32> to vector<256x1xf32>
    %51 = math.log %50 : vector<256x1xf32>
    %52 = vector.broadcast %51 : vector<256x1xf32> to vector<256x128xf32>
    %53 = arith.subf %47, %52 : vector<256x128xf32>
    %c0_14 = arith.constant 0 : index
    %c0_15 = arith.constant 0 : index
    %54 = vector.load %arg6[%c0_14, %c0_15] : memref<256x128xf32, #tpu.memory_space<vmem>>, vector<256x128xf32>
    tpu.vector_store %arg6[%c0_14, %c0_15], %53 {strides = array<i32>} : memref<256x128xf32, #tpu.memory_space<vmem>>, vector<256x128xf32>,
    return
  }
  func.func @transform_0(%arg0: i32) -> (i32, i32) {
    %c0_i32 = arith.constant 0 : i32
    %c0_i32_0 = arith.constant 0 : i32
    return %arg0, %c0_i32 : i32, i32
  }
  func.func @transform_1(%arg0: i32) -> (i32, i32) {
    %c0_i32 = arith.constant 0 : i32
    %c0_i32_0 = arith.constant 0 : i32
    %c0_i32_1 = arith.constant 0 : i32
    return %c0_i32, %c0_i32_0 : i32, i32
  }
  func.func @transform_2(%arg0: i32) -> (i32, i32) {
    %c0_i32 = arith.constant 0 : i32
    %c0_i32_0 = arith.constant 0 : i32
    %c0_i32_1 = arith.constant 0 : i32
    return %c0_i32, %c0_i32_0 : i32, i32
  }
  func.func @transform_3(%arg0: i32) -> (i32, i32) {
    %c0_i32 = arith.constant 0 : i32
    %c0_i32_0 = arith.constant 0 : i32
    %c0_i32_1 = arith.constant 0 : i32
    return %c0_i32, %c0_i32_0 : i32, i32
  }
  func.func @transform_4(%arg0: i32) -> (i32, i32) {
    %c0_i32 = arith.constant 0 : i32
    %c0_i32_0 = arith.constant 0 : i32
    %c0_i32_1 = arith.constant 0 : i32
    return %c0_i32, %c0_i32_0 : i32, i32
  }
  func.func @transform_5(%arg0: i32) -> (i32, i32) {
    %c0_i32 = arith.constant 0 : i32
    %c0_i32_0 = arith.constant 0 : i32
    return %arg0, %c0_i32 : i32, i32
  }
}

</mosaic_0001>

<llo_original>
// kernel: tpu_custom_call.1
$region0: #{tpu_custom_call.1}
  #allocation0 [shape = 'u32[]', space=smem, size = 0x4, offset = 0x4, fixed_abs, tag = 'smem constant byte address 0x4 - core index']
  #allocation1 [shape = 'u32[144,128]{1,0:T(1,128)}', space=vmem, size = 0x12000, scoped, tag = 'internal scratch']
  %s0 = inlined_call_operand.vmem [shape: s32[256,4], index: 0, kind: input, shape index: {}]
  %s1 = inlined_call_operand.vmem [shape: bf16[128,128], index: 1, kind: input, shape index: {}]
  %s2 = inlined_call_operand.vmem [shape: f32[1,128], index: 2, kind: input, shape index: {}]
  %s3 = inlined_call_operand.vmem [shape: bf16[128,128], index: 3, kind: input, shape index: {}]
  %s4 = inlined_call_operand.vmem [shape: f32[1,128], index: 4, kind: input, shape index: {}]
  %s5 = inlined_call_operand.hbm [shape: f32[256,128], index: 5, kind: output, shape index: {}]
  %s6 = sld [smem:[#allocation0]]
  $region30: #{tpu_custom_call.1} parent=0
    _
  %s8 = ssub.s32 1, %s6
  %s9 = scalar_select 0, %s8, %s6
  $region1: #{tpu_custom_call.1} parent=0
    #allocation2 [shape = 'u8[131072]{0}', space=vmem, size = 0x20000, scoped, tag = 'output window, operand 0, single buffered']
    #allocation3 [shape = 's32[1]{0}', space=sflag, size = 0x4, scoped, tag = 'scoped memory for tpu_custom_call.1']
    %10 = vsyncpa [#allocation3], 0
    // Predicated region
    $region2: #{tpu_custom_call.1} parent=1 // pred_check
      _
    $region3: #{tpu_custom_call.1} parent=1 // pred_check_branch
      %12 = sbr.rel (0) target = $region5
    $region4: #{tpu_custom_call.1} parent=1 // pred_region
      _
    $region5: #{tpu_custom_call.1} parent=1 // pred_fallthru
      _
    // Predicated region
    $region6: #{tpu_custom_call.1} parent=1 // pred_check
      _
    $region7: #{tpu_custom_call.1} parent=1 // pred_check_branch
      %14 = sbr.rel (0) target = $region9
    $region8: #{tpu_custom_call.1} parent=1 // pred_region
      _
    $region9: #{tpu_custom_call.1} parent=1 // pred_fallthru
      _
    // Predicated region
    $region10: #{tpu_custom_call.1} parent=1 // pred_check
      _
    $region11: #{tpu_custom_call.1} parent=1 // pred_check_branch
      %16 = sbr.rel (0) target = $region13
    $region12: #{tpu_custom_call.1} parent=1 // pred_region
      _
    $region13: #{tpu_custom_call.1} parent=1 // pred_fallthru
      _
    // Predicated region
    $region14: #{tpu_custom_call.1} parent=1 // pred_check
      _
    $region15: #{tpu_custom_call.1} parent=1 // pred_check_branch
      %18 = sbr.rel (0) target = $region17
    $region16: #{tpu_custom_call.1} parent=1 // pred_region
      _
    $region17: #{tpu_custom_call.1} parent=1 // pred_fallthru
      _
    // Predicated region
    $region18: #{tpu_custom_call.1} parent=1 // pred_check
      _
    $region19: #{tpu_custom_call.1} parent=1 // pred_check_branch
      %20 = sbr.rel (0) target = $region21
    $region20: #{tpu_custom_call.1} parent=1 // pred_region
      _
    $region21: #{tpu_custom_call.1} parent=1 // pred_fallthru
      _
    %v22 = vld [vmem:[%s0] sm:$0xff]
    %v23 = vld [vmem:[%s0 + $0x8] sm:$0xff]
    %v24 = vld [vmem:[%s0 + $0x10] sm:$0xff]
    %v25 = vld [vmem:[%s0 + $0x18] sm:$0xff]
    %v26 = vld [vmem:[%s0 + $0x20] sm:$0xff]
    %v27 = vld [vmem:[%s0 + $0x28] sm:$0xff]
    %v28 = vld [vmem:[%s0 + $0x30] sm:$0xff]
    %v29 = vld [vmem:[%s0 + $0x38] sm:$0xff]
    %v30 = vld [vmem:[%s0 + $0x40] sm:$0xff]
    %v31 = vld [vmem:[%s0 + $0x48] sm:$0xff]
    %v32 = vld [vmem:[%s0 + $0x50] sm:$0xff]
    %v33 = vld [vmem:[%s0 + $0x58] sm:$0xff]
    %v34 = vld [vmem:[%s0 + $0x60] sm:$0xff]
    %v35 = vld [vmem:[%s0 + $0x68] sm:$0xff]
    %v36 = vld [vmem:[%s0 + $0x70] sm:$0xff]
    %v37 = vld [vmem:[%s0 + $0x78] sm:$0xff]
    %v38 = vld [vmem:[%s0 + $0x80] sm:$0xff]
    %v39 = vld [vmem:[%s0 + $0x88] sm:$0xff]
    %v40 = vld [vmem:[%s0 + $0x90] sm:$0xff]
    %v41 = vld [vmem:[%s0 + $0x98] sm:$0xff]
    %v42 = vld [vmem:[%s0 + $0xa0] sm:$0xff]
    %v43 = vld [vmem:[%s0 + $0xa8] sm:$0xff]
    %v44 = vld [vmem:[%s0 + $0xb0] sm:$0xff]
    %v45 = vld [vmem:[%s0 + $0xb8] sm:$0xff]
    %v46 = vld [vmem:[%s0 + $0xc0] sm:$0xff]
    %v47 = vld [vmem:[%s0 + $0xc8] sm:$0xff]
    %v48 = vld [vmem:[%s0 + $0xd0] sm:$0xff]
    %v49 = vld [vmem:[%s0 + $0xd8] sm:$0xff]
    %v50 = vld [vmem:[%s0 + $0xe0] sm:$0xff]
    %v51 = vld [vmem:[%s0 + $0xe8] sm:$0xff]
    %v52 = vld [vmem:[%s0 + $0xf0] sm:$0xff]
    %v53 = vld [vmem:[%s0 + $0xf8] sm:$0xff]
    %v54 = vlaneseq
    %v55 = vand.u32 %v54, 127
    %56 = vset.pattern.permute.xlu0 0
    %57 = vperm.xlu0 %56, %v22
    %v58 = vpop.permute.xlu0 %57
    %59 = vset.pattern.permute.xlu0 0
    %60 = vperm.xlu0 %59, %v23
    %v61 = vpop.permute.xlu0 %60
    %62 = vset.pattern.permute.xlu0 0
    %63 = vperm.xlu0 %62, %v24
    %v64 = vpop.permute.xlu0 %63
    %65 = vset.pattern.permute.xlu0 0
    %66 = vperm.xlu0 %65, %v25
    %v67 = vpop.permute.xlu0 %66
    %68 = vset.pattern.permute.xlu0 0
    %69 = vperm.xlu0 %68, %v26
    %v70 = vpop.permute.xlu0 %69
    %71 = vset.pattern.permute.xlu0 0
    %72 = vperm.xlu0 %71, %v27
    %v73 = vpop.permute.xlu0 %72
    %74 = vset.pattern.permute.xlu0 0
    %75 = vperm.xlu0 %74, %v28
    %v76 = vpop.permute.xlu0 %75
    %77 = vset.pattern.permute.xlu0 0
    %78 = vperm.xlu0 %77, %v29
    %v79 = vpop.permute.xlu0 %78
    %80 = vset.pattern.permute.xlu0 0
    %81 = vperm.xlu0 %80, %v30
    %v82 = vpop.permute.xlu0 %81
    %83 = vset.pattern.permute.xlu0 0
    %84 = vperm.xlu0 %83, %v31
    %v85 = vpop.permute.xlu0 %84
    %86 = vset.pattern.permute.xlu0 0
    %87 = vperm.xlu0 %86, %v32
    %v88 = vpop.permute.xlu0 %87
    %89 = vset.pattern.permute.xlu0 0
    %90 = vperm.xlu0 %89, %v33
    %v91 = vpop.permute.xlu0 %90
    %92 = vset.pattern.permute.xlu0 0
    %93 = vperm.xlu0 %92, %v34
    %v94 = vpop.permute.xlu0 %93
    %95 = vset.pattern.permute.xlu0 0
    %96 = vperm.xlu0 %95, %v35
    %v97 = vpop.permute.xlu0 %96
    %98 = vset.pattern.permute.xlu0 0
    %99 = vperm.xlu0 %98, %v36
    %v100 = vpop.permute.xlu0 %99
    %101 = vset.pattern.permute.xlu0 0
    %102 = vperm.xlu0 %101, %v37
    %v103 = vpop.permute.xlu0 %102
    %104 = vset.pattern.permute.xlu0 0
    %105 = vperm.xlu0 %104, %v38
    %v106 = vpop.permute.xlu0 %105
    %107 = vset.pattern.permute.xlu0 0
    %108 = vperm.xlu0 %107, %v39
    %v109 = vpop.permute.xlu0 %108
    %110 = vset.pattern.permute.xlu0 0
    %111 = vperm.xlu0 %110, %v40
    %v112 = vpop.permute.xlu0 %111
    %113 = vset.pattern.permute.xlu0 0
    %114 = vperm.xlu0 %113, %v41
    %v115 = vpop.permute.xlu0 %114
    %116 = vset.pattern.permute.xlu0 0
    %117 = vperm.xlu0 %116, %v42
    %v118 = vpop.permute.xlu0 %117
    %119 = vset.pattern.permute.xlu0 0
    %120 = vperm.xlu0 %119, %v43
    %v121 = vpop.permute.xlu0 %120
    %122 = vset.pattern.permute.xlu0 0
    %123 = vperm.xlu0 %122, %v44
    %v124 = vpop.permute.xlu0 %123
    %125 = vset.pattern.permute.xlu0 0
    %126 = vperm.xlu0 %125, %v45
    %v127 = vpop.permute.xlu0 %126
    %128 = vset.pattern.permute.xlu0 0
    %129 = vperm.xlu0 %128, %v46
    %v130 = vpop.permute.xlu0 %129
    %131 = vset.pattern.permute.xlu0 0
    %132 = vperm.xlu0 %131, %v47
    %v133 = vpop.permute.xlu0 %132
    %134 = vset.pattern.permute.xlu0 0
    %135 = vperm.xlu0 %134, %v48
    %v136 = vpop.permute.xlu0 %135
    %137 = vset.pattern.permute.xlu0 0
    %138 = vperm.xlu0 %137, %v49
    %v139 = vpop.permute.xlu0 %138
    %140 = vset.pattern.permute.xlu0 0
    %141 = vperm.xlu0 %140, %v50
    %v142 = vpop.permute.xlu0 %141
    %143 = vset.pattern.permute.xlu0 0
    %144 = vperm.xlu0 %143, %v51
    %v145 = vpop.permute.xlu0 %144
    %146 = vset.pattern.permute.xlu0 0
    %147 = vperm.xlu0 %146, %v52
    %v148 = vpop.permute.xlu0 %147
    %149 = vset.pattern.permute.xlu0 0
    %150 = vperm.xlu0 %149, %v53
    %v151 = vpop.permute.xlu0 %150
    %vm152 = vcmp.eq.s32.totalorder %v55, %v58
    %vm153 = vcmp.eq.s32.totalorder %v55, %v61
    %vm154 = vcmp.eq.s32.totalorder %v55, %v64
    %vm155 = vcmp.eq.s32.totalorder %v55, %v67
    %vm156 = vcmp.eq.s32.totalorder %v55, %v70
    %vm157 = vcmp.eq.s32.totalorder %v55, %v73
    %vm158 = vcmp.eq.s32.totalorder %v55, %v76
    %vm159 = vcmp.eq.s32.totalorder %v55, %v79
    %vm160 = vcmp.eq.s32.totalorder %v55, %v82
    %vm161 = vcmp.eq.s32.totalorder %v55, %v85
    %vm162 = vcmp.eq.s32.totalorder %v55, %v88
    %vm163 = vcmp.eq.s32.totalorder %v55, %v91
    %vm164 = vcmp.eq.s32.totalorder %v55, %v94
    %vm165 = vcmp.eq.s32.totalorder %v55, %v97
    %vm166 = vcmp.eq.s32.totalorder %v55, %v100
    %vm167 = vcmp.eq.s32.totalorder %v55, %v103
    %vm168 = vcmp.eq.s32.totalorder %v55, %v106
    %vm169 = vcmp.eq.s32.totalorder %v55, %v109
    %vm170 = vcmp.eq.s32.totalorder %v55, %v112
    %vm171 = vcmp.eq.s32.totalorder %v55, %v115
    %vm172 = vcmp.eq.s32.totalorder %v55, %v118
    %vm173 = vcmp.eq.s32.totalorder %v55, %v121
    %vm174 = vcmp.eq.s32.totalorder %v55, %v124
    %vm175 = vcmp.eq.s32.totalorder %v55, %v127
    %vm176 = vcmp.eq.s32.totalorder %v55, %v130
    %vm177 = vcmp.eq.s32.totalorder %v55, %v133
    %vm178 = vcmp.eq.s32.totalorder %v55, %v136
    %vm179 = vcmp.eq.s32.totalorder %v55, %v139
    %vm180 = vcmp.eq.s32.totalorder %v55, %v142
    %vm181 = vcmp.eq.s32.totalorder %v55, %v145
    %vm182 = vcmp.eq.s32.totalorder %v55, %v148
    %vm183 = vcmp.eq.s32.totalorder %v55, %v151
    %v184 = vsel %vm152, 1, 0
    %v185 = vsel %vm153, 1, 0
    %v186 = vsel %vm154, 1, 0
    %v187 = vsel %vm155, 1, 0
    %v188 = vsel %vm156, 1, 0
    %v189 = vsel %vm157, 1, 0
    %v190 = vsel %vm158, 1, 0
    %v191 = vsel %vm159, 1, 0
    %v192 = vsel %vm160, 1, 0
    %v193 = vsel %vm161, 1, 0
    %v194 = vsel %vm162, 1, 0
    %v195 = vsel %vm163, 1, 0
    %v196 = vsel %vm164, 1, 0
    %v197 = vsel %vm165, 1, 0
    %v198 = vsel %vm166, 1, 0
    %v199 = vsel %vm167, 1, 0
    %v200 = vsel %vm168, 1, 0
    %v201 = vsel %vm169, 1, 0
    %v202 = vsel %vm170, 1, 0
    %v203 = vsel %vm171, 1, 0
    %v204 = vsel %vm172, 1, 0
    %v205 = vsel %vm173, 1, 0
    %v206 = vsel %vm174, 1, 0
    %v207 = vsel %vm175, 1, 0
    %v208 = vsel %vm176, 1, 0
    %v209 = vsel %vm177, 1, 0
    %v210 = vsel %vm178, 1, 0
    %v211 = vsel %vm179, 1, 0
    %v212 = vsel %vm180, 1, 0
    %v213 = vsel %vm181, 1, 0
    %v214 = vsel %vm182, 1, 0
    %v215 = vsel %vm183, 1, 0
    %v216 = vcvt.s32.f32 %v184
    %v217 = vcvt.s32.f32 %v185
    %v218 = vcvt.s32.f32 %v186
    %v219 = vcvt.s32.f32 %v187
    %v220 = vcvt.s32.f32 %v188
    %v221 = vcvt.s32.f32 %v189
    %v222 = vcvt.s32.f32 %v190
    %v223 = vcvt.s32.f32 %v191
    %v224 = vcvt.s32.f32 %v192
    %v225 = vcvt.s32.f32 %v193
    %v226 = vcvt.s32.f32 %v194
    %v227 = vcvt.s32.f32 %v195
    %v228 = vcvt.s32.f32 %v196
    %v229 = vcvt.s32.f32 %v197
    %v230 = vcvt.s32.f32 %v198
    %v231 = vcvt.s32.f32 %v199
    %v232 = vcvt.s32.f32 %v200
    %v233 = vcvt.s32.f32 %v201
    %v234 = vcvt.s32.f32 %v202
    %v235 = vcvt.s32.f32 %v203
    %v236 = vcvt.s32.f32 %v204
    %v237 = vcvt.s32.f32 %v205
    %v238 = vcvt.s32.f32 %v206
    %v239 = vcvt.s32.f32 %v207
    %v240 = vcvt.s32.f32 %v208
    %v241 = vcvt.s32.f32 %v209
    %v242 = vcvt.s32.f32 %v210
    %v243 = vcvt.s32.f32 %v211
    %v244 = vcvt.s32.f32 %v212
    %v245 = vcvt.s32.f32 %v213
    %v246 = vcvt.s32.f32 %v214
    %v247 = vcvt.s32.f32 %v215
    %v248 = vpack.c.bf16 %v217, %v216
    %v249 = vpack.c.bf16 %v219, %v218
    %v250 = vpack.c.bf16 %v221, %v220
    %v251 = vpack.c.bf16 %v223, %v222
    %v252 = vpack.c.bf16 %v225, %v224
    %v253 = vpack.c.bf16 %v227, %v226
    %v254 = vpack.c.bf16 %v229, %v228
    %v255 = vpack.c.bf16 %v231, %v230
    %v256 = vpack.c.bf16 %v233, %v232
    %v257 = vpack.c.bf16 %v235, %v234
    %v258 = vpack.c.bf16 %v237, %v236
    %v259 = vpack.c.bf16 %v239, %v238
    %v260 = vpack.c.bf16 %v241, %v240
    %v261 = vpack.c.bf16 %v243, %v242
    %v262 = vpack.c.bf16 %v245, %v244
    %v263 = vpack.c.bf16 %v247, %v246
    %v264 = vadd.bf16 %v248, 0
    %v265 = vadd.bf16 %v249, 0
    %v266 = vadd.bf16 %v250, 0
    %v267 = vadd.bf16 %v251, 0
    %v268 = vadd.bf16 %v252, 0
    %v269 = vadd.bf16 %v253, 0
    %v270 = vadd.bf16 %v254, 0
    %v271 = vadd.bf16 %v255, 0
    %v272 = vadd.bf16 %v256, 0
    %v273 = vadd.bf16 %v257, 0
    %v274 = vadd.bf16 %v258, 0
    %v275 = vadd.bf16 %v259, 0
    %v276 = vadd.bf16 %v260, 0
    %v277 = vadd.bf16 %v261, 0
    %v278 = vadd.bf16 %v262, 0
    %v279 = vadd.bf16 %v263, 0
    %280 = vset.pattern.permute.xlu0 1
    %281 = vperm.xlu0 %280, %v22
    %v282 = vpop.permute.xlu0 %281
    %283 = vset.pattern.permute.xlu0 1
    %284 = vperm.xlu0 %283, %v23
    %v285 = vpop.permute.xlu0 %284
    %286 = vset.pattern.permute.xlu0 1
    %287 = vperm.xlu0 %286, %v24
    %v288 = vpop.permute.xlu0 %287
    %289 = vset.pattern.permute.xlu0 1
    %290 = vperm.xlu0 %289, %v25
    %v291 = vpop.permute.xlu0 %290
    %292 = vset.pattern.permute.xlu0 1
    %293 = vperm.xlu0 %292, %v26
    %v294 = vpop.permute.xlu0 %293
    %295 = vset.pattern.permute.xlu0 1
    %296 = vperm.xlu0 %295, %v27
    %v297 = vpop.permute.xlu0 %296
    %298 = vset.pattern.permute.xlu0 1
    %299 = vperm.xlu0 %298, %v28
    %v300 = vpop.permute.xlu0 %299
    %301 = vset.pattern.permute.xlu0 1
    %302 = vperm.xlu0 %301, %v29
    %v303 = vpop.permute.xlu0 %302
    %304 = vset.pattern.permute.xlu0 1
    %305 = vperm.xlu0 %304, %v30
    %v306 = vpop.permute.xlu0 %305
    %307 = vset.pattern.permute.xlu0 1
    %308 = vperm.xlu0 %307, %v31
    %v309 = vpop.permute.xlu0 %308
    %310 = vset.pattern.permute.xlu0 1
    %311 = vperm.xlu0 %310, %v32
    %v312 = vpop.permute.xlu0 %311
    %313 = vset.pattern.permute.xlu0 1
    %314 = vperm.xlu0 %313, %v33
    %v315 = vpop.permute.xlu0 %314
    %316 = vset.pattern.permute.xlu0 1
    %317 = vperm.xlu0 %316, %v34
    %v318 = vpop.permute.xlu0 %317
    %319 = vset.pattern.permute.xlu0 1
    %320 = vperm.xlu0 %319, %v35
    %v321 = vpop.permute.xlu0 %320
    %322 = vset.pattern.permute.xlu0 1
    %323 = vperm.xlu0 %322, %v36
    %v324 = vpop.permute.xlu0 %323
    %325 = vset.pattern.permute.xlu0 1
    %326 = vperm.xlu0 %325, %v37
    %v327 = vpop.permute.xlu0 %326
    %328 = vset.pattern.permute.xlu0 1
    %329 = vperm.xlu0 %328, %v38
    %v330 = vpop.permute.xlu0 %329
    %331 = vset.pattern.permute.xlu0 1
    %332 = vperm.xlu0 %331, %v39
    %v333 = vpop.permute.xlu0 %332
    %334 = vset.pattern.permute.xlu0 1
    %335 = vperm.xlu0 %334, %v40
    %v336 = vpop.permute.xlu0 %335
    %337 = vset.pattern.permute.xlu0 1
    %338 = vperm.xlu0 %337, %v41
    %v339 = vpop.permute.xlu0 %338
    %340 = vset.pattern.permute.xlu0 1
    %341 = vperm.xlu0 %340, %v42
    %v342 = vpop.permute.xlu0 %341
    %343 = vset.pattern.permute.xlu0 1
    %344 = vperm.xlu0 %343, %v43
    %v345 = vpop.permute.xlu0 %344
    %346 = vset.pattern.permute.xlu0 1
    %347 = vperm.xlu0 %346, %v44
    %v348 = vpop.permute.xlu0 %347
    %349 = vset.pattern.permute.xlu0 1
    %350 = vperm.xlu0 %349, %v45
    %v351 = vpop.permute.xlu0 %350
    %352 = vset.pattern.permute.xlu0 1
    %353 = vperm.xlu0 %352, %v46
    %v354 = vpop.permute.xlu0 %353
    %355 = vset.pattern.permute.xlu0 1
    %356 = vperm.xlu0 %355, %v47
    %v357 = vpop.permute.xlu0 %356
    %358 = vset.pattern.permute.xlu0 1
    %359 = vperm.xlu0 %358, %v48
    %v360 = vpop.permute.xlu0 %359
    %361 = vset.pattern.permute.xlu0 1
    %362 = vperm.xlu0 %361, %v49
    %v363 = vpop.permute.xlu0 %362
    %364 = vset.pattern.permute.xlu0 1
    %365 = vperm.xlu0 %364, %v50
    %v366 = vpop.permute.xlu0 %365
    %367 = vset.pattern.permute.xlu0 1
    %368 = vperm.xlu0 %367, %v51
    %v369 = vpop.permute.xlu0 %368
    %370 = vset.pattern.permute.xlu0 1
    %371 = vperm.xlu0 %370, %v52
    %v372 = vpop.permute.xlu0 %371
    %373 = vset.pattern.permute.xlu0 1
    %374 = vperm.xlu0 %373, %v53
    %v375 = vpop.permute.xlu0 %374
    %vm376 = vcmp.eq.s32.totalorder %v55, %v282
    %vm377 = vcmp.eq.s32.totalorder %v55, %v285
    %vm378 = vcmp.eq.s32.totalorder %v55, %v288
    %vm379 = vcmp.eq.s32.totalorder %v55, %v291
    %vm380 = vcmp.eq.s32.totalorder %v55, %v294
    %vm381 = vcmp.eq.s32.totalorder %v55, %v297
    %vm382 = vcmp.eq.s32.totalorder %v55, %v300
    %vm383 = vcmp.eq.s32.totalorder %v55, %v303
    %vm384 = vcmp.eq.s32.totalorder %v55, %v306
    %vm385 = vcmp.eq.s32.totalorder %v55, %v309
    %vm386 = vcmp.eq.s32.totalorder %v55, %v312
    %vm387 = vcmp.eq.s32.totalorder %v55, %v315
    %vm388 = vcmp.eq.s32.totalorder %v55, %v318
    %vm389 = vcmp.eq.s32.totalorder %v55, %v321
    %vm390 = vcmp.eq.s32.totalorder %v55, %v324
    %vm391 = vcmp.eq.s32.totalorder %v55, %v327
    %vm392 = vcmp.eq.s32.totalorder %v55, %v330
    %vm393 = vcmp.eq.s32.totalorder %v55, %v333
    %vm394 = vcmp.eq.s32.totalorder %v55, %v336
    %vm395 = vcmp.eq.s32.totalorder %v55, %v339
    %vm396 = vcmp.eq.s32.totalorder %v55, %v342
    %vm397 = vcmp.eq.s32.totalorder %v55, %v345
    %vm398 = vcmp.eq.s32.totalorder %v55, %v348
    %vm399 = vcmp.eq.s32.totalorder %v55, %v351
    %vm400 = vcmp.eq.s32.totalorder %v55, %v354
    %vm401 = vcmp.eq.s32.totalorder %v55, %v357
    %vm402 = vcmp.eq.s32.totalorder %v55, %v360
    %vm403 = vcmp.eq.s32.totalorder %v55, %v363
    %vm404 = vcmp.eq.s32.totalorder %v55, %v366
    %vm405 = vcmp.eq.s32.totalorder %v55, %v369
    %vm406 = vcmp.eq.s32.totalorder %v55, %v372
    %vm407 = vcmp.eq.s32.totalorder %v55, %v375
    %v408 = vsel %vm376, 1, 0
    %v409 = vsel %vm377, 1, 0
    %v410 = vsel %vm378, 1, 0
    %v411 = vsel %vm379, 1, 0
    %v412 = vsel %vm380, 1, 0
    %v413 = vsel %vm381, 1, 0
    %v414 = vsel %vm382, 1, 0
    %v415 = vsel %vm383, 1, 0
    %v416 = vsel %vm384, 1, 0
    %v417 = vsel %vm385, 1, 0
    %v418 = vsel %vm386, 1, 0
    %v419 = vsel %vm387, 1, 0
    %v420 = vsel %vm388, 1, 0
    %v421 = vsel %vm389, 1, 0
    %v422 = vsel %vm390, 1, 0
    %v423 = vsel %vm391, 1, 0
    %v424 = vsel %vm392, 1, 0
    %v425 = vsel %vm393, 1, 0
    %v426 = vsel %vm394, 1, 0
    %v427 = vsel %vm395, 1, 0
    %v428 = vsel %vm396, 1, 0
    %v429 = vsel %vm397, 1, 0
    %v430 = vsel %vm398, 1, 0
    %v431 = vsel %vm399, 1, 0
    %v432 = vsel %vm400, 1, 0
    %v433 = vsel %vm401, 1, 0
    %v434 = vsel %vm402, 1, 0
    %v435 = vsel %vm403, 1, 0
    %v436 = vsel %vm404, 1, 0
    %v437 = vsel %vm405, 1, 0
    %v438 = vsel %vm406, 1, 0
    %v439 = vsel %vm407, 1, 0
    %v440 = vcvt.s32.f32 %v408
    %v441 = vcvt.s32.f32 %v409
    %v442 = vcvt.s32.f32 %v410
    %v443 = vcvt.s32.f32 %v411
    %v444 = vcvt.s32.f32 %v412
    %v445 = vcvt.s32.f32 %v413
    %v446 = vcvt.s32.f32 %v414
    %v447 = vcvt.s32.f32 %v415
    %v448 = vcvt.s32.f32 %v416
    %v449 = vcvt.s32.f32 %v417
    %v450 = vcvt.s32.f32 %v418
    %v451 = vcvt.s32.f32 %v419
    %v452 = vcvt.s32.f32 %v420
    %v453 = vcvt.s32.f32 %v421
    %v454 = vcvt.s32.f32 %v422
    %v455 = vcvt.s32.f32 %v423
    %v456 = vcvt.s32.f32 %v424
    %v457 = vcvt.s32.f32 %v425
    %v458 = vcvt.s32.f32 %v426
    %v459 = vcvt.s32.f32 %v427
    %v460 = vcvt.s32.f32 %v428
    %v461 = vcvt.s32.f32 %v429
    %v462 = vcvt.s32.f32 %v430
    %v463 = vcvt.s32.f32 %v431
    %v464 = vcvt.s32.f32 %v432
    %v465 = vcvt.s32.f32 %v433
    %v466 = vcvt.s32.f32 %v434
    %v467 = vcvt.s32.f32 %v435
    %v468 = vcvt.s32.f32 %v436
    %v469 = vcvt.s32.f32 %v437
    %v470 = vcvt.s32.f32 %v438
    %v471 = vcvt.s32.f32 %v439
    %v472 = vpack.c.bf16 %v441, %v440
    %v473 = vpack.c.bf16 %v443, %v442
    %v474 = vpack.c.bf16 %v445, %v444
    %v475 = vpack.c.bf16 %v447, %v446
    %v476 = vpack.c.bf16 %v449, %v448
    %v477 = vpack.c.bf16 %v451, %v450
    %v478 = vpack.c.bf16 %v453, %v452
    %v479 = vpack.c.bf16 %v455, %v454
    %v480 = vpack.c.bf16 %v457, %v456
    %v481 = vpack.c.bf16 %v459, %v458
    %v482 = vpack.c.bf16 %v461, %v460
    %v483 = vpack.c.bf16 %v463, %v462
    %v484 = vpack.c.bf16 %v465, %v464
    %v485 = vpack.c.bf16 %v467, %v466
    %v486 = vpack.c.bf16 %v469, %v468
    %v487 = vpack.c.bf16 %v471, %v470
    %v488 = vadd.bf16 %v264, %v472
    %v489 = vadd.bf16 %v265, %v473
    %v490 = vadd.bf16 %v266, %v474
    %v491 = vadd.bf16 %v267, %v475
    %v492 = vadd.bf16 %v268, %v476
    %v493 = vadd.bf16 %v269, %v477
    %v494 = vadd.bf16 %v270, %v478
    %v495 = vadd.bf16 %v271, %v479
    %v496 = vadd.bf16 %v272, %v480
    %v497 = vadd.bf16 %v273, %v481
    %v498 = vadd.bf16 %v274, %v482
    %v499 = vadd.bf16 %v275, %v483
    %v500 = vadd.bf16 %v276, %v484
    %v501 = vadd.bf16 %v277, %v485
    %v502 = vadd.bf16 %v278, %v486
    %v503 = vadd.bf16 %v279, %v487
    %504 = vset.pattern.permute.xlu0 2
    %505 = vperm.xlu0 %504, %v22
    %v506 = vpop.permute.xlu0 %505
    %507 = vset.pattern.permute.xlu0 2
    %508 = vperm.xlu0 %507, %v23
    %v509 = vpop.permute.xlu0 %508
    %510 = vset.pattern.permute.xlu0 2
    %511 = vperm.xlu0 %510, %v24
    %v512 = vpop.permute.xlu0 %511
    %513 = vset.pattern.permute.xlu0 2
    %514 = vperm.xlu0 %513, %v25
    %v515 = vpop.permute.xlu0 %514
    %516 = vset.pattern.permute.xlu0 2
    %517 = vperm.xlu0 %516, %v26
    %v518 = vpop.permute.xlu0 %517
    %519 = vset.pattern.permute.xlu0 2
    %520 = vperm.xlu0 %519, %v27
    %v521 = vpop.permute.xlu0 %520
    %522 = vset.pattern.permute.xlu0 2
    %523 = vperm.xlu0 %522, %v28
    %v524 = vpop.permute.xlu0 %523
    %525 = vset.pattern.permute.xlu0 2
    %526 = vperm.xlu0 %525, %v29
    %v527 = vpop.permute.xlu0 %526
    %528 = vset.pattern.permute.xlu0 2
    %529 = vperm.xlu0 %528, %v30
    %v530 = vpop.permute.xlu0 %529
    %531 = vset.pattern.permute.xlu0 2
    %532 = vperm.xlu0 %531, %v31
    %v533 = vpop.permute.xlu0 %532
    %534 = vset.pattern.permute.xlu0 2
    %535 = vperm.xlu0 %534, %v32
    %v536 = vpop.permute.xlu0 %535
    %537 = vset.pattern.permute.xlu0 2
    %538 = vperm.xlu0 %537, %v33
    %v539 = vpop.permute.xlu0 %538
    %540 = vset.pattern.permute.xlu0 2
    %541 = vperm.xlu0 %540, %v34
    %v542 = vpop.permute.xlu0 %541
    %543 = vset.pattern.permute.xlu0 2
    %544 = vperm.xlu0 %543, %v35
    %v545 = vpop.permute.xlu0 %544
    %546 = vset.pattern.permute.xlu0 2
    %547 = vperm.xlu0 %546, %v36
    %v548 = vpop.permute.xlu0 %547
    %549 = vset.pattern.permute.xlu0 2
    %550 = vperm.xlu0 %549, %v37
    %v551 = vpop.permute.xlu0 %550
    %552 = vset.pattern.permute.xlu0 2
    %553 = vperm.xlu0 %552, %v38
    %v554 = vpop.permute.xlu0 %553
    %555 = vset.pattern.permute.xlu0 2
    %556 = vperm.xlu0 %555, %v39
    %v557 = vpop.permute.xlu0 %556
    %558 = vset.pattern.permute.xlu0 2
    %559 = vperm.xlu0 %558, %v40
    %v560 = vpop.permute.xlu0 %559
    %561 = vset.pattern.permute.xlu0 2
    %562 = vperm.xlu0 %561, %v41
    %v563 = vpop.permute.xlu0 %562
    %564 = vset.pattern.permute.xlu0 2
    %565 = vperm.xlu0 %564, %v42
    %v566 = vpop.permute.xlu0 %565
    %567 = vset.pattern.permute.xlu0 2
    %568 = vperm.xlu0 %567, %v43
    %v569 = vpop.permute.xlu0 %568
    %570 = vset.pattern.permute.xlu0 2
    %571 = vperm.xlu0 %570, %v44
    %v572 = vpop.permute.xlu0 %571
    %573 = vset.pattern.permute.xlu0 2
    %574 = vperm.xlu0 %573, %v45
    %v575 = vpop.permute.xlu0 %574
    %576 = vset.pattern.permute.xlu0 2
    %577 = vperm.xlu0 %576, %v46
    %v578 = vpop.permute.xlu0 %577
    %579 = vset.pattern.permute.xlu0 2
    %580 = vperm.xlu0 %579, %v47
    %v581 = vpop.permute.xlu0 %580
    %582 = vset.pattern.permute.xlu0 2
    %583 = vperm.xlu0 %582, %v48
    %v584 = vpop.permute.xlu0 %583
    %585 = vset.pattern.permute.xlu0 2
    %586 = vperm.xlu0 %585, %v49
    %v587 = vpop.permute.xlu0 %586
    %588 = vset.pattern.permute.xlu0 2
    %589 = vperm.xlu0 %588, %v50
    %v590 = vpop.permute.xlu0 %589
    %591 = vset.pattern.permute.xlu0 2
    %592 = vperm.xlu0 %591, %v51
    %v593 = vpop.permute.xlu0 %592
    %594 = vset.pattern.permute.xlu0 2
    %595 = vperm.xlu0 %594, %v52
    %v596 = vpop.permute.xlu0 %595
    %597 = vset.pattern.permute.xlu0 2
    %598 = vperm.xlu0 %597, %v53
    %v599 = vpop.permute.xlu0 %598
    %vm600 = vcmp.eq.s32.totalorder %v55, %v506
    %vm601 = vcmp.eq.s32.totalorder %v55, %v509
    %vm602 = vcmp.eq.s32.totalorder %v55, %v512
    %vm603 = vcmp.eq.s32.totalorder %v55, %v515
    %vm604 = vcmp.eq.s32.totalorder %v55, %v518
    %vm605 = vcmp.eq.s32.totalorder %v55, %v521
    %vm606 = vcmp.eq.s32.totalorder %v55, %v524
    %vm607 = vcmp.eq.s32.totalorder %v55, %v527
    %vm608 = vcmp.eq.s32.totalorder %v55, %v530
    %vm609 = vcmp.eq.s32.totalorder %v55, %v533
    %vm610 = vcmp.eq.s32.totalorder %v55, %v536
    %vm611 = vcmp.eq.s32.totalorder %v55, %v539
    %vm612 = vcmp.eq.s32.totalorder %v55, %v542
    %vm613 = vcmp.eq.s32.totalorder %v55, %v545
    %vm614 = vcmp.eq.s32.totalorder %v55, %v548
    %vm615 = vcmp.eq.s32.totalorder %v55, %v551
    %vm616 = vcmp.eq.s32.totalorder %v55, %v554
    %vm617 = vcmp.eq.s32.totalorder %v55, %v557
    %vm618 = vcmp.eq.s32.totalorder %v55, %v560
    %vm619 = vcmp.eq.s32.totalorder %v55, %v563
    %vm620 = vcmp.eq.s32.totalorder %v55, %v566
    %vm621 = vcmp.eq.s32.totalorder %v55, %v569
    %vm622 = vcmp.eq.s32.totalorder %v55, %v572
    %vm623 = vcmp.eq.s32.totalorder %v55, %v575
    %vm624 = vcmp.eq.s32.totalorder %v55, %v578
    %vm625 = vcmp.eq.s32.totalorder %v55, %v581
    %vm626 = vcmp.eq.s32.totalorder %v55, %v584
    %vm627 = vcmp.eq.s32.totalorder %v55, %v587
    %vm628 = vcmp.eq.s32.totalorder %v55, %v590
    %vm629 = vcmp.eq.s32.totalorder %v55, %v593
    %vm630 = vcmp.eq.s32.totalorder %v55, %v596
    %vm631 = vcmp.eq.s32.totalorder %v55, %v599
    %v632 = vsel %vm600, 1, 0
    %v633 = vsel %vm601, 1, 0
    %v634 = vsel %vm602, 1, 0
    %v635 = vsel %vm603, 1, 0
    %v636 = vsel %vm604, 1, 0
    %v637 = vsel %vm605, 1, 0
    %v638 = vsel %vm606, 1, 0
    %v639 = vsel %vm607, 1, 0
    %v640 = vsel %vm608, 1, 0
    %v641 = vsel %vm609, 1, 0
    %v642 = vsel %vm610, 1, 0
    %v643 = vsel %vm611, 1, 0
    %v644 = vsel %vm612, 1, 0
    %v645 = vsel %vm613, 1, 0
    %v646 = vsel %vm614, 1, 0
    %v647 = vsel %vm615, 1, 0
    %v648 = vsel %vm616, 1, 0
    %v649 = vsel %vm617, 1, 0
    %v650 = vsel %vm618, 1, 0
    %v651 = vsel %vm619, 1, 0
    %v652 = vsel %vm620, 1, 0
    %v653 = vsel %vm621, 1, 0
    %v654 = vsel %vm622, 1, 0
    %v655 = vsel %vm623, 1, 0
    %v656 = vsel %vm624, 1, 0
    %v657 = vsel %vm625, 1, 0
    %v658 = vsel %vm626, 1, 0
    %v659 = vsel %vm627, 1, 0
    %v660 = vsel %vm628, 1, 0
    %v661 = vsel %vm629, 1, 0
    %v662 = vsel %vm630, 1, 0
    %v663 = vsel %vm631, 1, 0
    %v664 = vcvt.s32.f32 %v632
    %v665 = vcvt.s32.f32 %v633
    %v666 = vcvt.s32.f32 %v634
    %v667 = vcvt.s32.f32 %v635
    %v668 = vcvt.s32.f32 %v636
    %v669 = vcvt.s32.f32 %v637
    %v670 = vcvt.s32.f32 %v638
    %v671 = vcvt.s32.f32 %v639
    %v672 = vcvt.s32.f32 %v640
    %v673 = vcvt.s32.f32 %v641
    %v674 = vcvt.s32.f32 %v642
    %v675 = vcvt.s32.f32 %v643
    %v676 = vcvt.s32.f32 %v644
    %v677 = vcvt.s32.f32 %v645
    %v678 = vcvt.s32.f32 %v646
    %v679 = vcvt.s32.f32 %v647
    %v680 = vcvt.s32.f32 %v648
    %v681 = vcvt.s32.f32 %v649
    %v682 = vcvt.s32.f32 %v650
    %v683 = vcvt.s32.f32 %v651
    %v684 = vcvt.s32.f32 %v652
    %v685 = vcvt.s32.f32 %v653
    %v686 = vcvt.s32.f32 %v654
    %v687 = vcvt.s32.f32 %v655
    %v688 = vcvt.s32.f32 %v656
    %v689 = vcvt.s32.f32 %v657
    %v690 = vcvt.s32.f32 %v658
    %v691 = vcvt.s32.f32 %v659
    %v692 = vcvt.s32.f32 %v660
    %v693 = vcvt.s32.f32 %v661
    %v694 = vcvt.s32.f32 %v662
    %v695 = vcvt.s32.f32 %v663
    %v696 = vpack.c.bf16 %v665, %v664
    %v697 = vpack.c.bf16 %v667, %v666
    %v698 = vpack.c.bf16 %v669, %v668
    %v699 = vpack.c.bf16 %v671, %v670
    %v700 = vpack.c.bf16 %v673, %v672
    %v701 = vpack.c.bf16 %v675, %v674
    %v702 = vpack.c.bf16 %v677, %v676
    %v703 = vpack.c.bf16 %v679, %v678
    %v704 = vpack.c.bf16 %v681, %v680
    %v705 = vpack.c.bf16 %v683, %v682
    %v706 = vpack.c.bf16 %v685, %v684
    %v707 = vpack.c.bf16 %v687, %v686
    %v708 = vpack.c.bf16 %v689, %v688
    %v709 = vpack.c.bf16 %v691, %v690
    %v710 = vpack.c.bf16 %v693, %v692
    %v711 = vpack.c.bf16 %v695, %v694
    %v712 = vadd.bf16 %v488, %v696
    %v713 = vadd.bf16 %v489, %v697
    %v714 = vadd.bf16 %v490, %v698
    %v715 = vadd.bf16 %v491, %v699
    %v716 = vadd.bf16 %v492, %v700
    %v717 = vadd.bf16 %v493, %v701
    %v718 = vadd.bf16 %v494, %v702
    %v719 = vadd.bf16 %v495, %v703
    %v720 = vadd.bf16 %v496, %v704
    %v721 = vadd.bf16 %v497, %v705
    %v722 = vadd.bf16 %v498, %v706
    %v723 = vadd.bf16 %v499, %v707
    %v724 = vadd.bf16 %v500, %v708
    %v725 = vadd.bf16 %v501, %v709
    %v726 = vadd.bf16 %v502, %v710
    %v727 = vadd.bf16 %v503, %v711
    %728 = vset.pattern.permute.xlu0 3
    %729 = vperm.xlu0 %728, %v22
    %v730 = vpop.permute.xlu0 %729
    %731 = vset.pattern.permute.xlu0 3
    %732 = vperm.xlu0 %731, %v23
    %v733 = vpop.permute.xlu0 %732
    %734 = vset.pattern.permute.xlu0 3
    %735 = vperm.xlu0 %734, %v24
    %v736 = vpop.permute.xlu0 %735
    %737 = vset.pattern.permute.xlu0 3
    %738 = vperm.xlu0 %737, %v25
    %v739 = vpop.permute.xlu0 %738
    %740 = vset.pattern.permute.xlu0 3
    %741 = vperm.xlu0 %740, %v26
    %v742 = vpop.permute.xlu0 %741
    %743 = vset.pattern.permute.xlu0 3
    %744 = vperm.xlu0 %743, %v27
    %v745 = vpop.permute.xlu0 %744
    %746 = vset.pattern.permute.xlu0 3
    %747 = vperm.xlu0 %746, %v28
    %v748 = vpop.permute.xlu0 %747
    %749 = vset.pattern.permute.xlu0 3
    %750 = vperm.xlu0 %749, %v29
    %v751 = vpop.permute.xlu0 %750
    %752 = vset.pattern.permute.xlu0 3
    %753 = vperm.xlu0 %752, %v30
    %v754 = vpop.permute.xlu0 %753
    %755 = vset.pattern.permute.xlu0 3
    %756 = vperm.xlu0 %755, %v31
    %v757 = vpop.permute.xlu0 %756
    %758 = vset.pattern.permute.xlu0 3
    %759 = vperm.xlu0 %758, %v32
    %v760 = vpop.permute.xlu0 %759
    %761 = vset.pattern.permute.xlu0 3
    %762 = vperm.xlu0 %761, %v33
    %v763 = vpop.permute.xlu0 %762
    %764 = vset.pattern.permute.xlu0 3
    %765 = vperm.xlu0 %764, %v34
    %v766 = vpop.permute.xlu0 %765
    %767 = vset.pattern.permute.xlu0 3
    %768 = vperm.xlu0 %767, %v35
    %v769 = vpop.permute.xlu0 %768
    %770 = vset.pattern.permute.xlu0 3
    %771 = vperm.xlu0 %770, %v36
    %v772 = vpop.permute.xlu0 %771
    %773 = vset.pattern.permute.xlu0 3
    %774 = vperm.xlu0 %773, %v37
    %v775 = vpop.permute.xlu0 %774
    %776 = vset.pattern.permute.xlu0 3
    %777 = vperm.xlu0 %776, %v38
    %v778 = vpop.permute.xlu0 %777
    %779 = vset.pattern.permute.xlu0 3
    %780 = vperm.xlu0 %779, %v39
    %v781 = vpop.permute.xlu0 %780
    %782 = vset.pattern.permute.xlu0 3
    %783 = vperm.xlu0 %782, %v40
    %v784 = vpop.permute.xlu0 %783
    %785 = vset.pattern.permute.xlu0 3
    %786 = vperm.xlu0 %785, %v41
    %v787 = vpop.permute.xlu0 %786
    %788 = vset.pattern.permute.xlu0 3
    %789 = vperm.xlu0 %788, %v42
    %v790 = vpop.permute.xlu0 %789
    %791 = vset.pattern.permute.xlu0 3
    %792 = vperm.xlu0 %791, %v43
    %v793 = vpop.permute.xlu0 %792
    %794 = vset.pattern.permute.xlu0 3
    %795 = vperm.xlu0 %794, %v44
    %v796 = vpop.permute.xlu0 %795
    %797 = vset.pattern.permute.xlu0 3
    %798 = vperm.xlu0 %797, %v45
    %v799 = vpop.permute.xlu0 %798
    %800 = vset.pattern.permute.xlu0 3
    %801 = vperm.xlu0 %800, %v46
    %v802 = vpop.permute.xlu0 %801
    %803 = vset.pattern.permute.xlu0 3
    %804 = vperm.xlu0 %803, %v47
    %v805 = vpop.permute.xlu0 %804
    %806 = vset.pattern.permute.xlu0 3
    %807 = vperm.xlu0 %806, %v48
    %v808 = vpop.permute.xlu0 %807
    %809 = vset.pattern.permute.xlu0 3
    %810 = vperm.xlu0 %809, %v49
    %v811 = vpop.permute.xlu0 %810
    %812 = vset.pattern.permute.xlu0 3
    %813 = vperm.xlu0 %812, %v50
    %v814 = vpop.permute.xlu0 %813
    %815 = vset.pattern.permute.xlu0 3
    %816 = vperm.xlu0 %815, %v51
    %v817 = vpop.permute.xlu0 %816
    %818 = vset.pattern.permute.xlu0 3
    %819 = vperm.xlu0 %818, %v52
    %v820 = vpop.permute.xlu0 %819
    %821 = vset.pattern.permute.xlu0 3
    %822 = vperm.xlu0 %821, %v53
    %v823 = vpop.permute.xlu0 %822
    %vm824 = vcmp.eq.s32.totalorder %v55, %v730
    %vm825 = vcmp.eq.s32.totalorder %v55, %v733
    %vm826 = vcmp.eq.s32.totalorder %v55, %v736
    %vm827 = vcmp.eq.s32.totalorder %v55, %v739
    %vm828 = vcmp.eq.s32.totalorder %v55, %v742
    %vm829 = vcmp.eq.s32.totalorder %v55, %v745
    %vm830 = vcmp.eq.s32.totalorder %v55, %v748
    %vm831 = vcmp.eq.s32.totalorder %v55, %v751
    %vm832 = vcmp.eq.s32.totalorder %v55, %v754
    %vm833 = vcmp.eq.s32.totalorder %v55, %v757
    %vm834 = vcmp.eq.s32.totalorder %v55, %v760
    %vm835 = vcmp.eq.s32.totalorder %v55, %v763
    %vm836 = vcmp.eq.s32.totalorder %v55, %v766
    %vm837 = vcmp.eq.s32.totalorder %v55, %v769
    %vm838 = vcmp.eq.s32.totalorder %v55, %v772
    %vm839 = vcmp.eq.s32.totalorder %v55, %v775
    %vm840 = vcmp.eq.s32.totalorder %v55, %v778
    %vm841 = vcmp.eq.s32.totalorder %v55, %v781
    %vm842 = vcmp.eq.s32.totalorder %v55, %v784
    %vm843 = vcmp.eq.s32.totalorder %v55, %v787
    %vm844 = vcmp.eq.s32.totalorder %v55, %v790
    %vm845 = vcmp.eq.s32.totalorder %v55, %v793
    %vm846 = vcmp.eq.s32.totalorder %v55, %v796
    %vm847 = vcmp.eq.s32.totalorder %v55, %v799
    %vm848 = vcmp.eq.s32.totalorder %v55, %v802
    %vm849 = vcmp.eq.s32.totalorder %v55, %v805
    %vm850 = vcmp.eq.s32.totalorder %v55, %v808
    %vm851 = vcmp.eq.s32.totalorder %v55, %v811
    %vm852 = vcmp.eq.s32.totalorder %v55, %v814
    %vm853 = vcmp.eq.s32.totalorder %v55, %v817
    %vm854 = vcmp.eq.s32.totalorder %v55, %v820
    %vm855 = vcmp.eq.s32.totalorder %v55, %v823
    %v856 = vsel %vm824, 1, 0
    %v857 = vsel %vm825, 1, 0
    %v858 = vsel %vm826, 1, 0
    %v859 = vsel %vm827, 1, 0
    %v860 = vsel %vm828, 1, 0
    %v861 = vsel %vm829, 1, 0
    %v862 = vsel %vm830, 1, 0
    %v863 = vsel %vm831, 1, 0
    %v864 = vsel %vm832, 1, 0
    %v865 = vsel %vm833, 1, 0
    %v866 = vsel %vm834, 1, 0
    %v867 = vsel %vm835, 1, 0
    %v868 = vsel %vm836, 1, 0
    %v869 = vsel %vm837, 1, 0
    %v870 = vsel %vm838, 1, 0
    %v871 = vsel %vm839, 1, 0
    %v872 = vsel %vm840, 1, 0
    %v873 = vsel %vm841, 1, 0
    %v874 = vsel %vm842, 1, 0
    %v875 = vsel %vm843, 1, 0
    %v876 = vsel %vm844, 1, 0
    %v877 = vsel %vm845, 1, 0
    %v878 = vsel %vm846, 1, 0
    %v879 = vsel %vm847, 1, 0
    %v880 = vsel %vm848, 1, 0
    %v881 = vsel %vm849, 1, 0
    %v882 = vsel %vm850, 1, 0
    %v883 = vsel %vm851, 1, 0
    %v884 = vsel %vm852, 1, 0
    %v885 = vsel %vm853, 1, 0
    %v886 = vsel %vm854, 1, 0
    %v887 = vsel %vm855, 1, 0
    %v888 = vcvt.s32.f32 %v856
    %v889 = vcvt.s32.f32 %v857
    %v890 = vcvt.s32.f32 %v858
    %v891 = vcvt.s32.f32 %v859
    %v892 = vcvt.s32.f32 %v860
    %v893 = vcvt.s32.f32 %v861
    %v894 = vcvt.s32.f32 %v862
    %v895 = vcvt.s32.f32 %v863
    %v896 = vcvt.s32.f32 %v864
    %v897 = vcvt.s32.f32 %v865
    %v898 = vcvt.s32.f32 %v866
    %v899 = vcvt.s32.f32 %v867
    %v900 = vcvt.s32.f32 %v868
    %v901 = vcvt.s32.f32 %v869
    %v902 = vcvt.s32.f32 %v870
    %v903 = vcvt.s32.f32 %v871
    %v904 = vcvt.s32.f32 %v872
    %v905 = vcvt.s32.f32 %v873
    %v906 = vcvt.s32.f32 %v874
    %v907 = vcvt.s32.f32 %v875
    %v908 = vcvt.s32.f32 %v876
    %v909 = vcvt.s32.f32 %v877
    %v910 = vcvt.s32.f32 %v878
    %v911 = vcvt.s32.f32 %v879
    %v912 = vcvt.s32.f32 %v880
    %v913 = vcvt.s32.f32 %v881
    %v914 = vcvt.s32.f32 %v882
    %v915 = vcvt.s32.f32 %v883
    %v916 = vcvt.s32.f32 %v884
    %v917 = vcvt.s32.f32 %v885
    %v918 = vcvt.s32.f32 %v886
    %v919 = vcvt.s32.f32 %v887
    %v920 = vpack.c.bf16 %v889, %v888
    %v921 = vpack.c.bf16 %v891, %v890
    %v922 = vpack.c.bf16 %v893, %v892
    %v923 = vpack.c.bf16 %v895, %v894
    %v924 = vpack.c.bf16 %v897, %v896
    %v925 = vpack.c.bf16 %v899, %v898
    %v926 = vpack.c.bf16 %v901, %v900
    %v927 = vpack.c.bf16 %v903, %v902
    %v928 = vpack.c.bf16 %v905, %v904
    %v929 = vpack.c.bf16 %v907, %v906
    %v930 = vpack.c.bf16 %v909, %v908
    %v931 = vpack.c.bf16 %v911, %v910
    %v932 = vpack.c.bf16 %v913, %v912
    %v933 = vpack.c.bf16 %v915, %v914
    %v934 = vpack.c.bf16 %v917, %v916
    %v935 = vpack.c.bf16 %v919, %v918
    %v936 = vadd.bf16 %v712, %v920
    %v937 = vadd.bf16 %v713, %v921
    %v938 = vadd.bf16 %v714, %v922
    %v939 = vadd.bf16 %v715, %v923
    %v940 = vadd.bf16 %v716, %v924
    %v941 = vadd.bf16 %v717, %v925
    %v942 = vadd.bf16 %v718, %v926
    %v943 = vadd.bf16 %v719, %v927
    %v944 = vadd.bf16 %v720, %v928
    %v945 = vadd.bf16 %v721, %v929
    %v946 = vadd.bf16 %v722, %v930
    %v947 = vadd.bf16 %v723, %v931
    %v948 = vadd.bf16 %v724, %v932
    %v949 = vadd.bf16 %v725, %v933
    %v950 = vadd.bf16 %v726, %v934
    %v951 = vadd.bf16 %v727, %v935
    %v952 = vld [vmem:[%s1] sm:$0xf]
    %v953 = vld [vmem:[%s1 + $0x4] sm:$0xf]
    %v954 = vld [vmem:[%s1 + $0x8] sm:$0xf]
    %v955 = vld [vmem:[%s1 + $0xc] sm:$0xf]
    %v956 = vld [vmem:[%s1 + $0x10] sm:$0xf]
    %v957 = vld [vmem:[%s1 + $0x14] sm:$0xf]
    %v958 = vld [vmem:[%s1 + $0x18] sm:$0xf]
    %v959 = vld [vmem:[%s1 + $0x1c] sm:$0xf]
    %v960 = vld [vmem:[%s1 + $0x20] sm:$0xf]
    %v961 = vld [vmem:[%s1 + $0x24] sm:$0xf]
    %v962 = vld [vmem:[%s1 + $0x28] sm:$0xf]
    %v963 = vld [vmem:[%s1 + $0x2c] sm:$0xf]
    %v964 = vld [vmem:[%s1 + $0x30] sm:$0xf]
    %v965 = vld [vmem:[%s1 + $0x34] sm:$0xf]
    %v966 = vld [vmem:[%s1 + $0x38] sm:$0xf]
    %v967 = vld [vmem:[%s1 + $0x3c] sm:$0xf]
    %v968 = vld [vmem:[%s2] sm:$0x1]
    %v970 = vlaneseq
    %v971 = vshrl.u32 %v970, 7
    %v972 = vsub.s32 0, %v971
    %v973 = vrot.slane %v968, %v972
    %v991 = vunpack.c.l.b16 %v952
    %v992 = vunpack.c.l.b16 %v953
    %v993 = vunpack.c.l.b16 %v954
    %v994 = vunpack.c.l.b16 %v955
    %v995 = vunpack.c.l.b16 %v956
    %v996 = vunpack.c.l.b16 %v957
    %v997 = vunpack.c.l.b16 %v958
    %v998 = vunpack.c.l.b16 %v959
    %v999 = vunpack.c.l.b16 %v960
    %v1000 = vunpack.c.l.b16 %v961
    %v1001 = vunpack.c.l.b16 %v962
    %v1002 = vunpack.c.l.b16 %v963
    %v1003 = vunpack.c.l.b16 %v964
    %v1004 = vunpack.c.l.b16 %v965
    %v1005 = vunpack.c.l.b16 %v966
    %v1006 = vunpack.c.l.b16 %v967
    %v1007 = vpack.c.b16 %v992, %v991
    %v1008 = vpack.c.b16 %v994, %v993
    %v1009 = vpack.c.b16 %v996, %v995
    %v1010 = vpack.c.b16 %v998, %v997
    %v1011 = vpack.c.b16 %v1000, %v999
    %v1012 = vpack.c.b16 %v1002, %v1001
    %v1013 = vpack.c.b16 %v1004, %v1003
    %v1014 = vpack.c.b16 %v1006, %v1005
    %1023 = vmatprep.subr.bf16.mxu0 0
    %1024 = vmatpush1.bf16.msra.mxu0 %v1007
    %1025 = vmatprep.subr.bf16.mxu0 0
    %1026 = vmatpush1.bf16.msra.mxu0 %v1008
    %1027 = vmatprep.subr.bf16.mxu0 0
    %1028 = vmatpush1.bf16.msra.mxu0 %v1009
    %1029 = vmatprep.subr.bf16.mxu0 0
    %1030 = vmatpush1.bf16.msra.mxu0 %v1010
    %1031 = vmatprep.subr.bf16.mxu0 0
    %1032 = vmatpush1.bf16.msra.mxu0 %v1011
    %1033 = vmatprep.subr.bf16.mxu0 0
    %1034 = vmatpush1.bf16.msra.mxu0 %v1012
    %1035 = vmatprep.subr.bf16.mxu0 0
    %1036 = vmatpush1.bf16.msra.mxu0 %v1013
    %1037 = vmatprep.subr.bf16.mxu0 0
    %1038 = vmatpush1.bf16.msra.mxu0 %v1014
    %1039 = vmatprep.subr.bf16.mxu0 0
    %1040 = vmatpush1.bf16.msra.mxu0 0
    %1041 = vmatprep.subr.bf16.mxu0 0
    %1042 = vmatpush1.bf16.msra.mxu0 0
    %1043 = vmatprep.subr.bf16.mxu0 0
    %1044 = vmatpush1.bf16.msra.mxu0 0
    %1045 = vmatprep.subr.bf16.mxu0 0
    %1046 = vmatpush1.bf16.msra.mxu0 0
    %1047 = vmatprep.subr.bf16.mxu0 0
    %1048 = vmatpush1.bf16.msra.mxu0 0
    %1049 = vmatprep.subr.bf16.mxu0 0
    %1050 = vmatpush1.bf16.msra.mxu0 0
    %1051 = vmatprep.subr.bf16.mxu0 0
    %1052 = vmatpush1.bf16.msra.mxu0 0
    %1053 = vmatprep.subr.bf16.mxu0 0
    %1054 = vmatpush1.bf16.msra.mxu0 0
    %1055 = vmatprep.mubr.bf16.mxu0 0
    %1056 = vmatmul.mubr.bf16.gmra.mrb[0].mxu0 %v936
    %v1057 = vpop.f32.mrb[0].mxu0
    %v1058 = vadd.f32 %v973, %v1057
    %v1059 = vpop.f32.mrb[0].mxu0
    %v1060 = vpop.f32.mrb[0].mxu0
    %v1061 = vadd.f32 %v973, %v1060
    %v1062 = vpop.f32.mrb[0].mxu0
    %1063 = vmatprep.mubr.bf16.mxu0 0
    %1064 = vmatmul.mubr.bf16.gmra.mrb[0].mxu0 %v937
    %v1065 = vpop.f32.mrb[0].mxu0
    %v1066 = vadd.f32 %v973, %v1065
    %v1067 = vpop.f32.mrb[0].mxu0
    %v1068 = vpop.f32.mrb[0].mxu0
    %v1069 = vadd.f32 %v973, %v1068
    %v1070 = vpop.f32.mrb[0].mxu0
    %1071 = vmatprep.mubr.bf16.mxu0 0
    %1072 = vmatmul.mubr.bf16.gmra.mrb[0].mxu0 %v938
    %v1073 = vpop.f32.mrb[0].mxu0
    %v1074 = vadd.f32 %v973, %v1073
    %v1075 = vpop.f32.mrb[0].mxu0
    %v1076 = vpop.f32.mrb[0].mxu0
    %v1077 = vadd.f32 %v973, %v1076
    %v1078 = vpop.f32.mrb[0].mxu0
    %1079 = vmatprep.mubr.bf16.mxu0 0
    %1080 = vmatmul.mubr.bf16.gmra.mrb[0].mxu0 %v939
    %v1081 = vpop.f32.mrb[0].mxu0
    %v1082 = vadd.f32 %v973, %v1081
    %v1083 = vpop.f32.mrb[0].mxu0
    %v1084 = vpop.f32.mrb[0].mxu0
    %v1085 = vadd.f32 %v973, %v1084
    %v1086 = vpop.f32.mrb[0].mxu0
    %1087 = vmatprep.mubr.bf16.mxu0 0
    %1088 = vmatmul.mubr.bf16.gmra.mrb[0].mxu0 %v940
    %v1089 = vpop.f32.mrb[0].mxu0
    %v1090 = vadd.f32 %v973, %v1089
    %v1091 = vpop.f32.mrb[0].mxu0
    %v1092 = vpop.f32.mrb[0].mxu0
    %v1093 = vadd.f32 %v973, %v1092
    %v1094 = vpop.f32.mrb[0].mxu0
    %1095 = vmatprep.mubr.bf16.mxu0 0
    %1096 = vmatmul.mubr.bf16.gmra.mrb[0].mxu0 %v941
    %v1097 = vpop.f32.mrb[0].mxu0
    %v1098 = vadd.f32 %v973, %v1097
    %v1099 = vpop.f32.mrb[0].mxu0
    %v1100 = vpop.f32.mrb[0].mxu0
    %v1101 = vadd.f32 %v973, %v1100
    %v1102 = vpop.f32.mrb[0].mxu0
    %1103 = vmatprep.mubr.bf16.mxu0 0
    %1104 = vmatmul.mubr.bf16.gmra.mrb[0].mxu0 %v942
    %v1105 = vpop.f32.mrb[0].mxu0
    %v1106 = vadd.f32 %v973, %v1105
    %v1107 = vpop.f32.mrb[0].mxu0
    %v1108 = vpop.f32.mrb[0].mxu0
    %v1109 = vadd.f32 %v973, %v1108
    %v1110 = vpop.f32.mrb[0].mxu0
    %1111 = vmatprep.mubr.bf16.mxu0 0
    %1112 = vmatmul.mubr.bf16.gmra.mrb[0].mxu0 %v943
    %v1113 = vpop.f32.mrb[0].mxu0
    %v1114 = vadd.f32 %v973, %v1113
    %v1115 = vpop.f32.mrb[0].mxu0
    %v1116 = vpop.f32.mrb[0].mxu0
    %v1117 = vadd.f32 %v973, %v1116
    %v1118 = vpop.f32.mrb[0].mxu0
    %1119 = vmatprep.mubr.bf16.mxu0 0
    %1120 = vmatmul.mubr.bf16.gmra.mrb[0].mxu0 %v944
    %v1121 = vpop.f32.mrb[0].mxu0
    %v1122 = vadd.f32 %v973, %v1121
    %v1123 = vpop.f32.mrb[0].mxu0
    %v1124 = vpop.f32.mrb[0].mxu0
    %v1125 = vadd.f32 %v973, %v1124
    %v1126 = vpop.f32.mrb[0].mxu0
    %1127 = vmatprep.mubr.bf16.mxu0 0
    %1128 = vmatmul.mubr.bf16.gmra.mrb[0].mxu0 %v945
    %v1129 = vpop.f32.mrb[0].mxu0
    %v1130 = vadd.f32 %v973, %v1129
    %v1131 = vpop.f32.mrb[0].mxu0
    %v1132 = vpop.f32.mrb[0].mxu0
    %v1133 = vadd.f32 %v973, %v1132
    %v1134 = vpop.f32.mrb[0].mxu0
    %1135 = vmatprep.mubr.bf16.mxu0 0
    %1136 = vmatmul.mubr.bf16.gmra.mrb[0].mxu0 %v946
    %v1137 = vpop.f32.mrb[0].mxu0
    %v1138 = vadd.f32 %v973, %v1137
    %v1139 = vpop.f32.mrb[0].mxu0
    %v1140 = vpop.f32.mrb[0].mxu0
    %v1141 = vadd.f32 %v973, %v1140
    %v1142 = vpop.f32.mrb[0].mxu0
    %1143 = vmatprep.mubr.bf16.mxu0 0
    %1144 = vmatmul.mubr.bf16.gmra.mrb[0].mxu0 %v947
    %v1145 = vpop.f32.mrb[0].mxu0
    %v1146 = vadd.f32 %v973, %v1145
    %v1147 = vpop.f32.mrb[0].mxu0
    %v1148 = vpop.f32.mrb[0].mxu0
    %v1149 = vadd.f32 %v973, %v1148
    %v1150 = vpop.f32.mrb[0].mxu0
    %1151 = vmatprep.mubr.bf16.mxu0 0
    %1152 = vmatmul.mubr.bf16.gmra.mrb[0].mxu0 %v948
    %v1153 = vpop.f32.mrb[0].mxu0
    %v1154 = vadd.f32 %v973, %v1153
    %v1155 = vpop.f32.mrb[0].mxu0
    %v1156 = vpop.f32.mrb[0].mxu0
    %v1157 = vadd.f32 %v973, %v1156
    %v1158 = vpop.f32.mrb[0].mxu0
    %1159 = vmatprep.mubr.bf16.mxu0 0
    %1160 = vmatmul.mubr.bf16.gmra.mrb[0].mxu0 %v949
    %v1161 = vpop.f32.mrb[0].mxu0
    %v1162 = vadd.f32 %v973, %v1161
    %v1163 = vpop.f32.mrb[0].mxu0
    %v1164 = vpop.f32.mrb[0].mxu0
    %v1165 = vadd.f32 %v973, %v1164
    %v1166 = vpop.f32.mrb[0].mxu0
    %1167 = vmatprep.mubr.bf16.mxu0 0
    %1168 = vmatmul.mubr.bf16.gmra.mrb[0].mxu0 %v950
    %v1169 = vpop.f32.mrb[0].mxu0
    %v1170 = vadd.f32 %v973, %v1169
    %v1171 = vpop.f32.mrb[0].mxu0
    %v1172 = vpop.f32.mrb[0].mxu0
    %v1173 = vadd.f32 %v973, %v1172
    %v1174 = vpop.f32.mrb[0].mxu0
    %1175 = vmatprep.mubr.bf16.mxu0 0
    %1176 = vmatmul.mubr.bf16.gmra.mrb[0].mxu0 %v951
    %v1177 = vpop.f32.mrb[0].mxu0
    %v1178 = vadd.f32 %v973, %v1177
    %v1179 = vpop.f32.mrb[0].mxu0
    %v1180 = vpop.f32.mrb[0].mxu0
    %v1181 = vadd.f32 %v973, %v1180
    %v1182 = vpop.f32.mrb[0].mxu0
    %1183 = vdwg.mxu0
    %v1184 = vmax.f32 %v1058, 0.0
    %v1185 = vmax.f32 %v1061, 0.0
    %v1186 = vmax.f32 %v1066, 0.0
    %v1187 = vmax.f32 %v1069, 0.0
    %v1188 = vmax.f32 %v1074, 0.0
    %v1189 = vmax.f32 %v1077, 0.0
    %v1190 = vmax.f32 %v1082, 0.0
    %v1191 = vmax.f32 %v1085, 0.0
    %v1192 = vmax.f32 %v1090, 0.0
    %v1193 = vmax.f32 %v1093, 0.0
    %v1194 = vmax.f32 %v1098, 0.0
    %v1195 = vmax.f32 %v1101, 0.0
    %v1196 = vmax.f32 %v1106, 0.0
    %v1197 = vmax.f32 %v1109, 0.0
    %v1198 = vmax.f32 %v1114, 0.0
    %v1199 = vmax.f32 %v1117, 0.0
    %v1200 = vmax.f32 %v1122, 0.0
    %v1201 = vmax.f32 %v1125, 0.0
    %v1202 = vmax.f32 %v1130, 0.0
    %v1203 = vmax.f32 %v1133, 0.0
    %v1204 = vmax.f32 %v1138, 0.0
    %v1205 = vmax.f32 %v1141, 0.0
    %v1206 = vmax.f32 %v1146, 0.0
    %v1207 = vmax.f32 %v1149, 0.0
    %v1208 = vmax.f32 %v1154, 0.0
    %v1209 = vmax.f32 %v1157, 0.0
    %v1210 = vmax.f32 %v1162, 0.0
    %v1211 = vmax.f32 %v1165, 0.0
    %v1212 = vmax.f32 %v1170, 0.0
    %v1213 = vmax.f32 %v1173, 0.0
    %v1214 = vmax.f32 %v1178, 0.0
    %v1215 = vmax.f32 %v1181, 0.0
    %v1216 = vpack.c.bf16 %v1185, %v1184
    %v1217 = vpack.c.bf16 %v1187, %v1186
    %v1218 = vpack.c.bf16 %v1189, %v1188
    %v1219 = vpack.c.bf16 %v1191, %v1190
    %v1220 = vpack.c.bf16 %v1193, %v1192
    %v1221 = vpack.c.bf16 %v1195, %v1194
    %v1222 = vpack.c.bf16 %v1197, %v1196
    %v1223 = vpack.c.bf16 %v1199, %v1198
    %v1224 = vpack.c.bf16 %v1201, %v1200
    %v1225 = vpack.c.bf16 %v1203, %v1202
    %v1226 = vpack.c.bf16 %v1205, %v1204
    %v1227 = vpack.c.bf16 %v1207, %v1206
    %v1228 = vpack.c.bf16 %v1209, %v1208
    %v1229 = vpack.c.bf16 %v1211, %v1210
    %v1230 = vpack.c.bf16 %v1213, %v1212
    %v1231 = vpack.c.bf16 %v1215, %v1214
    %v1232 = vld [vmem:[%s3] sm:$0xf]
    %v1233 = vld [vmem:[%s3 + $0x4] sm:$0xf]
    %v1234 = vld [vmem:[%s3 + $0x8] sm:$0xf]
    %v1235 = vld [vmem:[%s3 + $0xc] sm:$0xf]
    %v1236 = vld [vmem:[%s3 + $0x10] sm:$0xf]
    %v1237 = vld [vmem:[%s3 + $0x14] sm:$0xf]
    %v1238 = vld [vmem:[%s3 + $0x18] sm:$0xf]
    %v1239 = vld [vmem:[%s3 + $0x1c] sm:$0xf]
    %v1240 = vld [vmem:[%s3 + $0x20] sm:$0xf]
    %v1241 = vld [vmem:[%s3 + $0x24] sm:$0xf]
    %v1242 = vld [vmem:[%s3 + $0x28] sm:$0xf]
    %v1243 = vld [vmem:[%s3 + $0x2c] sm:$0xf]
    %v1244 = vld [vmem:[%s3 + $0x30] sm:$0xf]
    %v1245 = vld [vmem:[%s3 + $0x34] sm:$0xf]
    %v1246 = vld [vmem:[%s3 + $0x38] sm:$0xf]
    %v1247 = vld [vmem:[%s3 + $0x3c] sm:$0xf]
    %v1248 = vld [vmem:[%s4] sm:$0x1]
    %v1250 = vlaneseq
    %v1251 = vshrl.u32 %v1250, 7
    %v1252 = vsub.s32 0, %v1251
    %v1253 = vrot.slane %v1248, %v1252
    %v1271 = vunpack.c.l.b16 %v1232
    %v1272 = vunpack.c.l.b16 %v1233
    %v1273 = vunpack.c.l.b16 %v1234
    %v1274 = vunpack.c.l.b16 %v1235
    %v1275 = vunpack.c.l.b16 %v1236
    %v1276 = vunpack.c.l.b16 %v1237
    %v1277 = vunpack.c.l.b16 %v1238
    %v1278 = vunpack.c.l.b16 %v1239
    %v1279 = vunpack.c.l.b16 %v1240
    %v1280 = vunpack.c.l.b16 %v1241
    %v1281 = vunpack.c.l.b16 %v1242
    %v1282 = vunpack.c.l.b16 %v1243
    %v1283 = vunpack.c.l.b16 %v1244
    %v1284 = vunpack.c.l.b16 %v1245
    %v1285 = vunpack.c.l.b16 %v1246
    %v1286 = vunpack.c.l.b16 %v1247
    %v1287 = vpack.c.b16 %v1272, %v1271
    %v1288 = vpack.c.b16 %v1274, %v1273
    %v1289 = vpack.c.b16 %v1276, %v1275
    %v1290 = vpack.c.b16 %v1278, %v1277
    %v1291 = vpack.c.b16 %v1280, %v1279
    %v1292 = vpack.c.b16 %v1282, %v1281
    %v1293 = vpack.c.b16 %v1284, %v1283
    %v1294 = vpack.c.b16 %v1286, %v1285
    %1303 = vmatprep.subr.bf16.mxu0 0
    %1304 = vmatpush1.bf16.msra.mxu0 %v1287
    %1305 = vmatprep.subr.bf16.mxu0 0
    %1306 = vmatpush1.bf16.msra.mxu0 %v1288
    %1307 = vmatprep.subr.bf16.mxu0 0
    %1308 = vmatpush1.bf16.msra.mxu0 %v1289
    %1309 = vmatprep.subr.bf16.mxu0 0
    %1310 = vmatpush1.bf16.msra.mxu0 %v1290
    %1311 = vmatprep.subr.bf16.mxu0 0
    %1312 = vmatpush1.bf16.msra.mxu0 %v1291
    %1313 = vmatprep.subr.bf16.mxu0 0
    %1314 = vmatpush1.bf16.msra.mxu0 %v1292
    %1315 = vmatprep.subr.bf16.mxu0 0
    %1316 = vmatpush1.bf16.msra.mxu0 %v1293
    %1317 = vmatprep.subr.bf16.mxu0 0
    %1318 = vmatpush1.bf16.msra.mxu0 %v1294
    %1319 = vmatprep.subr.bf16.mxu0 0
    %1320 = vmatpush1.bf16.msra.mxu0 0
    %1321 = vmatprep.subr.bf16.mxu0 0
    %1322 = vmatpush1.bf16.msra.mxu0 0
    %1323 = vmatprep.subr.bf16.mxu0 0
    %1324 = vmatpush1.bf16.msra.mxu0 0
    %1325 = vmatprep.subr.bf16.mxu0 0
    %1326 = vmatpush1.bf16.msra.mxu0 0
    %1327 = vmatprep.subr.bf16.mxu0 0
    %1328 = vmatpush1.bf16.msra.mxu0 0
    %1329 = vmatprep.subr.bf16.mxu0 0
    %1330 = vmatpush1.bf16.msra.mxu0 0
    %1331 = vmatprep.subr.bf16.mxu0 0
    %1332 = vmatpush1.bf16.msra.mxu0 0
    %1333 = vmatprep.subr.bf16.mxu0 0
    %1334 = vmatpush1.bf16.msra.mxu0 0
    %1335 = vmatprep.mubr.bf16.mxu0 0
    %1336 = vmatmul.mubr.bf16.gmra.mrb[0].mxu0 %v1216
    %v1337 = vpop.f32.mrb[0].mxu0
    %v1338 = vadd.f32 %v1253, %v1337
    %v1339 = vpop.f32.mrb[0].mxu0
    %v1340 = vpop.f32.mrb[0].mxu0
    %v1341 = vadd.f32 %v1253, %v1340
    %v1342 = vpop.f32.mrb[0].mxu0
    %1343 = vmatprep.mubr.bf16.mxu0 0
    %1344 = vmatmul.mubr.bf16.gmra.mrb[0].mxu0 %v1217
    %v1345 = vpop.f32.mrb[0].mxu0
    %v1346 = vadd.f32 %v1253, %v1345
    %v1347 = vpop.f32.mrb[0].mxu0
    %v1348 = vpop.f32.mrb[0].mxu0
    %v1349 = vadd.f32 %v1253, %v1348
    %v1350 = vpop.f32.mrb[0].mxu0
    %1351 = vmatprep.mubr.bf16.mxu0 0
    %1352 = vmatmul.mubr.bf16.gmra.mrb[0].mxu0 %v1218
    %v1353 = vpop.f32.mrb[0].mxu0
    %v1354 = vadd.f32 %v1253, %v1353
    %v1355 = vpop.f32.mrb[0].mxu0
    %v1356 = vpop.f32.mrb[0].mxu0
    %v1357 = vadd.f32 %v1253, %v1356
    %v1358 = vpop.f32.mrb[0].mxu0
    %1359 = vmatprep.mubr.bf16.mxu0 0
    %1360 = vmatmul.mubr.bf16.gmra.mrb[0].mxu0 %v1219
    %v1361 = vpop.f32.mrb[0].mxu0
    %v1362 = vadd.f32 %v1253, %v1361
    %v1363 = vpop.f32.mrb[0].mxu0
    %v1364 = vpop.f32.mrb[0].mxu0
    %v1365 = vadd.f32 %v1253, %v1364
    %v1366 = vpop.f32.mrb[0].mxu0
    %1367 = vmatprep.mubr.bf16.mxu0 0
    %1368 = vmatmul.mubr.bf16.gmra.mrb[0].mxu0 %v1220
    %v1369 = vpop.f32.mrb[0].mxu0
    %v1370 = vadd.f32 %v1253, %v1369
    %v1371 = vpop.f32.mrb[0].mxu0
    %v1372 = vpop.f32.mrb[0].mxu0
    %v1373 = vadd.f32 %v1253, %v1372
    %v1374 = vpop.f32.mrb[0].mxu0
    %1375 = vmatprep.mubr.bf16.mxu0 0
    %1376 = vmatmul.mubr.bf16.gmra.mrb[0].mxu0 %v1221
    %v1377 = vpop.f32.mrb[0].mxu0
    %v1378 = vadd.f32 %v1253, %v1377
    %v1379 = vpop.f32.mrb[0].mxu0
    %v1380 = vpop.f32.mrb[0].mxu0
    %v1381 = vadd.f32 %v1253, %v1380
    %v1382 = vpop.f32.mrb[0].mxu0
    %1383 = vmatprep.mubr.bf16.mxu0 0
    %1384 = vmatmul.mubr.bf16.gmra.mrb[0].mxu0 %v1222
    %v1385 = vpop.f32.mrb[0].mxu0
    %v1386 = vadd.f32 %v1253, %v1385
    %v1387 = vpop.f32.mrb[0].mxu0
    %v1388 = vpop.f32.mrb[0].mxu0
    %v1389 = vadd.f32 %v1253, %v1388
    %v1390 = vpop.f32.mrb[0].mxu0
    %1391 = vmatprep.mubr.bf16.mxu0 0
    %1392 = vmatmul.mubr.bf16.gmra.mrb[0].mxu0 %v1223
    %v1393 = vpop.f32.mrb[0].mxu0
    %v1394 = vadd.f32 %v1253, %v1393
    %v1395 = vpop.f32.mrb[0].mxu0
    %v1396 = vpop.f32.mrb[0].mxu0
    %v1397 = vadd.f32 %v1253, %v1396
    %v1398 = vpop.f32.mrb[0].mxu0
    %1399 = vmatprep.mubr.bf16.mxu0 0
    %1400 = vmatmul.mubr.bf16.gmra.mrb[0].mxu0 %v1224
    %v1401 = vpop.f32.mrb[0].mxu0
    %v1402 = vadd.f32 %v1253, %v1401
    %v1403 = vpop.f32.mrb[0].mxu0
    %v1404 = vpop.f32.mrb[0].mxu0
    %v1405 = vadd.f32 %v1253, %v1404
    %v1406 = vpop.f32.mrb[0].mxu0
    %1407 = vmatprep.mubr.bf16.mxu0 0
    %1408 = vmatmul.mubr.bf16.gmra.mrb[0].mxu0 %v1225
    %v1409 = vpop.f32.mrb[0].mxu0
    %v1410 = vadd.f32 %v1253, %v1409
    %v1411 = vpop.f32.mrb[0].mxu0
    %v1412 = vpop.f32.mrb[0].mxu0
    %v1413 = vadd.f32 %v1253, %v1412
    %v1414 = vpop.f32.mrb[0].mxu0
    %1415 = vmatprep.mubr.bf16.mxu0 0
    %1416 = vmatmul.mubr.bf16.gmra.mrb[0].mxu0 %v1226
    %v1417 = vpop.f32.mrb[0].mxu0
    %v1418 = vadd.f32 %v1253, %v1417
    %v1419 = vpop.f32.mrb[0].mxu0
    %v1420 = vpop.f32.mrb[0].mxu0
    %v1421 = vadd.f32 %v1253, %v1420
    %v1422 = vpop.f32.mrb[0].mxu0
    %1423 = vmatprep.mubr.bf16.mxu0 0
    %1424 = vmatmul.mubr.bf16.gmra.mrb[0].mxu0 %v1227
    %v1425 = vpop.f32.mrb[0].mxu0
    %v1426 = vadd.f32 %v1253, %v1425
    %v1427 = vpop.f32.mrb[0].mxu0
    %v1428 = vpop.f32.mrb[0].mxu0
    %v1429 = vadd.f32 %v1253, %v1428
    %v1430 = vpop.f32.mrb[0].mxu0
    %1431 = vmatprep.mubr.bf16.mxu0 0
    %1432 = vmatmul.mubr.bf16.gmra.mrb[0].mxu0 %v1228
    %v1433 = vpop.f32.mrb[0].mxu0
    %v1434 = vadd.f32 %v1253, %v1433
    %v1435 = vpop.f32.mrb[0].mxu0
    %v1436 = vpop.f32.mrb[0].mxu0
    %v1437 = vadd.f32 %v1253, %v1436
    %v1438 = vpop.f32.mrb[0].mxu0
    %1439 = vmatprep.mubr.bf16.mxu0 0
    %1440 = vmatmul.mubr.bf16.gmra.mrb[0].mxu0 %v1229
    %v1441 = vpop.f32.mrb[0].mxu0
    %v1442 = vadd.f32 %v1253, %v1441
    %v1443 = vpop.f32.mrb[0].mxu0
    %v1444 = vpop.f32.mrb[0].mxu0
    %v1445 = vadd.f32 %v1253, %v1444
    %v1446 = vpop.f32.mrb[0].mxu0
    %1447 = vmatprep.mubr.bf16.mxu0 0
    %1448 = vmatmul.mubr.bf16.gmra.mrb[0].mxu0 %v1230
    %v1449 = vpop.f32.mrb[0].mxu0
    %v1450 = vadd.f32 %v1253, %v1449
    %v1451 = vpop.f32.mrb[0].mxu0
    %v1452 = vpop.f32.mrb[0].mxu0
    %v1453 = vadd.f32 %v1253, %v1452
    %v1454 = vpop.f32.mrb[0].mxu0
    %1455 = vmatprep.mubr.bf16.mxu0 0
    %1456 = vmatmul.mubr.bf16.gmra.mrb[0].mxu0 %v1231
    %v1457 = vpop.f32.mrb[0].mxu0
    %v1458 = vadd.f32 %v1253, %v1457
    %v1459 = vpop.f32.mrb[0].mxu0
    %v1460 = vpop.f32.mrb[0].mxu0
    %v1461 = vadd.f32 %v1253, %v1460
    %v1462 = vpop.f32.mrb[0].mxu0
    %1463 = vdwg.mxu0
    %1464 = vmax.xlane.f32.xlu0 %v1338
    %v1465 = vpop.xlane.xlu0 %1464
    %1466 = vmax.xlane.f32.xlu0 %v1341
    %v1467 = vpop.xlane.xlu0 %1466
    %1468 = vmax.xlane.f32.xlu0 %v1346
    %v1469 = vpop.xlane.xlu0 %1468
    %1470 = vmax.xlane.f32.xlu0 %v1349
    %v1471 = vpop.xlane.xlu0 %1470
    %1472 = vmax.xlane.f32.xlu0 %v1354
    %v1473 = vpop.xlane.xlu0 %1472
    %1474 = vmax.xlane.f32.xlu0 %v1357
    %v1475 = vpop.xlane.xlu0 %1474
    %1476 = vmax.xlane.f32.xlu0 %v1362
    %v1477 = vpop.xlane.xlu0 %1476
    %1478 = vmax.xlane.f32.xlu0 %v1365
    %v1479 = vpop.xlane.xlu0 %1478
    %1480 = vmax.xlane.f32.xlu0 %v1370
    %v1481 = vpop.xlane.xlu0 %1480
    %1482 = vmax.xlane.f32.xlu0 %v1373
    %v1483 = vpop.xlane.xlu0 %1482
    %1484 = vmax.xlane.f32.xlu0 %v1378
    %v1485 = vpop.xlane.xlu0 %1484
    %1486 = vmax.xlane.f32.xlu0 %v1381
    %v1487 = vpop.xlane.xlu0 %1486
    %1488 = vmax.xlane.f32.xlu0 %v1386
    %v1489 = vpop.xlane.xlu0 %1488
    %1490 = vmax.xlane.f32.xlu0 %v1389
    %v1491 = vpop.xlane.xlu0 %1490
    %1492 = vmax.xlane.f32.xlu0 %v1394
    %v1493 = vpop.xlane.xlu0 %1492
    %1494 = vmax.xlane.f32.xlu0 %v1397
    %v1495 = vpop.xlane.xlu0 %1494
    %1496 = vmax.xlane.f32.xlu0 %v1402
    %v1497 = vpop.xlane.xlu0 %1496
    %1498 = vmax.xlane.f32.xlu0 %v1405
    %v1499 = vpop.xlane.xlu0 %1498
    %1500 = vmax.xlane.f32.xlu0 %v1410
    %v1501 = vpop.xlane.xlu0 %1500
    %1502 = vmax.xlane.f32.xlu0 %v1413
    %v1503 = vpop.xlane.xlu0 %1502
    %1504 = vmax.xlane.f32.xlu0 %v1418
    %v1505 = vpop.xlane.xlu0 %1504
    %1506 = vmax.xlane.f32.xlu0 %v1421
    %v1507 = vpop.xlane.xlu0 %1506
    %1508 = vmax.xlane.f32.xlu0 %v1426
    %v1509 = vpop.xlane.xlu0 %1508
    %1510 = vmax.xlane.f32.xlu0 %v1429
    %v1511 = vpop.xlane.xlu0 %1510
    %1512 = vmax.xlane.f32.xlu0 %v1434
    %v1513 = vpop.xlane.xlu0 %1512
    %1514 = vmax.xlane.f32.xlu0 %v1437
    %v1515 = vpop.xlane.xlu0 %1514
    %1516 = vmax.xlane.f32.xlu0 %v1442
    %v1517 = vpop.xlane.xlu0 %1516
    %1518 = vmax.xlane.f32.xlu0 %v1445
    %v1519 = vpop.xlane.xlu0 %1518
    %1520 = vmax.xlane.f32.xlu0 %v1450
    %v1521 = vpop.xlane.xlu0 %1520
    %1522 = vmax.xlane.f32.xlu0 %v1453
    %v1523 = vpop.xlane.xlu0 %1522
    %1524 = vmax.xlane.f32.xlu0 %v1458
    %v1525 = vpop.xlane.xlu0 %1524
    %1526 = vmax.xlane.f32.xlu0 %v1461
    %v1527 = vpop.xlane.xlu0 %1526
    %v1528 = vsub.f32 %v1338, %v1465
    %v1529 = vsub.f32 %v1341, %v1467
    %v1530 = vsub.f32 %v1346, %v1469
    %v1531 = vsub.f32 %v1349, %v1471
    %v1532 = vsub.f32 %v1354, %v1473
    %v1533 = vsub.f32 %v1357, %v1475
    %v1534 = vsub.f32 %v1362, %v1477
    %v1535 = vsub.f32 %v1365, %v1479
    %v1536 = vsub.f32 %v1370, %v1481
    %v1537 = vsub.f32 %v1373, %v1483
    %v1538 = vsub.f32 %v1378, %v1485
    %v1539 = vsub.f32 %v1381, %v1487
    %v1540 = vsub.f32 %v1386, %v1489
    %v1541 = vsub.f32 %v1389, %v1491
    %v1542 = vsub.f32 %v1394, %v1493
    %v1543 = vsub.f32 %v1397, %v1495
    %v1544 = vsub.f32 %v1402, %v1497
    %v1545 = vsub.f32 %v1405, %v1499
    %v1546 = vsub.f32 %v1410, %v1501
    %v1547 = vsub.f32 %v1413, %v1503
    %v1548 = vsub.f32 %v1418, %v1505
    %v1549 = vsub.f32 %v1421, %v1507
    %v1550 = vsub.f32 %v1426, %v1509
    %v1551 = vsub.f32 %v1429, %v1511
    %v1552 = vsub.f32 %v1434, %v1513
    %v1553 = vsub.f32 %v1437, %v1515
    %v1554 = vsub.f32 %v1442, %v1517
    %v1555 = vsub.f32 %v1445, %v1519
    %v1556 = vsub.f32 %v1450, %v1521
    %v1557 = vsub.f32 %v1453, %v1523
    %v1558 = vsub.f32 %v1458, %v1525
    %v1559 = vsub.f32 %v1461, %v1527
    %v1560 = vmul.f32 %v1528, 1.442695
    %v1561 = vpow.pop %v1560
    %v1562 = vmul.f32 %v1529, 1.442695
    %v1563 = vpow.pop %v1562
    %v1564 = vmul.f32 %v1530, 1.442695
    %v1565 = vpow.pop %v1564
    %v1566 = vmul.f32 %v1531, 1.442695
    %v1567 = vpow.pop %v1566
    %v1568 = vmul.f32 %v1532, 1.442695
    %v1569 = vpow.pop %v1568
    %v1570 = vmul.f32 %v1533, 1.442695
    %v1571 = vpow.pop %v1570
    %v1572 = vmul.f32 %v1534, 1.442695
    %v1573 = vpow.pop %v1572
    %v1574 = vmul.f32 %v1535, 1.442695
    %v1575 = vpow.pop %v1574
    %v1576 = vmul.f32 %v1536, 1.442695
    %v1577 = vpow.pop %v1576
    %v1578 = vmul.f32 %v1537, 1.442695
    %v1579 = vpow.pop %v1578
    %v1580 = vmul.f32 %v1538, 1.442695
    %v1581 = vpow.pop %v1580
    %v1582 = vmul.f32 %v1539, 1.442695
    %v1583 = vpow.pop %v1582
    %v1584 = vmul.f32 %v1540, 1.442695
    %v1585 = vpow.pop %v1584
    %v1586 = vmul.f32 %v1541, 1.442695
    %v1587 = vpow.pop %v1586
    %v1588 = vmul.f32 %v1542, 1.442695
    %v1589 = vpow.pop %v1588
    %v1590 = vmul.f32 %v1543, 1.442695
    %v1591 = vpow.pop %v1590
    %v1592 = vmul.f32 %v1544, 1.442695
    %v1593 = vpow.pop %v1592
    %v1594 = vmul.f32 %v1545, 1.442695
    %v1595 = vpow.pop %v1594
    %v1596 = vmul.f32 %v1546, 1.442695
    %v1597 = vpow.pop %v1596
    %v1598 = vmul.f32 %v1547, 1.442695
    %v1599 = vpow.pop %v1598
    %v1600 = vmul.f32 %v1548, 1.442695
    %v1601 = vpow.pop %v1600
    %v1602 = vmul.f32 %v1549, 1.442695
    %v1603 = vpow.pop %v1602
    %v1604 = vmul.f32 %v1550, 1.442695
    %v1605 = vpow.pop %v1604
    %v1606 = vmul.f32 %v1551, 1.442695
    %v1607 = vpow.pop %v1606
    %v1608 = vmul.f32 %v1552, 1.442695
    %v1609 = vpow.pop %v1608
    %v1610 = vmul.f32 %v1553, 1.442695
    %v1611 = vpow.pop %v1610
    %v1612 = vmul.f32 %v1554, 1.442695
    %v1613 = vpow.pop %v1612
    %v1614 = vmul.f32 %v1555, 1.442695
    %v1615 = vpow.pop %v1614
    %v1616 = vmul.f32 %v1556, 1.442695
    %v1617 = vpow.pop %v1616
    %v1618 = vmul.f32 %v1557, 1.442695
    %v1619 = vpow.pop %v1618
    %v1620 = vmul.f32 %v1558, 1.442695
    %v1621 = vpow.pop %v1620
    %v1622 = vmul.f32 %v1559, 1.442695
    %v1623 = vpow.pop %v1622
    %1624 = vadd.xlane.f32.xlu0 %v1561
    %v1625 = vpop.xlane.xlu0 %1624
    %1626 = vadd.xlane.f32.xlu0 %v1563
    %v1627 = vpop.xlane.xlu0 %1626
    %1628 = vadd.xlane.f32.xlu0 %v1565
    %v1629 = vpop.xlane.xlu0 %1628
    %1630 = vadd.xlane.f32.xlu0 %v1567
    %v1631 = vpop.xlane.xlu0 %1630
    %1632 = vadd.xlane.f32.xlu0 %v1569
    %v1633 = vpop.xlane.xlu0 %1632
    %1634 = vadd.xlane.f32.xlu0 %v1571
    %v1635 = vpop.xlane.xlu0 %1634
    %1636 = vadd.xlane.f32.xlu0 %v1573
    %v1637 = vpop.xlane.xlu0 %1636
    %1638 = vadd.xlane.f32.xlu0 %v1575
    %v1639 = vpop.xlane.xlu0 %1638
    %1640 = vadd.xlane.f32.xlu0 %v1577
    %v1641 = vpop.xlane.xlu0 %1640
    %1642 = vadd.xlane.f32.xlu0 %v1579
    %v1643 = vpop.xlane.xlu0 %1642
    %1644 = vadd.xlane.f32.xlu0 %v1581
    %v1645 = vpop.xlane.xlu0 %1644
    %1646 = vadd.xlane.f32.xlu0 %v1583
    %v1647 = vpop.xlane.xlu0 %1646
    %1648 = vadd.xlane.f32.xlu0 %v1585
    %v1649 = vpop.xlane.xlu0 %1648
    %1650 = vadd.xlane.f32.xlu0 %v1587
    %v1651 = vpop.xlane.xlu0 %1650
    %1652 = vadd.xlane.f32.xlu0 %v1589
    %v1653 = vpop.xlane.xlu0 %1652
    %1654 = vadd.xlane.f32.xlu0 %v1591
    %v1655 = vpop.xlane.xlu0 %1654
    %1656 = vadd.xlane.f32.xlu0 %v1593
    %v1657 = vpop.xlane.xlu0 %1656
    %1658 = vadd.xlane.f32.xlu0 %v1595
    %v1659 = vpop.xlane.xlu0 %1658
    %1660 = vadd.xlane.f32.xlu0 %v1597
    %v1661 = vpop.xlane.xlu0 %1660
    %1662 = vadd.xlane.f32.xlu0 %v1599
    %v1663 = vpop.xlane.xlu0 %1662
    %1664 = vadd.xlane.f32.xlu0 %v1601
    %v1665 = vpop.xlane.xlu0 %1664
    %1666 = vadd.xlane.f32.xlu0 %v1603
    %v1667 = vpop.xlane.xlu0 %1666
    %1668 = vadd.xlane.f32.xlu0 %v1605
    %v1669 = vpop.xlane.xlu0 %1668
    %1670 = vadd.xlane.f32.xlu0 %v1607
    %v1671 = vpop.xlane.xlu0 %1670
    %1672 = vadd.xlane.f32.xlu0 %v1609
    %v1673 = vpop.xlane.xlu0 %1672
    %1674 = vadd.xlane.f32.xlu0 %v1611
    %v1675 = vpop.xlane.xlu0 %1674
    %1676 = vadd.xlane.f32.xlu0 %v1613
    %v1677 = vpop.xlane.xlu0 %1676
    %1678 = vadd.xlane.f32.xlu0 %v1615
    %v1679 = vpop.xlane.xlu0 %1678
    %1680 = vadd.xlane.f32.xlu0 %v1617
    %v1681 = vpop.xlane.xlu0 %1680
    %1682 = vadd.xlane.f32.xlu0 %v1619
    %v1683 = vpop.xlane.xlu0 %1682
    %1684 = vadd.xlane.f32.xlu0 %v1621
    %v1685 = vpop.xlane.xlu0 %1684
    %1686 = vadd.xlane.f32.xlu0 %v1623
    %v1687 = vpop.xlane.xlu0 %1686
    %v1688 = vlog2.pop %v1625
    %v1689 = vmul.f32 %v1688, 0.6931472
    %v1690 = vlog2.pop %v1627
    %v1691 = vmul.f32 %v1690, 0.6931472
    %v1692 = vlog2.pop %v1629
    %v1693 = vmul.f32 %v1692, 0.6931472
    %v1694 = vlog2.pop %v1631
    %v1695 = vmul.f32 %v1694, 0.6931472
    %v1696 = vlog2.pop %v1633
    %v1697 = vmul.f32 %v1696, 0.6931472
    %v1698 = vlog2.pop %v1635
    %v1699 = vmul.f32 %v1698, 0.6931472
    %v1700 = vlog2.pop %v1637
    %v1701 = vmul.f32 %v1700, 0.6931472
    %v1702 = vlog2.pop %v1639
    %v1703 = vmul.f32 %v1702, 0.6931472
    %v1704 = vlog2.pop %v1641
    %v1705 = vmul.f32 %v1704, 0.6931472
    %v1706 = vlog2.pop %v1643
    %v1707 = vmul.f32 %v1706, 0.6931472
    %v1708 = vlog2.pop %v1645
    %v1709 = vmul.f32 %v1708, 0.6931472
    %v1710 = vlog2.pop %v1647
    %v1711 = vmul.f32 %v1710, 0.6931472
    %v1712 = vlog2.pop %v1649
    %v1713 = vmul.f32 %v1712, 0.6931472
    %v1714 = vlog2.pop %v1651
    %v1715 = vmul.f32 %v1714, 0.6931472
    %v1716 = vlog2.pop %v1653
    %v1717 = vmul.f32 %v1716, 0.6931472
    %v1718 = vlog2.pop %v1655
    %v1719 = vmul.f32 %v1718, 0.6931472
    %v1720 = vlog2.pop %v1657
    %v1721 = vmul.f32 %v1720, 0.6931472
    %v1722 = vlog2.pop %v1659
    %v1723 = vmul.f32 %v1722, 0.6931472
    %v1724 = vlog2.pop %v1661
    %v1725 = vmul.f32 %v1724, 0.6931472
    %v1726 = vlog2.pop %v1663
    %v1727 = vmul.f32 %v1726, 0.6931472
    %v1728 = vlog2.pop %v1665
    %v1729 = vmul.f32 %v1728, 0.6931472
    %v1730 = vlog2.pop %v1667
    %v1731 = vmul.f32 %v1730, 0.6931472
    %v1732 = vlog2.pop %v1669
    %v1733 = vmul.f32 %v1732, 0.6931472
    %v1734 = vlog2.pop %v1671
    %v1735 = vmul.f32 %v1734, 0.6931472
    %v1736 = vlog2.pop %v1673
    %v1737 = vmul.f32 %v1736, 0.6931472
    %v1738 = vlog2.pop %v1675
    %v1739 = vmul.f32 %v1738, 0.6931472
    %v1740 = vlog2.pop %v1677
    %v1741 = vmul.f32 %v1740, 0.6931472
    %v1742 = vlog2.pop %v1679
    %v1743 = vmul.f32 %v1742, 0.6931472
    %v1744 = vlog2.pop %v1681
    %v1745 = vmul.f32 %v1744, 0.6931472
    %v1746 = vlog2.pop %v1683
    %v1747 = vmul.f32 %v1746, 0.6931472
    %v1748 = vlog2.pop %v1685
    %v1749 = vmul.f32 %v1748, 0.6931472
    %v1750 = vlog2.pop %v1687
    %v1751 = vmul.f32 %v1750, 0.6931472
    %v1752 = vsub.f32 %v1528, %v1689
    %v1753 = vsub.f32 %v1529, %v1691
    %v1754 = vsub.f32 %v1530, %v1693
    %v1755 = vsub.f32 %v1531, %v1695
    %v1756 = vsub.f32 %v1532, %v1697
    %v1757 = vsub.f32 %v1533, %v1699
    %v1758 = vsub.f32 %v1534, %v1701
    %v1759 = vsub.f32 %v1535, %v1703
    %v1760 = vsub.f32 %v1536, %v1705
    %v1761 = vsub.f32 %v1537, %v1707
    %v1762 = vsub.f32 %v1538, %v1709
    %v1763 = vsub.f32 %v1539, %v1711
    %v1764 = vsub.f32 %v1540, %v1713
    %v1765 = vsub.f32 %v1541, %v1715
    %v1766 = vsub.f32 %v1542, %v1717
    %v1767 = vsub.f32 %v1543, %v1719
    %v1768 = vsub.f32 %v1544, %v1721
    %v1769 = vsub.f32 %v1545, %v1723
    %v1770 = vsub.f32 %v1546, %v1725
    %v1771 = vsub.f32 %v1547, %v1727
    %v1772 = vsub.f32 %v1548, %v1729
    %v1773 = vsub.f32 %v1549, %v1731
    %v1774 = vsub.f32 %v1550, %v1733
    %v1775 = vsub.f32 %v1551, %v1735
    %v1776 = vsub.f32 %v1552, %v1737
    %v1777 = vsub.f32 %v1553, %v1739
    %v1778 = vsub.f32 %v1554, %v1741
    %v1779 = vsub.f32 %v1555, %v1743
    %v1780 = vsub.f32 %v1556, %v1745
    %v1781 = vsub.f32 %v1557, %v1747
    %v1782 = vsub.f32 %v1558, %v1749
    %v1783 = vsub.f32 %v1559, %v1751
    %1784 = vst [vmem:[#allocation2] sm:$0xff] %v1752
    %1785 = vst [vmem:[#allocation2 + $0x8] sm:$0xff] %v1753
    %1786 = vst [vmem:[#allocation2 + $0x10] sm:$0xff] %v1754
    %1787 = vst [vmem:[#allocation2 + $0x18] sm:$0xff] %v1755
    %1788 = vst [vmem:[#allocation2 + $0x20] sm:$0xff] %v1756
    %1789 = vst [vmem:[#allocation2 + $0x28] sm:$0xff] %v1757
    %1790 = vst [vmem:[#allocation2 + $0x30] sm:$0xff] %v1758
    %1791 = vst [vmem:[#allocation2 + $0x38] sm:$0xff] %v1759
    %1792 = vst [vmem:[#allocation2 + $0x40] sm:$0xff] %v1760
    %1793 = vst [vmem:[#allocation2 + $0x48] sm:$0xff] %v1761
    %1794 = vst [vmem:[#allocation2 + $0x50] sm:$0xff] %v1762
    %1795 = vst [vmem:[#allocation2 + $0x58] sm:$0xff] %v1763
    %1796 = vst [vmem:[#allocation2 + $0x60] sm:$0xff] %v1764
    %1797 = vst [vmem:[#allocation2 + $0x68] sm:$0xff] %v1765
    %1798 = vst [vmem:[#allocation2 + $0x70] sm:$0xff] %v1766
    %1799 = vst [vmem:[#allocation2 + $0x78] sm:$0xff] %v1767
    %1800 = vst [vmem:[#allocation2 + $0x80] sm:$0xff] %v1768
    %1801 = vst [vmem:[#allocation2 + $0x88] sm:$0xff] %v1769
    %1802 = vst [vmem:[#allocation2 + $0x90] sm:$0xff] %v1770
    %1803 = vst [vmem:[#allocation2 + $0x98] sm:$0xff] %v1771
    %1804 = vst [vmem:[#allocation2 + $0xa0] sm:$0xff] %v1772
    %1805 = vst [vmem:[#allocation2 + $0xa8] sm:$0xff] %v1773
    %1806 = vst [vmem:[#allocation2 + $0xb0] sm:$0xff] %v1774
    %1807 = vst [vmem:[#allocation2 + $0xb8] sm:$0xff] %v1775
    %1808 = vst [vmem:[#allocation2 + $0xc0] sm:$0xff] %v1776
    %1809 = vst [vmem:[#allocation2 + $0xc8] sm:$0xff] %v1777
    %1810 = vst [vmem:[#allocation2 + $0xd0] sm:$0xff] %v1778
    %1811 = vst [vmem:[#allocation2 + $0xd8] sm:$0xff] %v1779
    %1812 = vst [vmem:[#allocation2 + $0xe0] sm:$0xff] %v1780
    %1813 = vst [vmem:[#allocation2 + $0xe8] sm:$0xff] %v1781
    %1814 = vst [vmem:[#allocation2 + $0xf0] sm:$0xff] %v1782
    %1815 = vst [vmem:[#allocation2 + $0xf8] sm:$0xff] %v1783
    // Predicated region
    $region22: #{tpu_custom_call.1} parent=1 // pred_check
      _
    $region23: #{tpu_custom_call.1} parent=1 // pred_check_branch
      %1817 = sbr.rel (0) target = $region25
    $region24: #{tpu_custom_call.1} parent=1 // pred_region
      %s1819 = ssub.s32 4096, 4096
      %1820 = vsyncadd [#allocation3], %s1819
      %s1821 = sshll.u32 [#allocation2], 4
      %s1822 = int_to_ptr.vmem [resolvable:$true] %s1821
      %1827 = dma.vmem_to_hbm [thread:$0]  %s1822, 4096, %s5, [#allocation3], 128, 128, 8
    $region25: #{tpu_custom_call.1} parent=1 // pred_fallthru
      _
    // Predicated region
    $region26: #{tpu_custom_call.1} parent=1 // pred_check
      _
    $region27: #{tpu_custom_call.1} parent=1 // pred_check_branch
      %1829 = sbr.rel (0) target = $region29
    $region28: #{tpu_custom_call.1} parent=1 // pred_region
      %1830 = dma.done [#allocation3], 4096
    $region29: #{tpu_custom_call.1} parent=1 // pred_fallthru
      _
    %1831 = vsyncpa [#allocation3], 1

// kernel: tpu_custom_call.1
$region0: #{tpu_custom_call.1}
  #allocation0 [shape = 'u32[]', space=smem, size = 0x4, offset = 0x4, fixed_abs, tag = 'smem constant byte address 0x4 - core index']
  #allocation1 [shape = 'u32[144,128]{1,0:T(1,128)}', space=vmem, size = 0x12000, scoped, tag = 'internal scratch']
  %s0 = inlined_call_operand.vmem [shape: s32[256,4], index: 0, kind: input, shape index: {}]
  %s1 = inlined_call_operand.vmem [shape: bf16[128,128], index: 1, kind: input, shape index: {}]
  %s2 = inlined_call_operand.vmem [shape: f32[1,128], index: 2, kind: input, shape index: {}]
  %s3 = inlined_call_operand.vmem [shape: bf16[128,128], index: 3, kind: input, shape index: {}]
  %s4 = inlined_call_operand.vmem [shape: f32[1,128], index: 4, kind: input, shape index: {}]
  %s5 = inlined_call_operand.hbm [shape: f32[256,128], index: 5, kind: output, shape index: {}]
  %s6 = sld [smem:[#allocation0]]
  $region30: #{tpu_custom_call.1} parent=0
    _
  %s8 = ssub.s32 1, %s6
  %s9 = scalar_select 0, %s8, %s6
  $region1: #{tpu_custom_call.1} parent=0
    #allocation2 [shape = 'u8[131072]{0}', space=vmem, size = 0x20000, scoped, tag = 'output window, operand 0, single buffered']
    #allocation3 [shape = 's32[1]{0}', space=sflag, size = 0x4, scoped, tag = 'scoped memory for tpu_custom_call.1']
    %10 = vsyncpa [#allocation3], 0
    // Predicated region
    $region2: #{tpu_custom_call.1} parent=1 // pred_check
      _
    $region3: #{tpu_custom_call.1} parent=1 // pred_check_branch
      %12 = sbr.rel (0) target = $region5
    $region4: #{tpu_custom_call.1} parent=1 // pred_region
      _
    $region5: #{tpu_custom_call.1} parent=1 // pred_fallthru
      _
    // Predicated region
    $region6: #{tpu_custom_call.1} parent=1 // pred_check
      _
    $region7: #{tpu_custom_call.1} parent=1 // pred_check_branch
      %14 = sbr.rel (0) target = $region9
    $region8: #{tpu_custom_call.1} parent=1 // pred_region
      _
    $region9: #{tpu_custom_call.1} parent=1 // pred_fallthru
      _
    // Predicated region
    $region10: #{tpu_custom_call.1} parent=1 // pred_check
      _
    $region11: #{tpu_custom_call.1} parent=1 // pred_check_branch
      %16 = sbr.rel (0) target = $region13
    $region12: #{tpu_custom_call.1} parent=1 // pred_region
      _
    $region13: #{tpu_custom_call.1} parent=1 // pred_fallthru
      _
    // Predicated region
    $region14: #{tpu_custom_call.1} parent=1 // pred_check
      _
    $region15: #{tpu_custom_call.1} parent=1 // pred_check_branch
      %18 = sbr.rel (0) target = $region17
    $region16: #{tpu_custom_call.1} parent=1 // pred_region
      _
    $region17: #{tpu_custom_call.1} parent=1 // pred_fallthru
      _
    // Predicated region
    $region18: #{tpu_custom_call.1} parent=1 // pred_check
      _
    $region19: #{tpu_custom_call.1} parent=1 // pred_check_branch
      %20 = sbr.rel (0) target = $region21
    $region20: #{tpu_custom_call.1} parent=1 // pred_region
      _
    $region21: #{tpu_custom_call.1} parent=1 // pred_fallthru
      _
    %v22 = vld [vmem:[%s0] sm:$0xff]
    %v23 = vld [vmem:[%s0 + $0x8] sm:$0xff]
    %v24 = vld [vmem:[%s0 + $0x10] sm:$0xff]
    %v25 = vld [vmem:[%s0 + $0x18] sm:$0xff]
    %v26 = vld [vmem:[%s0 + $0x20] sm:$0xff]
    %v27 = vld [vmem:[%s0 + $0x28] sm:$0xff]
    %v28 = vld [vmem:[%s0 + $0x30] sm:$0xff]
    %v29 = vld [vmem:[%s0 + $0x38] sm:$0xff]
    %v30 = vld [vmem:[%s0 + $0x40] sm:$0xff]
    %v31 = vld [vmem:[%s0 + $0x48] sm:$0xff]
    %v32 = vld [vmem:[%s0 + $0x50] sm:$0xff]
    %v33 = vld [vmem:[%s0 + $0x58] sm:$0xff]
    %v34 = vld [vmem:[%s0 + $0x60] sm:$0xff]
    %v35 = vld [vmem:[%s0 + $0x68] sm:$0xff]
    %v36 = vld [vmem:[%s0 + $0x70] sm:$0xff]
    %v37 = vld [vmem:[%s0 + $0x78] sm:$0xff]
    %v38 = vld [vmem:[%s0 + $0x80] sm:$0xff]
    %v39 = vld [vmem:[%s0 + $0x88] sm:$0xff]
    %v40 = vld [vmem:[%s0 + $0x90] sm:$0xff]
    %v41 = vld [vmem:[%s0 + $0x98] sm:$0xff]
    %v42 = vld [vmem:[%s0 + $0xa0] sm:$0xff]
    %v43 = vld [vmem:[%s0 + $0xa8] sm:$0xff]
    %v44 = vld [vmem:[%s0 + $0xb0] sm:$0xff]
    %v45 = vld [vmem:[%s0 + $0xb8] sm:$0xff]
    %v46 = vld [vmem:[%s0 + $0xc0] sm:$0xff]
    %v47 = vld [vmem:[%s0 + $0xc8] sm:$0xff]
    %v48 = vld [vmem:[%s0 + $0xd0] sm:$0xff]
    %v49 = vld [vmem:[%s0 + $0xd8] sm:$0xff]
    %v50 = vld [vmem:[%s0 + $0xe0] sm:$0xff]
    %v51 = vld [vmem:[%s0 + $0xe8] sm:$0xff]
    %v52 = vld [vmem:[%s0 + $0xf0] sm:$0xff]
    %v53 = vld [vmem:[%s0 + $0xf8] sm:$0xff]
    %v54 = vlaneseq
    %v55 = vand.u32 %v54, 127
    %56 = vset.pattern.permute.xlu0 0
    %57 = vperm.xlu0 %56, %v22
    %v58 = vpop.permute.xlu0 %57
    %59 = vset.pattern.permute.xlu0 0
    %60 = vperm.xlu0 %59, %v23
    %v61 = vpop.permute.xlu0 %60
    %62 = vset.pattern.permute.xlu0 0
    %63 = vperm.xlu0 %62, %v24
    %v64 = vpop.permute.xlu0 %63
    %65 = vset.pattern.permute.xlu0 0
    %66 = vperm.xlu0 %65, %v25
    %v67 = vpop.permute.xlu0 %66
    %68 = vset.pattern.permute.xlu0 0
    %69 = vperm.xlu0 %68, %v26
    %v70 = vpop.permute.xlu0 %69
    %71 = vset.pattern.permute.xlu0 0
    %72 = vperm.xlu0 %71, %v27
    %v73 = vpop.permute.xlu0 %72
    %74 = vset.pattern.permute.xlu0 0
    %75 = vperm.xlu0 %74, %v28
    %v76 = vpop.permute.xlu0 %75
    %77 = vset.pattern.permute.xlu0 0
    %78 = vperm.xlu0 %77, %v29
    %v79 = vpop.permute.xlu0 %78
    %80 = vset.pattern.permute.xlu0 0
    %81 = vperm.xlu0 %80, %v30
    %v82 = vpop.permute.xlu0 %81
    %83 = vset.pattern.permute.xlu0 0
    %84 = vperm.xlu0 %83, %v31
    %v85 = vpop.permute.xlu0 %84
    %86 = vset.pattern.permute.xlu0 0
    %87 = vperm.xlu0 %86, %v32
    %v88 = vpop.permute.xlu0 %87
    %89 = vset.pattern.permute.xlu0 0
    %90 = vperm.xlu0 %89, %v33
    %v91 = vpop.permute.xlu0 %90
    %92 = vset.pattern.permute.xlu0 0
    %93 = vperm.xlu0 %92, %v34
    %v94 = vpop.permute.xlu0 %93
    %95 = vset.pattern.permute.xlu0 0
    %96 = vperm.xlu0 %95, %v35
    %v97 = vpop.permute.xlu0 %96
    %98 = vset.pattern.permute.xlu0 0
    %99 = vperm.xlu0 %98, %v36
    %v100 = vpop.permute.xlu0 %99
    %101 = vset.pattern.permute.xlu0 0
    %102 = vperm.xlu0 %101, %v37
    %v103 = vpop.permute.xlu0 %102
    %104 = vset.pattern.permute.xlu0 0
    %105 = vperm.xlu0 %104, %v38
    %v106 = vpop.permute.xlu0 %105
    %107 = vset.pattern.permute.xlu0 0
    %108 = vperm.xlu0 %107, %v39
    %v109 = vpop.permute.xlu0 %108
    %110 = vset.pattern.permute.xlu0 0
    %111 = vperm.xlu0 %110, %v40
    %v112 = vpop.permute.xlu0 %111
    %113 = vset.pattern.permute.xlu0 0
    %114 = vperm.xlu0 %113, %v41
    %v115 = vpop.permute.xlu0 %114
    %116 = vset.pattern.permute.xlu0 0
    %117 = vperm.xlu0 %116, %v42
    %v118 = vpop.permute.xlu0 %117
    %119 = vset.pattern.permute.xlu0 0
    %120 = vperm.xlu0 %119, %v43
    %v121 = vpop.permute.xlu0 %120
    %122 = vset.pattern.permute.xlu0 0
    %123 = vperm.xlu0 %122, %v44
    %v124 = vpop.permute.xlu0 %123
    %125 = vset.pattern.permute.xlu0 0
    %126 = vperm.xlu0 %125, %v45
    %v127 = vpop.permute.xlu0 %126
    %128 = vset.pattern.permute.xlu0 0
    %129 = vperm.xlu0 %128, %v46
    %v130 = vpop.permute.xlu0 %129
    %131 = vset.pattern.permute.xlu0 0
    %132 = vperm.xlu0 %131, %v47
    %v133 = vpop.permute.xlu0 %132
    %134 = vset.pattern.permute.xlu0 0
    %135 = vperm.xlu0 %134, %v48
    %v136 = vpop.permute.xlu0 %135
    %137 = vset.pattern.permute.xlu0 0
    %138 = vperm.xlu0 %137, %v49
    %v139 = vpop.permute.xlu0 %138
    %140 = vset.pattern.permute.xlu0 0
    %141 = vperm.xlu0 %140, %v50
    %v142 = vpop.permute.xlu0 %141
    %143 = vset.pattern.permute.xlu0 0
    %144 = vperm.xlu0 %143, %v51
    %v145 = vpop.permute.xlu0 %144
    %146 = vset.pattern.permute.xlu0 0
    %147 = vperm.xlu0 %146, %v52
    %v148 = vpop.permute.xlu0 %147
    %149 = vset.pattern.permute.xlu0 0
    %150 = vperm.xlu0 %149, %v53
    %v151 = vpop.permute.xlu0 %150
    %vm152 = vcmp.eq.s32.totalorder %v55, %v58
    %vm153 = vcmp.eq.s32.totalorder %v55, %v61
    %vm154 = vcmp.eq.s32.totalorder %v55, %v64
    %vm155 = vcmp.eq.s32.totalorder %v55, %v67
    %vm156 = vcmp.eq.s32.totalorder %v55, %v70
    %vm157 = vcmp.eq.s32.totalorder %v55, %v73
    %vm158 = vcmp.eq.s32.totalorder %v55, %v76
    %vm159 = vcmp.eq.s32.totalorder %v55, %v79
    %vm160 = vcmp.eq.s32.totalorder %v55, %v82
    %vm161 = vcmp.eq.s32.totalorder %v55, %v85
    %vm162 = vcmp.eq.s32.totalorder %v55, %v88
    %vm163 = vcmp.eq.s32.totalorder %v55, %v91
    %vm164 = vcmp.eq.s32.totalorder %v55, %v94
    %vm165 = vcmp.eq.s32.totalorder %v55, %v97
    %vm166 = vcmp.eq.s32.totalorder %v55, %v100
    %vm167 = vcmp.eq.s32.totalorder %v55, %v103
    %vm168 = vcmp.eq.s32.totalorder %v55, %v106
    %vm169 = vcmp.eq.s32.totalorder %v55, %v109
    %vm170 = vcmp.eq.s32.totalorder %v55, %v112
    %vm171 = vcmp.eq.s32.totalorder %v55, %v115
    %vm172 = vcmp.eq.s32.totalorder %v55, %v118
    %vm173 = vcmp.eq.s32.totalorder %v55, %v121
    %vm174 = vcmp.eq.s32.totalorder %v55, %v124
    %vm175 = vcmp.eq.s32.totalorder %v55, %v127
    %vm176 = vcmp.eq.s32.totalorder %v55, %v130
    %vm177 = vcmp.eq.s32.totalorder %v55, %v133
    %vm178 = vcmp.eq.s32.totalorder %v55, %v136
    %vm179 = vcmp.eq.s32.totalorder %v55, %v139
    %vm180 = vcmp.eq.s32.totalorder %v55, %v142
    %vm181 = vcmp.eq.s32.totalorder %v55, %v145
    %vm182 = vcmp.eq.s32.totalorder %v55, %v148
    %vm183 = vcmp.eq.s32.totalorder %v55, %v151
    %v184 = vsel %vm152, 1, 0
    %v185 = vsel %vm153, 1, 0
    %v186 = vsel %vm154, 1, 0
    %v187 = vsel %vm155, 1, 0
    %v188 = vsel %vm156, 1, 0
    %v189 = vsel %vm157, 1, 0
    %v190 = vsel %vm158, 1, 0
    %v191 = vsel %vm159, 1, 0
    %v192 = vsel %vm160, 1, 0
    %v193 = vsel %vm161, 1, 0
    %v194 = vsel %vm162, 1, 0
    %v195 = vsel %vm163, 1, 0
    %v196 = vsel %vm164, 1, 0
    %v197 = vsel %vm165, 1, 0
    %v198 = vsel %vm166, 1, 0
    %v199 = vsel %vm167, 1, 0
    %v200 = vsel %vm168, 1, 0
    %v201 = vsel %vm169, 1, 0
    %v202 = vsel %vm170, 1, 0
    %v203 = vsel %vm171, 1, 0
    %v204 = vsel %vm172, 1, 0
    %v205 = vsel %vm173, 1, 0
    %v206 = vsel %vm174, 1, 0
    %v207 = vsel %vm175, 1, 0
    %v208 = vsel %vm176, 1, 0
    %v209 = vsel %vm177, 1, 0
    %v210 = vsel %vm178, 1, 0
    %v211 = vsel %vm179, 1, 0
    %v212 = vsel %vm180, 1, 0
    %v213 = vsel %vm181, 1, 0
    %v214 = vsel %vm182, 1, 0
    %v215 = vsel %vm183, 1, 0
    %v216 = vcvt.s32.f32 %v184
    %v217 = vcvt.s32.f32 %v185
    %v218 = vcvt.s32.f32 %v186
    %v219 = vcvt.s32.f32 %v187
    %v220 = vcvt.s32.f32 %v188
    %v221 = vcvt.s32.f32 %v189
    %v222 = vcvt.s32.f32 %v190
    %v223 = vcvt.s32.f32 %v191
    %v224 = vcvt.s32.f32 %v192
    %v225 = vcvt.s32.f32 %v193
    %v226 = vcvt.s32.f32 %v194
    %v227 = vcvt.s32.f32 %v195
    %v228 = vcvt.s32.f32 %v196
    %v229 = vcvt.s32.f32 %v197
    %v230 = vcvt.s32.f32 %v198
    %v231 = vcvt.s32.f32 %v199
    %v232 = vcvt.s32.f32 %v200
    %v233 = vcvt.s32.f32 %v201
    %v234 = vcvt.s32.f32 %v202
    %v235 = vcvt.s32.f32 %v203
    %v236 = vcvt.s32.f32 %v204
    %v237 = vcvt.s32.f32 %v205
    %v238 = vcvt.s32.f32 %v206
    %v239 = vcvt.s32.f32 %v207
    %v240 = vcvt.s32.f32 %v208
    %v241 = vcvt.s32.f32 %v209
    %v242 = vcvt.s32.f32 %v210
    %v243 = vcvt.s32.f32 %v211
    %v244 = vcvt.s32.f32 %v212
    %v245 = vcvt.s32.f32 %v213
    %v246 = vcvt.s32.f32 %v214
    %v247 = vcvt.s32.f32 %v215
    %v248 = vpack.c.bf16 %v217, %v216
    %v249 = vpack.c.bf16 %v219, %v218
    %v250 = vpack.c.bf16 %v221, %v220
    %v251 = vpack.c.bf16 %v223, %v222
    %v252 = vpack.c.bf16 %v225, %v224
    %v253 = vpack.c.bf16 %v227, %v226
    %v254 = vpack.c.bf16 %v229, %v228
    %v255 = vpack.c.bf16 %v231, %v230
    %v256 = vpack.c.bf16 %v233, %v232
    %v257 = vpack.c.bf16 %v235, %v234
    %v258 = vpack.c.bf16 %v237, %v236
    %v259 = vpack.c.bf16 %v239, %v238
    %v260 = vpack.c.bf16 %v241, %v240
    %v261 = vpack.c.bf16 %v243, %v242
    %v262 = vpack.c.bf16 %v245, %v244
    %v263 = vpack.c.bf16 %v247, %v246
    %v264 = vadd.bf16 %v248, 0
    %v265 = vadd.bf16 %v249, 0
    %v266 = vadd.bf16 %v250, 0
    %v267 = vadd.bf16 %v251, 0
    %v268 = vadd.bf16 %v252, 0
    %v269 = vadd.bf16 %v253, 0
    %v270 = vadd.bf16 %v254, 0
    %v271 = vadd.bf16 %v255, 0
    %v272 = vadd.bf16 %v256, 0
    %v273 = vadd.bf16 %v257, 0
    %v274 = vadd.bf16 %v258, 0
    %v275 = vadd.bf16 %v259, 0
    %v276 = vadd.bf16 %v260, 0
    %v277 = vadd.bf16 %v261, 0
    %v278 = vadd.bf16 %v262, 0
    %v279 = vadd.bf16 %v263, 0
    %280 = vset.pattern.permute.xlu0 1
    %281 = vperm.xlu0 %280, %v22
    %v282 = vpop.permute.xlu0 %281
    %283 = vset.pattern.permute.xlu0 1
    %284 = vperm.xlu0 %283, %v23
    %v285 = vpop.permute.xlu0 %284
    %286 = vset.pattern.permute.xlu0 1
    %287 = vperm.xlu0 %286, %v24
    %v288 = vpop.permute.xlu0 %287
    %289 = vset.pattern.permute.xlu0 1
    %290 = vperm.xlu0 %289, %v25
    %v291 = vpop.permute.xlu0 %290
    %292 = vset.pattern.permute.xlu0 1
    %293 = vperm.xlu0 %292, %v26
    %v294 = vpop.permute.xlu0 %293
    %295 = vset.pattern.permute.xlu0 1
    %296 = vperm.xlu0 %295, %v27
    %v297 = vpop.permute.xlu0 %296
    %298 = vset.pattern.permute.xlu0 1
    %299 = vperm.xlu0 %298, %v28
    %v300 = vpop.permute.xlu0 %299
    %301 = vset.pattern.permute.xlu0 1
    %302 = vperm.xlu0 %301, %v29
    %v303 = vpop.permute.xlu0 %302
    %304 = vset.pattern.permute.xlu0 1
    %305 = vperm.xlu0 %304, %v30
    %v306 = vpop.permute.xlu0 %305
    %307 = vset.pattern.permute.xlu0 1
    %308 = vperm.xlu0 %307, %v31
    %v309 = vpop.permute.xlu0 %308
    %310 = vset.pattern.permute.xlu0 1
    %311 = vperm.xlu0 %310, %v32
    %v312 = vpop.permute.xlu0 %311
    %313 = vset.pattern.permute.xlu0 1
    %314 = vperm.xlu0 %313, %v33
    %v315 = vpop.permute.xlu0 %314
    %316 = vset.pattern.permute.xlu0 1
    %317 = vperm.xlu0 %316, %v34
    %v318 = vpop.permute.xlu0 %317
    %319 = vset.pattern.permute.xlu0 1
    %320 = vperm.xlu0 %319, %v35
    %v321 = vpop.permute.xlu0 %320
    %322 = vset.pattern.permute.xlu0 1
    %323 = vperm.xlu0 %322, %v36
    %v324 = vpop.permute.xlu0 %323
    %325 = vset.pattern.permute.xlu0 1
    %326 = vperm.xlu0 %325, %v37
    %v327 = vpop.permute.xlu0 %326
    %328 = vset.pattern.permute.xlu0 1
    %329 = vperm.xlu0 %328, %v38
    %v330 = vpop.permute.xlu0 %329
    %331 = vset.pattern.permute.xlu0 1
    %332 = vperm.xlu0 %331, %v39
    %v333 = vpop.permute.xlu0 %332
    %334 = vset.pattern.permute.xlu0 1
    %335 = vperm.xlu0 %334, %v40
    %v336 = vpop.permute.xlu0 %335
    %337 = vset.pattern.permute.xlu0 1
    %338 = vperm.xlu0 %337, %v41
    %v339 = vpop.permute.xlu0 %338
    %340 = vset.pattern.permute.xlu0 1
    %341 = vperm.xlu0 %340, %v42
    %v342 = vpop.permute.xlu0 %341
    %343 = vset.pattern.permute.xlu0 1
    %344 = vperm.xlu0 %343, %v43
    %v345 = vpop.permute.xlu0 %344
    %346 = vset.pattern.permute.xlu0 1
    %347 = vperm.xlu0 %346, %v44
    %v348 = vpop.permute.xlu0 %347
    %349 = vset.pattern.permute.xlu0 1
    %350 = vperm.xlu0 %349, %v45
    %v351 = vpop.permute.xlu0 %350
    %352 = vset.pattern.permute.xlu0 1
    %353 = vperm.xlu0 %352, %v46
    %v354 = vpop.permute.xlu0 %353
    %355 = vset.pattern.permute.xlu0 1
    %356 = vperm.xlu0 %355, %v47
    %v357 = vpop.permute.xlu0 %356
    %358 = vset.pattern.permute.xlu0 1
    %359 = vperm.xlu0 %358, %v48
    %v360 = vpop.permute.xlu0 %359
    %361 = vset.pattern.permute.xlu0 1
    %362 = vperm.xlu0 %361, %v49
    %v363 = vpop.permute.xlu0 %362
    %364 = vset.pattern.permute.xlu0 1
    %365 = vperm.xlu0 %364, %v50
    %v366 = vpop.permute.xlu0 %365
    %367 = vset.pattern.permute.xlu0 1
    %368 = vperm.xlu0 %367, %v51
    %v369 = vpop.permute.xlu0 %368
    %370 = vset.pattern.permute.xlu0 1
    %371 = vperm.xlu0 %370, %v52
    %v372 = vpop.permute.xlu0 %371
    %373 = vset.pattern.permute.xlu0 1
    %374 = vperm.xlu0 %373, %v53
    %v375 = vpop.permute.xlu0 %374
    %vm376 = vcmp.eq.s32.totalorder %v55, %v282
    %vm377 = vcmp.eq.s32.totalorder %v55, %v285
    %vm378 = vcmp.eq.s32.totalorder %v55, %v288
    %vm379 = vcmp.eq.s32.totalorder %v55, %v291
    %vm380 = vcmp.eq.s32.totalorder %v55, %v294
    %vm381 = vcmp.eq.s32.totalorder %v55, %v297
    %vm382 = vcmp.eq.s32.totalorder %v55, %v300
    %vm383 = vcmp.eq.s32.totalorder %v55, %v303
    %vm384 = vcmp.eq.s32.totalorder %v55, %v306
    %vm385 = vcmp.eq.s32.totalorder %v55, %v309
    %vm386 = vcmp.eq.s32.totalorder %v55, %v312
    %vm387 = vcmp.eq.s32.totalorder %v55, %v315
    %vm388 = vcmp.eq.s32.totalorder %v55, %v318
    %vm389 = vcmp.eq.s32.totalorder %v55, %v321
    %vm390 = vcmp.eq.s32.totalorder %v55, %v324
    %vm391 = vcmp.eq.s32.totalorder %v55, %v327
    %vm392 = vcmp.eq.s32.totalorder %v55, %v330
    %vm393 = vcmp.eq.s32.totalorder %v55, %v333
    %vm394 = vcmp.eq.s32.totalorder %v55, %v336
    %vm395 = vcmp.eq.s32.totalorder %v55, %v339
    %vm396 = vcmp.eq.s32.totalorder %v55, %v342
    %vm397 = vcmp.eq.s32.totalorder %v55, %v345
    %vm398 = vcmp.eq.s32.totalorder %v55, %v348
    %vm399 = vcmp.eq.s32.totalorder %v55, %v351
    %vm400 = vcmp.eq.s32.totalorder %v55, %v354
    %vm401 = vcmp.eq.s32.totalorder %v55, %v357
    %vm402 = vcmp.eq.s32.totalorder %v55, %v360
    %vm403 = vcmp.eq.s32.totalorder %v55, %v363
    %vm404 = vcmp.eq.s32.totalorder %v55, %v366
    %vm405 = vcmp.eq.s32.totalorder %v55, %v369
    %vm406 = vcmp.eq.s32.totalorder %v55, %v372
    %vm407 = vcmp.eq.s32.totalorder %v55, %v375
    %v408 = vsel %vm376, 1, 0
    %v409 = vsel %vm377, 1, 0
    %v410 = vsel %vm378, 1, 0
    %v411 = vsel %vm379, 1, 0
    %v412 = vsel %vm380, 1, 0
    %v413 = vsel %vm381, 1, 0
    %v414 = vsel %vm382, 1, 0
    %v415 = vsel %vm383, 1, 0
    %v416 = vsel %vm384, 1, 0
    %v417 = vsel %vm385, 1, 0
    %v418 = vsel %vm386, 1, 0
    %v419 = vsel %vm387, 1, 0
    %v420 = vsel %vm388, 1, 0
    %v421 = vsel %vm389, 1, 0
    %v422 = vsel %vm390, 1, 0
    %v423 = vsel %vm391, 1, 0
    %v424 = vsel %vm392, 1, 0
    %v425 = vsel %vm393, 1, 0
    %v426 = vsel %vm394, 1, 0
    %v427 = vsel %vm395, 1, 0
    %v428 = vsel %vm396, 1, 0
    %v429 = vsel %vm397, 1, 0
    %v430 = vsel %vm398, 1, 0
    %v431 = vsel %vm399, 1, 0
    %v432 = vsel %vm400, 1, 0
    %v433 = vsel %vm401, 1, 0
    %v434 = vsel %vm402, 1, 0
    %v435 = vsel %vm403, 1, 0
    %v436 = vsel %vm404, 1, 0
    %v437 = vsel %vm405, 1, 0
    %v438 = vsel %vm406, 1, 0
    %v439 = vsel %vm407, 1, 0
    %v440 = vcvt.s32.f32 %v408
    %v441 = vcvt.s32.f32 %v409
    %v442 = vcvt.s32.f32 %v410
    %v443 = vcvt.s32.f32 %v411
    %v444 = vcvt.s32.f32 %v412
    %v445 = vcvt.s32.f32 %v413
    %v446 = vcvt.s32.f32 %v414
    %v447 = vcvt.s32.f32 %v415
    %v448 = vcvt.s32.f32 %v416
    %v449 = vcvt.s32.f32 %v417
    %v450 = vcvt.s32.f32 %v418
    %v451 = vcvt.s32.f32 %v419
    %v452 = vcvt.s32.f32 %v420
    %v453 = vcvt.s32.f32 %v421
    %v454 = vcvt.s32.f32 %v422
    %v455 = vcvt.s32.f32 %v423
    %v456 = vcvt.s32.f32 %v424
    %v457 = vcvt.s32.f32 %v425
    %v458 = vcvt.s32.f32 %v426
    %v459 = vcvt.s32.f32 %v427
    %v460 = vcvt.s32.f32 %v428
    %v461 = vcvt.s32.f32 %v429
    %v462 = vcvt.s32.f32 %v430
    %v463 = vcvt.s32.f32 %v431
    %v464 = vcvt.s32.f32 %v432
    %v465 = vcvt.s32.f32 %v433
    %v466 = vcvt.s32.f32 %v434
    %v467 = vcvt.s32.f32 %v435
    %v468 = vcvt.s32.f32 %v436
    %v469 = vcvt.s32.f32 %v437
    %v470 = vcvt.s32.f32 %v438
    %v471 = vcvt.s32.f32 %v439
    %v472 = vpack.c.bf16 %v441, %v440
    %v473 = vpack.c.bf16 %v443, %v442
    %v474 = vpack.c.bf16 %v445, %v444
    %v475 = vpack.c.bf16 %v447, %v446
    %v476 = vpack.c.bf16 %v449, %v448
    %v477 = vpack.c.bf16 %v451, %v450
    %v478 = vpack.c.bf16 %v453, %v452
    %v479 = vpack.c.bf16 %v455, %v454
    %v480 = vpack.c.bf16 %v457, %v456
    %v481 = vpack.c.bf16 %v459, %v458
    %v482 = vpack.c.bf16 %v461, %v460
    %v483 = vpack.c.bf16 %v463, %v462
    %v484 = vpack.c.bf16 %v465, %v464
    %v485 = vpack.c.bf16 %v467, %v466
    %v486 = vpack.c.bf16 %v469, %v468
    %v487 = vpack.c.bf16 %v471, %v470
    %v488 = vadd.bf16 %v264, %v472
    %v489 = vadd.bf16 %v265, %v473
    %v490 = vadd.bf16 %v266, %v474
    %v491 = vadd.bf16 %v267, %v475
    %v492 = vadd.bf16 %v268, %v476
    %v493 = vadd.bf16 %v269, %v477
    %v494 = vadd.bf16 %v270, %v478
    %v495 = vadd.bf16 %v271, %v479
    %v496 = vadd.bf16 %v272, %v480
    %v497 = vadd.bf16 %v273, %v481
    %v498 = vadd.bf16 %v274, %v482
    %v499 = vadd.bf16 %v275, %v483
    %v500 = vadd.bf16 %v276, %v484
    %v501 = vadd.bf16 %v277, %v485
    %v502 = vadd.bf16 %v278, %v486
    %v503 = vadd.bf16 %v279, %v487
    %504 = vset.pattern.permute.xlu0 2
    %505 = vperm.xlu0 %504, %v22
    %v506 = vpop.permute.xlu0 %505
    %507 = vset.pattern.permute.xlu0 2
    %508 = vperm.xlu0 %507, %v23
    %v509 = vpop.permute.xlu0 %508
    %510 = vset.pattern.permute.xlu0 2
    %511 = vperm.xlu0 %510, %v24
    %v512 = vpop.permute.xlu0 %511
    %513 = vset.pattern.permute.xlu0 2
    %514 = vperm.xlu0 %513, %v25
    %v515 = vpop.permute.xlu0 %514
    %516 = vset.pattern.permute.xlu0 2
    %517 = vperm.xlu0 %516, %v26
    %v518 = vpop.permute.xlu0 %517
    %519 = vset.pattern.permute.xlu0 2
    %520 = vperm.xlu0 %519, %v27
    %v521 = vpop.permute.xlu0 %520
    %522 = vset.pattern.permute.xlu0 2
    %523 = vperm.xlu0 %522, %v28
    %v524 = vpop.permute.xlu0 %523
    %525 = vset.pattern.permute.xlu0 2
    %526 = vperm.xlu0 %525, %v29
    %v527 = vpop.permute.xlu0 %526
    %528 = vset.pattern.permute.xlu0 2
    %529 = vperm.xlu0 %528, %v30
    %v530 = vpop.permute.xlu0 %529
    %531 = vset.pattern.permute.xlu0 2
    %532 = vperm.xlu0 %531, %v31
    %v533 = vpop.permute.xlu0 %532
    %534 = vset.pattern.permute.xlu0 2
    %535 = vperm.xlu0 %534, %v32
    %v536 = vpop.permute.xlu0 %535
    %537 = vset.pattern.permute.xlu0 2
    %538 = vperm.xlu0 %537, %v33
    %v539 = vpop.permute.xlu0 %538
    %540 = vset.pattern.permute.xlu0 2
    %541 = vperm.xlu0 %540, %v34
    %v542 = vpop.permute.xlu0 %541
    %543 = vset.pattern.permute.xlu0 2
    %544 = vperm.xlu0 %543, %v35
    %v545 = vpop.permute.xlu0 %544
    %546 = vset.pattern.permute.xlu0 2
    %547 = vperm.xlu0 %546, %v36
    %v548 = vpop.permute.xlu0 %547
    %549 = vset.pattern.permute.xlu0 2
    %550 = vperm.xlu0 %549, %v37
    %v551 = vpop.permute.xlu0 %550
    %552 = vset.pattern.permute.xlu0 2
    %553 = vperm.xlu0 %552, %v38
    %v554 = vpop.permute.xlu0 %553
    %555 = vset.pattern.permute.xlu0 2
    %556 = vperm.xlu0 %555, %v39
    %v557 = vpop.permute.xlu0 %556
    %558 = vset.pattern.permute.xlu0 2
    %559 = vperm.xlu0 %558, %v40
    %v560 = vpop.permute.xlu0 %559
    %561 = vset.pattern.permute.xlu0 2
    %562 = vperm.xlu0 %561, %v41
    %v563 = vpop.permute.xlu0 %562
    %564 = vset.pattern.permute.xlu0 2
    %565 = vperm.xlu0 %564, %v42
    %v566 = vpop.permute.xlu0 %565
    %567 = vset.pattern.permute.xlu0 2
    %568 = vperm.xlu0 %567, %v43
    %v569 = vpop.permute.xlu0 %568
    %570 = vset.pattern.permute.xlu0 2
    %571 = vperm.xlu0 %570, %v44
    %v572 = vpop.permute.xlu0 %571
    %573 = vset.pattern.permute.xlu0 2
    %574 = vperm.xlu0 %573, %v45
    %v575 = vpop.permute.xlu0 %574
    %576 = vset.pattern.permute.xlu0 2
    %577 = vperm.xlu0 %576, %v46
    %v578 = vpop.permute.xlu0 %577
    %579 = vset.pattern.permute.xlu0 2
    %580 = vperm.xlu0 %579, %v47
    %v581 = vpop.permute.xlu0 %580
    %582 = vset.pattern.permute.xlu0 2
    %583 = vperm.xlu0 %582, %v48
    %v584 = vpop.permute.xlu0 %583
    %585 = vset.pattern.permute.xlu0 2
    %586 = vperm.xlu0 %585, %v49
    %v587 = vpop.permute.xlu0 %586
    %588 = vset.pattern.permute.xlu0 2
    %589 = vperm.xlu0 %588, %v50
    %v590 = vpop.permute.xlu0 %589
    %591 = vset.pattern.permute.xlu0 2
    %592 = vperm.xlu0 %591, %v51
    %v593 = vpop.permute.xlu0 %592
    %594 = vset.pattern.permute.xlu0 2
    %595 = vperm.xlu0 %594, %v52
    %v596 = vpop.permute.xlu0 %595
    %597 = vset.pattern.permute.xlu0 2
    %598 = vperm.xlu0 %597, %v53
    %v599 = vpop.permute.xlu0 %598
    %vm600 = vcmp.eq.s32.totalorder %v55, %v506
    %vm601 = vcmp.eq.s32.totalorder %v55, %v509
    %vm602 = vcmp.eq.s32.totalorder %v55, %v512
    %vm603 = vcmp.eq.s32.totalorder %v55, %v515
    %vm604 = vcmp.eq.s32.totalorder %v55, %v518
    %vm605 = vcmp.eq.s32.totalorder %v55, %v521
    %vm606 = vcmp.eq.s32.totalorder %v55, %v524
    %vm607 = vcmp.eq.s32.totalorder %v55, %v527
    %vm608 = vcmp.eq.s32.totalorder %v55, %v530
    %vm609 = vcmp.eq.s32.totalorder %v55, %v533
    %vm610 = vcmp.eq.s32.totalorder %v55, %v536
    %vm611 = vcmp.eq.s32.totalorder %v55, %v539
    %vm612 = vcmp.eq.s32.totalorder %v55, %v542
    %vm613 = vcmp.eq.s32.totalorder %v55, %v545
    %vm614 = vcmp.eq.s32.totalorder %v55, %v548
    %vm615 = vcmp.eq.s32.totalorder %v55, %v551
    %vm616 = vcmp.eq.s32.totalorder %v55, %v554
    %vm617 = vcmp.eq.s32.totalorder %v55, %v557
    %vm618 = vcmp.eq.s32.totalorder %v55, %v560
    %vm619 = vcmp.eq.s32.totalorder %v55, %v563
    %vm620 = vcmp.eq.s32.totalorder %v55, %v566
    %vm621 = vcmp.eq.s32.totalorder %v55, %v569
    %vm622 = vcmp.eq.s32.totalorder %v55, %v572
    %vm623 = vcmp.eq.s32.totalorder %v55, %v575
    %vm624 = vcmp.eq.s32.totalorder %v55, %v578
    %vm625 = vcmp.eq.s32.totalorder %v55, %v581
    %vm626 = vcmp.eq.s32.totalorder %v55, %v584
    %vm627 = vcmp.eq.s32.totalorder %v55, %v587
    %vm628 = vcmp.eq.s32.totalorder %v55, %v590
    %vm629 = vcmp.eq.s32.totalorder %v55, %v593
    %vm630 = vcmp.eq.s32.totalorder %v55, %v596
    %vm631 = vcmp.eq.s32.totalorder %v55, %v599
    %v632 = vsel %vm600, 1, 0
    %v633 = vsel %vm601, 1, 0
    %v634 = vsel %vm602, 1, 0
    %v635 = vsel %vm603, 1, 0
    %v636 = vsel %vm604, 1, 0
    %v637 = vsel %vm605, 1, 0
    %v638 = vsel %vm606, 1, 0
    %v639 = vsel %vm607, 1, 0
    %v640 = vsel %vm608, 1, 0
    %v641 = vsel %vm609, 1, 0
    %v642 = vsel %vm610, 1, 0
    %v643 = vsel %vm611, 1, 0
    %v644 = vsel %vm612, 1, 0
    %v645 = vsel %vm613, 1, 0
    %v646 = vsel %vm614, 1, 0
    %v647 = vsel %vm615, 1, 0
    %v648 = vsel %vm616, 1, 0
    %v649 = vsel %vm617, 1, 0
    %v650 = vsel %vm618, 1, 0
    %v651 = vsel %vm619, 1, 0
    %v652 = vsel %vm620, 1, 0
    %v653 = vsel %vm621, 1, 0
    %v654 = vsel %vm622, 1, 0
    %v655 = vsel %vm623, 1, 0
    %v656 = vsel %vm624, 1, 0
    %v657 = vsel %vm625, 1, 0
    %v658 = vsel %vm626, 1, 0
    %v659 = vsel %vm627, 1, 0
    %v660 = vsel %vm628, 1, 0
    %v661 = vsel %vm629, 1, 0
    %v662 = vsel %vm630, 1, 0
    %v663 = vsel %vm631, 1, 0
    %v664 = vcvt.s32.f32 %v632
    %v665 = vcvt.s32.f32 %v633
    %v666 = vcvt.s32.f32 %v634
    %v667 = vcvt.s32.f32 %v635
    %v668 = vcvt.s32.f32 %v636
    %v669 = vcvt.s32.f32 %v637
    %v670 = vcvt.s32.f32 %v638
    %v671 = vcvt.s32.f32 %v639
    %v672 = vcvt.s32.f32 %v640
    %v673 = vcvt.s32.f32 %v641
    %v674 = vcvt.s32.f32 %v642
    %v675 = vcvt.s32.f32 %v643
    %v676 = vcvt.s32.f32 %v644
    %v677 = vcvt.s32.f32 %v645
    %v678 = vcvt.s32.f32 %v646
    %v679 = vcvt.s32.f32 %v647
    %v680 = vcvt.s32.f32 %v648
    %v681 = vcvt.s32.f32 %v649
    %v682 = vcvt.s32.f32 %v650
    %v683 = vcvt.s32.f32 %v651
    %v684 = vcvt.s32.f32 %v652
    %v685 = vcvt.s32.f32 %v653
    %v686 = vcvt.s32.f32 %v654
    %v687 = vcvt.s32.f32 %v655
    %v688 = vcvt.s32.f32 %v656
    %v689 = vcvt.s32.f32 %v657
    %v690 = vcvt.s32.f32 %v658
    %v691 = vcvt.s32.f32 %v659
    %v692 = vcvt.s32.f32 %v660
    %v693 = vcvt.s32.f32 %v661
    %v694 = vcvt.s32.f32 %v662
    %v695 = vcvt.s32.f32 %v663
    %v696 = vpack.c.bf16 %v665, %v664
    %v697 = vpack.c.bf16 %v667, %v666
    %v698 = vpack.c.bf16 %v669, %v668
    %v699 = vpack.c.bf16 %v671, %v670
    %v700 = vpack.c.bf16 %v673, %v672
    %v701 = vpack.c.bf16 %v675, %v674
    %v702 = vpack.c.bf16 %v677, %v676
    %v703 = vpack.c.bf16 %v679, %v678
    %v704 = vpack.c.bf16 %v681, %v680
    %v705 = vpack.c.bf16 %v683, %v682
    %v706 = vpack.c.bf16 %v685, %v684
    %v707 = vpack.c.bf16 %v687, %v686
    %v708 = vpack.c.bf16 %v689, %v688
    %v709 = vpack.c.bf16 %v691, %v690
    %v710 = vpack.c.bf16 %v693, %v692
    %v711 = vpack.c.bf16 %v695, %v694
    %v712 = vadd.bf16 %v488, %v696
    %v713 = vadd.bf16 %v489, %v697
    %v714 = vadd.bf16 %v490, %v698
    %v715 = vadd.bf16 %v491, %v699
    %v716 = vadd.bf16 %v492, %v700
    %v717 = vadd.bf16 %v493, %v701
    %v718 = vadd.bf16 %v494, %v702
    %v719 = vadd.bf16 %v495, %v703
    %v720 = vadd.bf16 %v496, %v704
    %v721 = vadd.bf16 %v497, %v705
    %v722 = vadd.bf16 %v498, %v706
    %v723 = vadd.bf16 %v499, %v707
    %v724 = vadd.bf16 %v500, %v708
    %v725 = vadd.bf16 %v501, %v709
    %v726 = vadd.bf16 %v502, %v710
    %v727 = vadd.bf16 %v503, %v711
    %728 = vset.pattern.permute.xlu0 3
    %729 = vperm.xlu0 %728, %v22
    %v730 = vpop.permute.xlu0 %729
    %731 = vset.pattern.permute.xlu0 3
    %732 = vperm.xlu0 %731, %v23
    %v733 = vpop.permute.xlu0 %732
    %734 = vset.pattern.permute.xlu0 3
    %735 = vperm.xlu0 %734, %v24
    %v736 = vpop.permute.xlu0 %735
    %737 = vset.pattern.permute.xlu0 3
    %738 = vperm.xlu0 %737, %v25
    %v739 = vpop.permute.xlu0 %738
    %740 = vset.pattern.permute.xlu0 3
    %741 = vperm.xlu0 %740, %v26
    %v742 = vpop.permute.xlu0 %741
    %743 = vset.pattern.permute.xlu0 3
    %744 = vperm.xlu0 %743, %v27
    %v745 = vpop.permute.xlu0 %744
    %746 = vset.pattern.permute.xlu0 3
    %747 = vperm.xlu0 %746, %v28
    %v748 = vpop.permute.xlu0 %747
    %749 = vset.pattern.permute.xlu0 3
    %750 = vperm.xlu0 %749, %v29
    %v751 = vpop.permute.xlu0 %750
    %752 = vset.pattern.permute.xlu0 3
    %753 = vperm.xlu0 %752, %v30
    %v754 = vpop.permute.xlu0 %753
    %755 = vset.pattern.permute.xlu0 3
    %756 = vperm.xlu0 %755, %v31
    %v757 = vpop.permute.xlu0 %756
    %758 = vset.pattern.permute.xlu0 3
    %759 = vperm.xlu0 %758, %v32
    %v760 = vpop.permute.xlu0 %759
    %761 = vset.pattern.permute.xlu0 3
    %762 = vperm.xlu0 %761, %v33
    %v763 = vpop.permute.xlu0 %762
    %764 = vset.pattern.permute.xlu0 3
    %765 = vperm.xlu0 %764, %v34
    %v766 = vpop.permute.xlu0 %765
    %767 = vset.pattern.permute.xlu0 3
    %768 = vperm.xlu0 %767, %v35
    %v769 = vpop.permute.xlu0 %768
    %770 = vset.pattern.permute.xlu0 3
    %771 = vperm.xlu0 %770, %v36
    %v772 = vpop.permute.xlu0 %771
    %773 = vset.pattern.permute.xlu0 3
    %774 = vperm.xlu0 %773, %v37
    %v775 = vpop.permute.xlu0 %774
    %776 = vset.pattern.permute.xlu0 3
    %777 = vperm.xlu0 %776, %v38
    %v778 = vpop.permute.xlu0 %777
    %779 = vset.pattern.permute.xlu0 3
    %780 = vperm.xlu0 %779, %v39
    %v781 = vpop.permute.xlu0 %780
    %782 = vset.pattern.permute.xlu0 3
    %783 = vperm.xlu0 %782, %v40
    %v784 = vpop.permute.xlu0 %783
    %785 = vset.pattern.permute.xlu0 3
    %786 = vperm.xlu0 %785, %v41
    %v787 = vpop.permute.xlu0 %786
    %788 = vset.pattern.permute.xlu0 3
    %789 = vperm.xlu0 %788, %v42
    %v790 = vpop.permute.xlu0 %789
    %791 = vset.pattern.permute.xlu0 3
    %792 = vperm.xlu0 %791, %v43
    %v793 = vpop.permute.xlu0 %792
    %794 = vset.pattern.permute.xlu0 3
    %795 = vperm.xlu0 %794, %v44
    %v796 = vpop.permute.xlu0 %795
    %797 = vset.pattern.permute.xlu0 3
    %798 = vperm.xlu0 %797, %v45
    %v799 = vpop.permute.xlu0 %798
    %800 = vset.pattern.permute.xlu0 3
    %801 = vperm.xlu0 %800, %v46
    %v802 = vpop.permute.xlu0 %801
    %803 = vset.pattern.permute.xlu0 3
    %804 = vperm.xlu0 %803, %v47
    %v805 = vpop.permute.xlu0 %804
    %806 = vset.pattern.permute.xlu0 3
    %807 = vperm.xlu0 %806, %v48
    %v808 = vpop.permute.xlu0 %807
    %809 = vset.pattern.permute.xlu0 3
    %810 = vperm.xlu0 %809, %v49
    %v811 = vpop.permute.xlu0 %810
    %812 = vset.pattern.permute.xlu0 3
    %813 = vperm.xlu0 %812, %v50
    %v814 = vpop.permute.xlu0 %813
    %815 = vset.pattern.permute.xlu0 3
    %816 = vperm.xlu0 %815, %v51
    %v817 = vpop.permute.xlu0 %816
    %818 = vset.pattern.permute.xlu0 3
    %819 = vperm.xlu0 %818, %v52
    %v820 = vpop.permute.xlu0 %819
    %821 = vset.pattern.permute.xlu0 3
    %822 = vperm.xlu0 %821, %v53
    %v823 = vpop.permute.xlu0 %822
    %vm824 = vcmp.eq.s32.totalorder %v55, %v730
    %vm825 = vcmp.eq.s32.totalorder %v55, %v733
    %vm826 = vcmp.eq.s32.totalorder %v55, %v736
    %vm827 = vcmp.eq.s32.totalorder %v55, %v739
    %vm828 = vcmp.eq.s32.totalorder %v55, %v742
    %vm829 = vcmp.eq.s32.totalorder %v55, %v745
    %vm830 = vcmp.eq.s32.totalorder %v55, %v748
    %vm831 = vcmp.eq.s32.totalorder %v55, %v751
    %vm832 = vcmp.eq.s32.totalorder %v55, %v754
    %vm833 = vcmp.eq.s32.totalorder %v55, %v757
    %vm834 = vcmp.eq.s32.totalorder %v55, %v760
    %vm835 = vcmp.eq.s32.totalorder %v55, %v763
    %vm836 = vcmp.eq.s32.totalorder %v55, %v766
    %vm837 = vcmp.eq.s32.totalorder %v55, %v769
    %vm838 = vcmp.eq.s32.totalorder %v55, %v772
    %vm839 = vcmp.eq.s32.totalorder %v55, %v775
    %vm840 = vcmp.eq.s32.totalorder %v55, %v778
    %vm841 = vcmp.eq.s32.totalorder %v55, %v781
    %vm842 = vcmp.eq.s32.totalorder %v55, %v784
    %vm843 = vcmp.eq.s32.totalorder %v55, %v787
    %vm844 = vcmp.eq.s32.totalorder %v55, %v790
    %vm845 = vcmp.eq.s32.totalorder %v55, %v793
    %vm846 = vcmp.eq.s32.totalorder %v55, %v796
    %vm847 = vcmp.eq.s32.totalorder %v55, %v799
    %vm848 = vcmp.eq.s32.totalorder %v55, %v802
    %vm849 = vcmp.eq.s32.totalorder %v55, %v805
    %vm850 = vcmp.eq.s32.totalorder %v55, %v808
    %vm851 = vcmp.eq.s32.totalorder %v55, %v811
    %vm852 = vcmp.eq.s32.totalorder %v55, %v814
    %vm853 = vcmp.eq.s32.totalorder %v55, %v817
    %vm854 = vcmp.eq.s32.totalorder %v55, %v820
    %vm855 = vcmp.eq.s32.totalorder %v55, %v823
    %v856 = vsel %vm824, 1, 0
    %v857 = vsel %vm825, 1, 0
    %v858 = vsel %vm826, 1, 0
    %v859 = vsel %vm827, 1, 0
    %v860 = vsel %vm828, 1, 0
    %v861 = vsel %vm829, 1, 0
    %v862 = vsel %vm830, 1, 0
    %v863 = vsel %vm831, 1, 0
    %v864 = vsel %vm832, 1, 0
    %v865 = vsel %vm833, 1, 0
    %v866 = vsel %vm834, 1, 0
    %v867 = vsel %vm835, 1, 0
    %v868 = vsel %vm836, 1, 0
    %v869 = vsel %vm837, 1, 0
    %v870 = vsel %vm838, 1, 0
    %v871 = vsel %vm839, 1, 0
    %v872 = vsel %vm840, 1, 0
    %v873 = vsel %vm841, 1, 0
    %v874 = vsel %vm842, 1, 0
    %v875 = vsel %vm843, 1, 0
    %v876 = vsel %vm844, 1, 0
    %v877 = vsel %vm845, 1, 0
    %v878 = vsel %vm846, 1, 0
    %v879 = vsel %vm847, 1, 0
    %v880 = vsel %vm848, 1, 0
    %v881 = vsel %vm849, 1, 0
    %v882 = vsel %vm850, 1, 0
    %v883 = vsel %vm851, 1, 0
    %v884 = vsel %vm852, 1, 0
    %v885 = vsel %vm853, 1, 0
    %v886 = vsel %vm854, 1, 0
    %v887 = vsel %vm855, 1, 0
    %v888 = vcvt.s32.f32 %v856
    %v889 = vcvt.s32.f32 %v857
    %v890 = vcvt.s32.f32 %v858
    %v891 = vcvt.s32.f32 %v859
    %v892 = vcvt.s32.f32 %v860
    %v893 = vcvt.s32.f32 %v861
    %v894 = vcvt.s32.f32 %v862
    %v895 = vcvt.s32.f32 %v863
    %v896 = vcvt.s32.f32 %v864
    %v897 = vcvt.s32.f32 %v865
    %v898 = vcvt.s32.f32 %v866
    %v899 = vcvt.s32.f32 %v867
    %v900 = vcvt.s32.f32 %v868
    %v901 = vcvt.s32.f32 %v869
    %v902 = vcvt.s32.f32 %v870
    %v903 = vcvt.s32.f32 %v871
    %v904 = vcvt.s32.f32 %v872
    %v905 = vcvt.s32.f32 %v873
    %v906 = vcvt.s32.f32 %v874
    %v907 = vcvt.s32.f32 %v875
    %v908 = vcvt.s32.f32 %v876
    %v909 = vcvt.s32.f32 %v877
    %v910 = vcvt.s32.f32 %v878
    %v911 = vcvt.s32.f32 %v879
    %v912 = vcvt.s32.f32 %v880
    %v913 = vcvt.s32.f32 %v881
    %v914 = vcvt.s32.f32 %v882
    %v915 = vcvt.s32.f32 %v883
    %v916 = vcvt.s32.f32 %v884
    %v917 = vcvt.s32.f32 %v885
    %v918 = vcvt.s32.f32 %v886
    %v919 = vcvt.s32.f32 %v887
    %v920 = vpack.c.bf16 %v889, %v888
    %v921 = vpack.c.bf16 %v891, %v890
    %v922 = vpack.c.bf16 %v893, %v892
    %v923 = vpack.c.bf16 %v895, %v894
    %v924 = vpack.c.bf16 %v897, %v896
    %v925 = vpack.c.bf16 %v899, %v898
    %v926 = vpack.c.bf16 %v901, %v900
    %v927 = vpack.c.bf16 %v903, %v902
    %v928 = vpack.c.bf16 %v905, %v904
    %v929 = vpack.c.bf16 %v907, %v906
    %v930 = vpack.c.bf16 %v909, %v908
    %v931 = vpack.c.bf16 %v911, %v910
    %v932 = vpack.c.bf16 %v913, %v912
    %v933 = vpack.c.bf16 %v915, %v914
    %v934 = vpack.c.bf16 %v917, %v916
    %v935 = vpack.c.bf16 %v919, %v918
    %v936 = vadd.bf16 %v712, %v920
    %v937 = vadd.bf16 %v713, %v921
    %v938 = vadd.bf16 %v714, %v922
    %v939 = vadd.bf16 %v715, %v923
    %v940 = vadd.bf16 %v716, %v924
    %v941 = vadd.bf16 %v717, %v925
    %v942 = vadd.bf16 %v718, %v926
    %v943 = vadd.bf16 %v719, %v927
    %v944 = vadd.bf16 %v720, %v928
    %v945 = vadd.bf16 %v721, %v929
    %v946 = vadd.bf16 %v722, %v930
    %v947 = vadd.bf16 %v723, %v931
    %v948 = vadd.bf16 %v724, %v932
    %v949 = vadd.bf16 %v725, %v933
    %v950 = vadd.bf16 %v726, %v934
    %v951 = vadd.bf16 %v727, %v935
    %v952 = vld [vmem:[%s1] sm:$0xf]
    %v953 = vld [vmem:[%s1 + $0x4] sm:$0xf]
    %v954 = vld [vmem:[%s1 + $0x8] sm:$0xf]
    %v955 = vld [vmem:[%s1 + $0xc] sm:$0xf]
    %v956 = vld [vmem:[%s1 + $0x10] sm:$0xf]
    %v957 = vld [vmem:[%s1 + $0x14] sm:$0xf]
    %v958 = vld [vmem:[%s1 + $0x18] sm:$0xf]
    %v959 = vld [vmem:[%s1 + $0x1c] sm:$0xf]
    %v960 = vld [vmem:[%s1 + $0x20] sm:$0xf]
    %v961 = vld [vmem:[%s1 + $0x24] sm:$0xf]
    %v962 = vld [vmem:[%s1 + $0x28] sm:$0xf]
    %v963 = vld [vmem:[%s1 + $0x2c] sm:$0xf]
    %v964 = vld [vmem:[%s1 + $0x30] sm:$0xf]
    %v965 = vld [vmem:[%s1 + $0x34] sm:$0xf]
    %v966 = vld [vmem:[%s1 + $0x38] sm:$0xf]
    %v967 = vld [vmem:[%s1 + $0x3c] sm:$0xf]
    %v968 = vld [vmem:[%s2] sm:$0x1]
    %v970 = vlaneseq
    %v971 = vshrl.u32 %v970, 7
    %v972 = vsub.s32 0, %v971
    %v973 = vrot.slane %v968, %v972
    %v991 = vunpack.c.l.b16 %v952
    %v992 = vunpack.c.l.b16 %v953
    %v993 = vunpack.c.l.b16 %v954
    %v994 = vunpack.c.l.b16 %v955
    %v995 = vunpack.c.l.b16 %v956
    %v996 = vunpack.c.l.b16 %v957
    %v997 = vunpack.c.l.b16 %v958
    %v998 = vunpack.c.l.b16 %v959
    %v999 = vunpack.c.l.b16 %v960
    %v1000 = vunpack.c.l.b16 %v961
    %v1001 = vunpack.c.l.b16 %v962
    %v1002 = vunpack.c.l.b16 %v963
    %v1003 = vunpack.c.l.b16 %v964
    %v1004 = vunpack.c.l.b16 %v965
    %v1005 = vunpack.c.l.b16 %v966
    %v1006 = vunpack.c.l.b16 %v967
    %v1007 = vpack.c.b16 %v992, %v991
    %v1008 = vpack.c.b16 %v994, %v993
    %v1009 = vpack.c.b16 %v996, %v995
    %v1010 = vpack.c.b16 %v998, %v997
    %v1011 = vpack.c.b16 %v1000, %v999
    %v1012 = vpack.c.b16 %v1002, %v1001
    %v1013 = vpack.c.b16 %v1004, %v1003
    %v1014 = vpack.c.b16 %v1006, %v1005
    %1023 = vmatprep.subr.bf16.mxu0 0
    %1024 = vmatpush1.bf16.msra.mxu0 %v1007
    %1025 = vmatprep.subr.bf16.mxu0 0
    %1026 = vmatpush1.bf16.msra.mxu0 %v1008
    %1027 = vmatprep.subr.bf16.mxu0 0
    %1028 = vmatpush1.bf16.msra.mxu0 %v1009
    %1029 = vmatprep.subr.bf16.mxu0 0
    %1030 = vmatpush1.bf16.msra.mxu0 %v1010
    %1031 = vmatprep.subr.bf16.mxu0 0
    %1032 = vmatpush1.bf16.msra.mxu0 %v1011
    %1033 = vmatprep.subr.bf16.mxu0 0
    %1034 = vmatpush1.bf16.msra.mxu0 %v1012
    %1035 = vmatprep.subr.bf16.mxu0 0
    %1036 = vmatpush1.bf16.msra.mxu0 %v1013
    %1037 = vmatprep.subr.bf16.mxu0 0
    %1038 = vmatpush1.bf16.msra.mxu0 %v1014
    %1039 = vmatprep.subr.bf16.mxu0 0
    %1040 = vmatpush1.bf16.msra.mxu0 0
    %1041 = vmatprep.subr.bf16.mxu0 0
    %1042 = vmatpush1.bf16.msra.mxu0 0
    %1043 = vmatprep.subr.bf16.mxu0 0
    %1044 = vmatpush1.bf16.msra.mxu0 0
    %1045 = vmatprep.subr.bf16.mxu0 0
    %1046 = vmatpush1.bf16.msra.mxu0 0
    %1047 = vmatprep.subr.bf16.mxu0 0
    %1048 = vmatpush1.bf16.msra.mxu0 0
    %1049 = vmatprep.subr.bf16.mxu0 0
    %1050 = vmatpush1.bf16.msra.mxu0 0
    %1051 = vmatprep.subr.bf16.mxu0 0
    %1052 = vmatpush1.bf16.msra.mxu0 0
    %1053 = vmatprep.subr.bf16.mxu0 0
    %1054 = vmatpush1.bf16.msra.mxu0 0
    %1055 = vmatprep.mubr.bf16.mxu0 0
    %1056 = vmatmul.mubr.bf16.gmra.mrb[0].mxu0 %v936
    %v1057 = vpop.f32.mrb[0].mxu0
    %v1058 = vadd.f32 %v973, %v1057
    %v1059 = vpop.f32.mrb[0].mxu0
    %v1060 = vpop.f32.mrb[0].mxu0
    %v1061 = vadd.f32 %v973, %v1060
    %v1062 = vpop.f32.mrb[0].mxu0
    %1063 = vmatprep.mubr.bf16.mxu0 0
    %1064 = vmatmul.mubr.bf16.gmra.mrb[0].mxu0 %v937
    %v1065 = vpop.f32.mrb[0].mxu0
    %v1066 = vadd.f32 %v973, %v1065
    %v1067 = vpop.f32.mrb[0].mxu0
    %v1068 = vpop.f32.mrb[0].mxu0
    %v1069 = vadd.f32 %v973, %v1068
    %v1070 = vpop.f32.mrb[0].mxu0
    %1071 = vmatprep.mubr.bf16.mxu0 0
    %1072 = vmatmul.mubr.bf16.gmra.mrb[0].mxu0 %v938
    %v1073 = vpop.f32.mrb[0].mxu0
    %v1074 = vadd.f32 %v973, %v1073
    %v1075 = vpop.f32.mrb[0].mxu0
    %v1076 = vpop.f32.mrb[0].mxu0
    %v1077 = vadd.f32 %v973, %v1076
    %v1078 = vpop.f32.mrb[0].mxu0
    %1079 = vmatprep.mubr.bf16.mxu0 0
    %1080 = vmatmul.mubr.bf16.gmra.mrb[0].mxu0 %v939
    %v1081 = vpop.f32.mrb[0].mxu0
    %v1082 = vadd.f32 %v973, %v1081
    %v1083 = vpop.f32.mrb[0].mxu0
    %v1084 = vpop.f32.mrb[0].mxu0
    %v1085 = vadd.f32 %v973, %v1084
    %v1086 = vpop.f32.mrb[0].mxu0
    %1087 = vmatprep.mubr.bf16.mxu0 0
    %1088 = vmatmul.mubr.bf16.gmra.mrb[0].mxu0 %v940
    %v1089 = vpop.f32.mrb[0].mxu0
    %v1090 = vadd.f32 %v973, %v1089
    %v1091 = vpop.f32.mrb[0].mxu0
    %v1092 = vpop.f32.mrb[0].mxu0
    %v1093 = vadd.f32 %v973, %v1092
    %v1094 = vpop.f32.mrb[0].mxu0
    %1095 = vmatprep.mubr.bf16.mxu0 0
    %1096 = vmatmul.mubr.bf16.gmra.mrb[0].mxu0 %v941
    %v1097 = vpop.f32.mrb[0].mxu0
    %v1098 = vadd.f32 %v973, %v1097
    %v1099 = vpop.f32.mrb[0].mxu0
    %v1100 = vpop.f32.mrb[0].mxu0
    %v1101 = vadd.f32 %v973, %v1100
    %v1102 = vpop.f32.mrb[0].mxu0
    %1103 = vmatprep.mubr.bf16.mxu0 0
    %1104 = vmatmul.mubr.bf16.gmra.mrb[0].mxu0 %v942
    %v1105 = vpop.f32.mrb[0].mxu0
    %v1106 = vadd.f32 %v973, %v1105
    %v1107 = vpop.f32.mrb[0].mxu0
    %v1108 = vpop.f32.mrb[0].mxu0
    %v1109 = vadd.f32 %v973, %v1108
    %v1110 = vpop.f32.mrb[0].mxu0
    %1111 = vmatprep.mubr.bf16.mxu0 0
    %1112 = vmatmul.mubr.bf16.gmra.mrb[0].mxu0 %v943
    %v1113 = vpop.f32.mrb[0].mxu0
    %v1114 = vadd.f32 %v973, %v1113
    %v1115 = vpop.f32.mrb[0].mxu0
    %v1116 = vpop.f32.mrb[0].mxu0
    %v1117 = vadd.f32 %v973, %v1116
    %v1118 = vpop.f32.mrb[0].mxu0
    %1119 = vmatprep.mubr.bf16.mxu0 0
    %1120 = vmatmul.mubr.bf16.gmra.mrb[0].mxu0 %v944
    %v1121 = vpop.f32.mrb[0].mxu0
    %v1122 = vadd.f32 %v973, %v1121
    %v1123 = vpop.f32.mrb[0].mxu0
    %v1124 = vpop.f32.mrb[0].mxu0
    %v1125 = vadd.f32 %v973, %v1124
    %v1126 = vpop.f32.mrb[0].mxu0
    %1127 = vmatprep.mubr.bf16.mxu0 0
    %1128 = vmatmul.mubr.bf16.gmra.mrb[0].mxu0 %v945
    %v1129 = vpop.f32.mrb[0].mxu0
    %v1130 = vadd.f32 %v973, %v1129
    %v1131 = vpop.f32.mrb[0].mxu0
    %v1132 = vpop.f32.mrb[0].mxu0
    %v1133 = vadd.f32 %v973, %v1132
    %v1134 = vpop.f32.mrb[0].mxu0
    %1135 = vmatprep.mubr.bf16.mxu0 0
    %1136 = vmatmul.mubr.bf16.gmra.mrb[0].mxu0 %v946
    %v1137 = vpop.f32.mrb[0].mxu0
    %v1138 = vadd.f32 %v973, %v1137
    %v1139 = vpop.f32.mrb[0].mxu0
    %v1140 = vpop.f32.mrb[0].mxu0
    %v1141 = vadd.f32 %v973, %v1140
    %v1142 = vpop.f32.mrb[0].mxu0
    %1143 = vmatprep.mubr.bf16.mxu0 0
    %1144 = vmatmul.mubr.bf16.gmra.mrb[0].mxu0 %v947
    %v1145 = vpop.f32.mrb[0].mxu0
    %v1146 = vadd.f32 %v973, %v1145
    %v1147 = vpop.f32.mrb[0].mxu0
    %v1148 = vpop.f32.mrb[0].mxu0
    %v1149 = vadd.f32 %v973, %v1148
    %v1150 = vpop.f32.mrb[0].mxu0
    %1151 = vmatprep.mubr.bf16.mxu0 0
    %1152 = vmatmul.mubr.bf16.gmra.mrb[0].mxu0 %v948
    %v1153 = vpop.f32.mrb[0].mxu0
    %v1154 = vadd.f32 %v973, %v1153
    %v1155 = vpop.f32.mrb[0].mxu0
    %v1156 = vpop.f32.mrb[0].mxu0
    %v1157 = vadd.f32 %v973, %v1156
    %v1158 = vpop.f32.mrb[0].mxu0
    %1159 = vmatprep.mubr.bf16.mxu0 0
    %1160 = vmatmul.mubr.bf16.gmra.mrb[0].mxu0 %v949
    %v1161 = vpop.f32.mrb[0].mxu0
    %v1162 = vadd.f32 %v973, %v1161
    %v1163 = vpop.f32.mrb[0].mxu0
    %v1164 = vpop.f32.mrb[0].mxu0
    %v1165 = vadd.f32 %v973, %v1164
    %v1166 = vpop.f32.mrb[0].mxu0
    %1167 = vmatprep.mubr.bf16.mxu0 0
    %1168 = vmatmul.mubr.bf16.gmra.mrb[0].mxu0 %v950
    %v1169 = vpop.f32.mrb[0].mxu0
    %v1170 = vadd.f32 %v973, %v1169
    %v1171 = vpop.f32.mrb[0].mxu0
    %v1172 = vpop.f32.mrb[0].mxu0
    %v1173 = vadd.f32 %v973, %v1172
    %v1174 = vpop.f32.mrb[0].mxu0
    %1175 = vmatprep.mubr.bf16.mxu0 0
    %1176 = vmatmul.mubr.bf16.gmra.mrb[0].mxu0 %v951
    %v1177 = vpop.f32.mrb[0].mxu0
    %v1178 = vadd.f32 %v973, %v1177
    %v1179 = vpop.f32.mrb[0].mxu0
    %v1180 = vpop.f32.mrb[0].mxu0
    %v1181 = vadd.f32 %v973, %v1180
    %v1182 = vpop.f32.mrb[0].mxu0
    %1183 = vdwg.mxu0
    %v1184 = vmax.f32 %v1058, 0.0
    %v1185 = vmax.f32 %v1061, 0.0
    %v1186 = vmax.f32 %v1066, 0.0
    %v1187 = vmax.f32 %v1069, 0.0
    %v1188 = vmax.f32 %v1074, 0.0
    %v1189 = vmax.f32 %v1077, 0.0
    %v1190 = vmax.f32 %v1082, 0.0
    %v1191 = vmax.f32 %v1085, 0.0
    %v1192 = vmax.f32 %v1090, 0.0
    %v1193 = vmax.f32 %v1093, 0.0
    %v1194 = vmax.f32 %v1098, 0.0
    %v1195 = vmax.f32 %v1101, 0.0
    %v1196 = vmax.f32 %v1106, 0.0
    %v1197 = vmax.f32 %v1109, 0.0
    %v1198 = vmax.f32 %v1114, 0.0
    %v1199 = vmax.f32 %v1117, 0.0
    %v1200 = vmax.f32 %v1122, 0.0
    %v1201 = vmax.f32 %v1125, 0.0
    %v1202 = vmax.f32 %v1130, 0.0
    %v1203 = vmax.f32 %v1133, 0.0
    %v1204 = vmax.f32 %v1138, 0.0
    %v1205 = vmax.f32 %v1141, 0.0
    %v1206 = vmax.f32 %v1146, 0.0
    %v1207 = vmax.f32 %v1149, 0.0
    %v1208 = vmax.f32 %v1154, 0.0
    %v1209 = vmax.f32 %v1157, 0.0
    %v1210 = vmax.f32 %v1162, 0.0
    %v1211 = vmax.f32 %v1165, 0.0
    %v1212 = vmax.f32 %v1170, 0.0
    %v1213 = vmax.f32 %v1173, 0.0
    %v1214 = vmax.f32 %v1178, 0.0
    %v1215 = vmax.f32 %v1181, 0.0
    %v1216 = vpack.c.bf16 %v1185, %v1184
    %v1217 = vpack.c.bf16 %v1187, %v1186
    %v1218 = vpack.c.bf16 %v1189, %v1188
    %v1219 = vpack.c.bf16 %v1191, %v1190
    %v1220 = vpack.c.bf16 %v1193, %v1192
    %v1221 = vpack.c.bf16 %v1195, %v1194
    %v1222 = vpack.c.bf16 %v1197, %v1196
    %v1223 = vpack.c.bf16 %v1199, %v1198
    %v1224 = vpack.c.bf16 %v1201, %v1200
    %v1225 = vpack.c.bf16 %v1203, %v1202
    %v1226 = vpack.c.bf16 %v1205, %v1204
    %v1227 = vpack.c.bf16 %v1207, %v1206
    %v1228 = vpack.c.bf16 %v1209, %v1208
    %v1229 = vpack.c.bf16 %v1211, %v1210
    %v1230 = vpack.c.bf16 %v1213, %v1212
    %v1231 = vpack.c.bf16 %v1215, %v1214
    %v1232 = vld [vmem:[%s3] sm:$0xf]
    %v1233 = vld [vmem:[%s3 + $0x4] sm:$0xf]
    %v1234 = vld [vmem:[%s3 + $0x8] sm:$0xf]
    %v1235 = vld [vmem:[%s3 + $0xc] sm:$0xf]
    %v1236 = vld [vmem:[%s3 + $0x10] sm:$0xf]
    %v1237 = vld [vmem:[%s3 + $0x14] sm:$0xf]
    %v1238 = vld [vmem:[%s3 + $0x18] sm:$0xf]
    %v1239 = vld [vmem:[%s3 + $0x1c] sm:$0xf]
    %v1240 = vld [vmem:[%s3 + $0x20] sm:$0xf]
    %v1241 = vld [vmem:[%s3 + $0x24] sm:$0xf]
    %v1242 = vld [vmem:[%s3 + $0x28] sm:$0xf]
    %v1243 = vld [vmem:[%s3 + $0x2c] sm:$0xf]
    %v1244 = vld [vmem:[%s3 + $0x30] sm:$0xf]
    %v1245 = vld [vmem:[%s3 + $0x34] sm:$0xf]
    %v1246 = vld [vmem:[%s3 + $0x38] sm:$0xf]
    %v1247 = vld [vmem:[%s3 + $0x3c] sm:$0xf]
    %v1248 = vld [vmem:[%s4] sm:$0x1]
    %v1250 = vlaneseq
    %v1251 = vshrl.u32 %v1250, 7
    %v1252 = vsub.s32 0, %v1251
    %v1253 = vrot.slane %v1248, %v1252
    %v1271 = vunpack.c.l.b16 %v1232
    %v1272 = vunpack.c.l.b16 %v1233
    %v1273 = vunpack.c.l.b16 %v1234
    %v1274 = vunpack.c.l.b16 %v1235
    %v1275 = vunpack.c.l.b16 %v1236
    %v1276 = vunpack.c.l.b16 %v1237
    %v1277 = vunpack.c.l.b16 %v1238
    %v1278 = vunpack.c.l.b16 %v1239
    %v1279 = vunpack.c.l.b16 %v1240
    %v1280 = vunpack.c.l.b16 %v1241
    %v1281 = vunpack.c.l.b16 %v1242
    %v1282 = vunpack.c.l.b16 %v1243
    %v1283 = vunpack.c.l.b16 %v1244
    %v1284 = vunpack.c.l.b16 %v1245
    %v1285 = vunpack.c.l.b16 %v1246
    %v1286 = vunpack.c.l.b16 %v1247
    %v1287 = vpack.c.b16 %v1272, %v1271
    %v1288 = vpack.c.b16 %v1274, %v1273
    %v1289 = vpack.c.b16 %v1276, %v1275
    %v1290 = vpack.c.b16 %v1278, %v1277
    %v1291 = vpack.c.b16 %v1280, %v1279
    %v1292 = vpack.c.b16 %v1282, %v1281
    %v1293 = vpack.c.b16 %v1284, %v1283
    %v1294 = vpack.c.b16 %v1286, %v1285
    %1303 = vmatprep.subr.bf16.mxu0 0
    %1304 = vmatpush1.bf16.msra.mxu0 %v1287
    %1305 = vmatprep.subr.bf16.mxu0 0
    %1306 = vmatpush1.bf16.msra.mxu0 %v1288
    %1307 = vmatprep.subr.bf16.mxu0 0
    %1308 = vmatpush1.bf16.msra.mxu0 %v1289
    %1309 = vmatprep.subr.bf16.mxu0 0
    %1310 = vmatpush1.bf16.msra.mxu0 %v1290
    %1311 = vmatprep.subr.bf16.mxu0 0
    %1312 = vmatpush1.bf16.msra.mxu0 %v1291
    %1313 = vmatprep.subr.bf16.mxu0 0
    %1314 = vmatpush1.bf16.msra.mxu0 %v1292
    %1315 = vmatprep.subr.bf16.mxu0 0
    %1316 = vmatpush1.bf16.msra.mxu0 %v1293
    %1317 = vmatprep.subr.bf16.mxu0 0
    %1318 = vmatpush1.bf16.msra.mxu0 %v1294
    %1319 = vmatprep.subr.bf16.mxu0 0
    %1320 = vmatpush1.bf16.msra.mxu0 0
    %1321 = vmatprep.subr.bf16.mxu0 0
    %1322 = vmatpush1.bf16.msra.mxu0 0
    %1323 = vmatprep.subr.bf16.mxu0 0
    %1324 = vmatpush1.bf16.msra.mxu0 0
    %1325 = vmatprep.subr.bf16.mxu0 0
    %1326 = vmatpush1.bf16.msra.mxu0 0
    %1327 = vmatprep.subr.bf16.mxu0 0
    %1328 = vmatpush1.bf16.msra.mxu0 0
    %1329 = vmatprep.subr.bf16.mxu0 0
    %1330 = vmatpush1.bf16.msra.mxu0 0
    %1331 = vmatprep.subr.bf16.mxu0 0
    %1332 = vmatpush1.bf16.msra.mxu0 0
    %1333 = vmatprep.subr.bf16.mxu0 0
    %1334 = vmatpush1.bf16.msra.mxu0 0
    %1335 = vmatprep.mubr.bf16.mxu0 0
    %1336 = vmatmul.mubr.bf16.gmra.mrb[0].mxu0 %v1216
    %v1337 = vpop.f32.mrb[0].mxu0
    %v1338 = vadd.f32 %v1253, %v1337
    %v1339 = vpop.f32.mrb[0].mxu0
    %v1340 = vpop.f32.mrb[0].mxu0
    %v1341 = vadd.f32 %v1253, %v1340
    %v1342 = vpop.f32.mrb[0].mxu0
    %1343 = vmatprep.mubr.bf16.mxu0 0
    %1344 = vmatmul.mubr.bf16.gmra.mrb[0].mxu0 %v1217
    %v1345 = vpop.f32.mrb[0].mxu0
    %v1346 = vadd.f32 %v1253, %v1345
    %v1347 = vpop.f32.mrb[0].mxu0
    %v1348 = vpop.f32.mrb[0].mxu0
    %v1349 = vadd.f32 %v1253, %v1348
    %v1350 = vpop.f32.mrb[0].mxu0
    %1351 = vmatprep.mubr.bf16.mxu0 0
    %1352 = vmatmul.mubr.bf16.gmra.mrb[0].mxu0 %v1218
    %v1353 = vpop.f32.mrb[0].mxu0
    %v1354 = vadd.f32 %v1253, %v1353
    %v1355 = vpop.f32.mrb[0].mxu0
    %v1356 = vpop.f32.mrb[0].mxu0
    %v1357 = vadd.f32 %v1253, %v1356
    %v1358 = vpop.f32.mrb[0].mxu0
    %1359 = vmatprep.mubr.bf16.mxu0 0
    %1360 = vmatmul.mubr.bf16.gmra.mrb[0].mxu0 %v1219
    %v1361 = vpop.f32.mrb[0].mxu0
    %v1362 = vadd.f32 %v1253, %v1361
    %v1363 = vpop.f32.mrb[0].mxu0
    %v1364 = vpop.f32.mrb[0].mxu0
    %v1365 = vadd.f32 %v1253, %v1364
    %v1366 = vpop.f32.mrb[0].mxu0
    %1367 = vmatprep.mubr.bf16.mxu0 0
    %1368 = vmatmul.mubr.bf16.gmra.mrb[0].mxu0 %v1220
    %v1369 = vpop.f32.mrb[0].mxu0
    %v1370 = vadd.f32 %v1253, %v1369
    %v1371 = vpop.f32.mrb[0].mxu0
    %v1372 = vpop.f32.mrb[0].mxu0
    %v1373 = vadd.f32 %v1253, %v1372
    %v1374 = vpop.f32.mrb[0].mxu0
    %1375 = vmatprep.mubr.bf16.mxu0 0
    %1376 = vmatmul.mubr.bf16.gmra.mrb[0].mxu0 %v1221
    %v1377 = vpop.f32.mrb[0].mxu0
    %v1378 = vadd.f32 %v1253, %v1377
    %v1379 = vpop.f32.mrb[0].mxu0
    %v1380 = vpop.f32.mrb[0].mxu0
    %v1381 = vadd.f32 %v1253, %v1380
    %v1382 = vpop.f32.mrb[0].mxu0
    %1383 = vmatprep.mubr.bf16.mxu0 0
    %1384 = vmatmul.mubr.bf16.gmra.mrb[0].mxu0 %v1222
    %v1385 = vpop.f32.mrb[0].mxu0
    %v1386 = vadd.f32 %v1253, %v1385
    %v1387 = vpop.f32.mrb[0].mxu0
    %v1388 = vpop.f32.mrb[0].mxu0
    %v1389 = vadd.f32 %v1253, %v1388
    %v1390 = vpop.f32.mrb[0].mxu0
    %1391 = vmatprep.mubr.bf16.mxu0 0
    %1392 = vmatmul.mubr.bf16.gmra.mrb[0].mxu0 %v1223
    %v1393 = vpop.f32.mrb[0].mxu0
    %v1394 = vadd.f32 %v1253, %v1393
    %v1395 = vpop.f32.mrb[0].mxu0
    %v1396 = vpop.f32.mrb[0].mxu0
    %v1397 = vadd.f32 %v1253, %v1396
    %v1398 = vpop.f32.mrb[0].mxu0
    %1399 = vmatprep.mubr.bf16.mxu0 0
    %1400 = vmatmul.mubr.bf16.gmra.mrb[0].mxu0 %v1224
    %v1401 = vpop.f32.mrb[0].mxu0
    %v1402 = vadd.f32 %v1253, %v1401
    %v1403 = vpop.f32.mrb[0].mxu0
    %v1404 = vpop.f32.mrb[0].mxu0
    %v1405 = vadd.f32 %v1253, %v1404
    %v1406 = vpop.f32.mrb[0].mxu0
    %1407 = vmatprep.mubr.bf16.mxu0 0
    %1408 = vmatmul.mubr.bf16.gmra.mrb[0].mxu0 %v1225
    %v1409 = vpop.f32.mrb[0].mxu0
    %v1410 = vadd.f32 %v1253, %v1409
    %v1411 = vpop.f32.mrb[0].mxu0
    %v1412 = vpop.f32.mrb[0].mxu0
    %v1413 = vadd.f32 %v1253, %v1412
    %v1414 = vpop.f32.mrb[0].mxu0
    %1415 = vmatprep.mubr.bf16.mxu0 0
    %1416 = vmatmul.mubr.bf16.gmra.mrb[0].mxu0 %v1226
    %v1417 = vpop.f32.mrb[0].mxu0
    %v1418 = vadd.f32 %v1253, %v1417
    %v1419 = vpop.f32.mrb[0].mxu0
    %v1420 = vpop.f32.mrb[0].mxu0
    %v1421 = vadd.f32 %v1253, %v1420
    %v1422 = vpop.f32.mrb[0].mxu0
    %1423 = vmatprep.mubr.bf16.mxu0 0
    %1424 = vmatmul.mubr.bf16.gmra.mrb[0].mxu0 %v1227
    %v1425 = vpop.f32.mrb[0].mxu0
    %v1426 = vadd.f32 %v1253, %v1425
    %v1427 = vpop.f32.mrb[0].mxu0
    %v1428 = vpop.f32.mrb[0].mxu0
    %v1429 = vadd.f32 %v1253, %v1428
    %v1430 = vpop.f32.mrb[0].mxu0
    %1431 = vmatprep.mubr.bf16.mxu0 0
    %1432 = vmatmul.mubr.bf16.gmra.mrb[0].mxu0 %v1228
    %v1433 = vpop.f32.mrb[0].mxu0
    %v1434 = vadd.f32 %v1253, %v1433
    %v1435 = vpop.f32.mrb[0].mxu0
    %v1436 = vpop.f32.mrb[0].mxu0
    %v1437 = vadd.f32 %v1253, %v1436
    %v1438 = vpop.f32.mrb[0].mxu0
    %1439 = vmatprep.mubr.bf16.mxu0 0
    %1440 = vmatmul.mubr.bf16.gmra.mrb[0].mxu0 %v1229
    %v1441 = vpop.f32.mrb[0].mxu0
    %v1442 = vadd.f32 %v1253, %v1441
    %v1443 = vpop.f32.mrb[0].mxu0
    %v1444 = vpop.f32.mrb[0].mxu0
    %v1445 = vadd.f32 %v1253, %v1444
    %v1446 = vpop.f32.mrb[0].mxu0
    %1447 = vmatprep.mubr.bf16.mxu0 0
    %1448 = vmatmul.mubr.bf16.gmra.mrb[0].mxu0 %v1230
    %v1449 = vpop.f32.mrb[0].mxu0
    %v1450 = vadd.f32 %v1253, %v1449
    %v1451 = vpop.f32.mrb[0].mxu0
    %v1452 = vpop.f32.mrb[0].mxu0
    %v1453 = vadd.f32 %v1253, %v1452
    %v1454 = vpop.f32.mrb[0].mxu0
    %1455 = vmatprep.mubr.bf16.mxu0 0
    %1456 = vmatmul.mubr.bf16.gmra.mrb[0].mxu0 %v1231
    %v1457 = vpop.f32.mrb[0].mxu0
    %v1458 = vadd.f32 %v1253, %v1457
    %v1459 = vpop.f32.mrb[0].mxu0
    %v1460 = vpop.f32.mrb[0].mxu0
    %v1461 = vadd.f32 %v1253, %v1460
    %v1462 = vpop.f32.mrb[0].mxu0
    %1463 = vdwg.mxu0
    %1464 = vmax.xlane.f32.xlu0 %v1338
    %v1465 = vpop.xlane.xlu0 %1464
    %1466 = vmax.xlane.f32.xlu0 %v1341
    %v1467 = vpop.xlane.xlu0 %1466
    %1468 = vmax.xlane.f32.xlu0 %v1346
    %v1469 = vpop.xlane.xlu0 %1468
    %1470 = vmax.xlane.f32.xlu0 %v1349
    %v1471 = vpop.xlane.xlu0 %1470
    %1472 = vmax.xlane.f32.xlu0 %v1354
    %v1473 = vpop.xlane.xlu0 %1472
    %1474 = vmax.xlane.f32.xlu0 %v1357
    %v1475 = vpop.xlane.xlu0 %1474
    %1476 = vmax.xlane.f32.xlu0 %v1362
    %v1477 = vpop.xlane.xlu0 %1476
    %1478 = vmax.xlane.f32.xlu0 %v1365
    %v1479 = vpop.xlane.xlu0 %1478
    %1480 = vmax.xlane.f32.xlu0 %v1370
    %v1481 = vpop.xlane.xlu0 %1480
    %1482 = vmax.xlane.f32.xlu0 %v1373
    %v1483 = vpop.xlane.xlu0 %1482
    %1484 = vmax.xlane.f32.xlu0 %v1378
    %v1485 = vpop.xlane.xlu0 %1484
    %1486 = vmax.xlane.f32.xlu0 %v1381
    %v1487 = vpop.xlane.xlu0 %1486
    %1488 = vmax.xlane.f32.xlu0 %v1386
    %v1489 = vpop.xlane.xlu0 %1488
    %1490 = vmax.xlane.f32.xlu0 %v1389
    %v1491 = vpop.xlane.xlu0 %1490
    %1492 = vmax.xlane.f32.xlu0 %v1394
    %v1493 = vpop.xlane.xlu0 %1492
    %1494 = vmax.xlane.f32.xlu0 %v1397
    %v1495 = vpop.xlane.xlu0 %1494
    %1496 = vmax.xlane.f32.xlu0 %v1402
    %v1497 = vpop.xlane.xlu0 %1496
    %1498 = vmax.xlane.f32.xlu0 %v1405
    %v1499 = vpop.xlane.xlu0 %1498
    %1500 = vmax.xlane.f32.xlu0 %v1410
    %v1501 = vpop.xlane.xlu0 %1500
    %1502 = vmax.xlane.f32.xlu0 %v1413
    %v1503 = vpop.xlane.xlu0 %1502
    %1504 = vmax.xlane.f32.xlu0 %v1418
    %v1505 = vpop.xlane.xlu0 %1504
    %1506 = vmax.xlane.f32.xlu0 %v1421
    %v1507 = vpop.xlane.xlu0 %1506
    %1508 = vmax.xlane.f32.xlu0 %v1426
    %v1509 = vpop.xlane.xlu0 %1508
    %1510 = vmax.xlane.f32.xlu0 %v1429
    %v1511 = vpop.xlane.xlu0 %1510
    %1512 = vmax.xlane.f32.xlu0 %v1434
    %v1513 = vpop.xlane.xlu0 %1512
    %1514 = vmax.xlane.f32.xlu0 %v1437
    %v1515 = vpop.xlane.xlu0 %1514
    %1516 = vmax.xlane.f32.xlu0 %v1442
    %v1517 = vpop.xlane.xlu0 %1516
    %1518 = vmax.xlane.f32.xlu0 %v1445
    %v1519 = vpop.xlane.xlu0 %1518
    %1520 = vmax.xlane.f32.xlu0 %v1450
    %v1521 = vpop.xlane.xlu0 %1520
    %1522 = vmax.xlane.f32.xlu0 %v1453
    %v1523 = vpop.xlane.xlu0 %1522
    %1524 = vmax.xlane.f32.xlu0 %v1458
    %v1525 = vpop.xlane.xlu0 %1524
    %1526 = vmax.xlane.f32.xlu0 %v1461
    %v1527 = vpop.xlane.xlu0 %1526
    %v1528 = vsub.f32 %v1338, %v1465
    %v1529 = vsub.f32 %v1341, %v1467
    %v1530 = vsub.f32 %v1346, %v1469
    %v1531 = vsub.f32 %v1349, %v1471
    %v1532 = vsub.f32 %v1354, %v1473
    %v1533 = vsub.f32 %v1357, %v1475
    %v1534 = vsub.f32 %v1362, %v1477
    %v1535 = vsub.f32 %v1365, %v1479
    %v1536 = vsub.f32 %v1370, %v1481
    %v1537 = vsub.f32 %v1373, %v1483
    %v1538 = vsub.f32 %v1378, %v1485
    %v1539 = vsub.f32 %v1381, %v1487
    %v1540 = vsub.f32 %v1386, %v1489
    %v1541 = vsub.f32 %v1389, %v1491
    %v1542 = vsub.f32 %v1394, %v1493
    %v1543 = vsub.f32 %v1397, %v1495
    %v1544 = vsub.f32 %v1402, %v1497
    %v1545 = vsub.f32 %v1405, %v1499
    %v1546 = vsub.f32 %v1410, %v1501
    %v1547 = vsub.f32 %v1413, %v1503
    %v1548 = vsub.f32 %v1418, %v1505
    %v1549 = vsub.f32 %v1421, %v1507
    %v1550 = vsub.f32 %v1426, %v1509
    %v1551 = vsub.f32 %v1429, %v1511
    %v1552 = vsub.f32 %v1434, %v1513
    %v1553 = vsub.f32 %v1437, %v1515
    %v1554 = vsub.f32 %v1442, %v1517
    %v1555 = vsub.f32 %v1445, %v1519
    %v1556 = vsub.f32 %v1450, %v1521
    %v1557 = vsub.f32 %v1453, %v1523
    %v1558 = vsub.f32 %v1458, %v1525
    %v1559 = vsub.f32 %v1461, %v1527
    %v1560 = vmul.f32 %v1528, 1.442695
    %v1561 = vpow.pop %v1560
    %v1562 = vmul.f32 %v1529, 1.442695
    %v1563 = vpow.pop %v1562
    %v1564 = vmul.f32 %v1530, 1.442695
    %v1565 = vpow.pop %v1564
    %v1566 = vmul.f32 %v1531, 1.442695
    %v1567 = vpow.pop %v1566
    %v1568 = vmul.f32 %v1532, 1.442695
    %v1569 = vpow.pop %v1568
    %v1570 = vmul.f32 %v1533, 1.442695
    %v1571 = vpow.pop %v1570
    %v1572 = vmul.f32 %v1534, 1.442695
    %v1573 = vpow.pop %v1572
    %v1574 = vmul.f32 %v1535, 1.442695
    %v1575 = vpow.pop %v1574
    %v1576 = vmul.f32 %v1536, 1.442695
    %v1577 = vpow.pop %v1576
    %v1578 = vmul.f32 %v1537, 1.442695
    %v1579 = vpow.pop %v1578
    %v1580 = vmul.f32 %v1538, 1.442695
    %v1581 = vpow.pop %v1580
    %v1582 = vmul.f32 %v1539, 1.442695
    %v1583 = vpow.pop %v1582
    %v1584 = vmul.f32 %v1540, 1.442695
    %v1585 = vpow.pop %v1584
    %v1586 = vmul.f32 %v1541, 1.442695
    %v1587 = vpow.pop %v1586
    %v1588 = vmul.f32 %v1542, 1.442695
    %v1589 = vpow.pop %v1588
    %v1590 = vmul.f32 %v1543, 1.442695
    %v1591 = vpow.pop %v1590
    %v1592 = vmul.f32 %v1544, 1.442695
    %v1593 = vpow.pop %v1592
    %v1594 = vmul.f32 %v1545, 1.442695
    %v1595 = vpow.pop %v1594
    %v1596 = vmul.f32 %v1546, 1.442695
    %v1597 = vpow.pop %v1596
    %v1598 = vmul.f32 %v1547, 1.442695
    %v1599 = vpow.pop %v1598
    %v1600 = vmul.f32 %v1548, 1.442695
    %v1601 = vpow.pop %v1600
    %v1602 = vmul.f32 %v1549, 1.442695
    %v1603 = vpow.pop %v1602
    %v1604 = vmul.f32 %v1550, 1.442695
    %v1605 = vpow.pop %v1604
    %v1606 = vmul.f32 %v1551, 1.442695
    %v1607 = vpow.pop %v1606
    %v1608 = vmul.f32 %v1552, 1.442695
    %v1609 = vpow.pop %v1608
    %v1610 = vmul.f32 %v1553, 1.442695
    %v1611 = vpow.pop %v1610
    %v1612 = vmul.f32 %v1554, 1.442695
    %v1613 = vpow.pop %v1612
    %v1614 = vmul.f32 %v1555, 1.442695
    %v1615 = vpow.pop %v1614
    %v1616 = vmul.f32 %v1556, 1.442695
    %v1617 = vpow.pop %v1616
    %v1618 = vmul.f32 %v1557, 1.442695
    %v1619 = vpow.pop %v1618
    %v1620 = vmul.f32 %v1558, 1.442695
    %v1621 = vpow.pop %v1620
    %v1622 = vmul.f32 %v1559, 1.442695
    %v1623 = vpow.pop %v1622
    %1624 = vadd.xlane.f32.xlu0 %v1561
    %v1625 = vpop.xlane.xlu0 %1624
    %1626 = vadd.xlane.f32.xlu0 %v1563
    %v1627 = vpop.xlane.xlu0 %1626
    %1628 = vadd.xlane.f32.xlu0 %v1565
    %v1629 = vpop.xlane.xlu0 %1628
    %1630 = vadd.xlane.f32.xlu0 %v1567
    %v1631 = vpop.xlane.xlu0 %1630
    %1632 = vadd.xlane.f32.xlu0 %v1569
    %v1633 = vpop.xlane.xlu0 %1632
    %1634 = vadd.xlane.f32.xlu0 %v1571
    %v1635 = vpop.xlane.xlu0 %1634
    %1636 = vadd.xlane.f32.xlu0 %v1573
    %v1637 = vpop.xlane.xlu0 %1636
    %1638 = vadd.xlane.f32.xlu0 %v1575
    %v1639 = vpop.xlane.xlu0 %1638
    %1640 = vadd.xlane.f32.xlu0 %v1577
    %v1641 = vpop.xlane.xlu0 %1640
    %1642 = vadd.xlane.f32.xlu0 %v1579
    %v1643 = vpop.xlane.xlu0 %1642
    %1644 = vadd.xlane.f32.xlu0 %v1581
    %v1645 = vpop.xlane.xlu0 %1644
    %1646 = vadd.xlane.f32.xlu0 %v1583
    %v1647 = vpop.xlane.xlu0 %1646
    %1648 = vadd.xlane.f32.xlu0 %v1585
    %v1649 = vpop.xlane.xlu0 %1648
    %1650 = vadd.xlane.f32.xlu0 %v1587
    %v1651 = vpop.xlane.xlu0 %1650
    %1652 = vadd.xlane.f32.xlu0 %v1589
    %v1653 = vpop.xlane.xlu0 %1652
    %1654 = vadd.xlane.f32.xlu0 %v1591
    %v1655 = vpop.xlane.xlu0 %1654
    %1656 = vadd.xlane.f32.xlu0 %v1593
    %v1657 = vpop.xlane.xlu0 %1656
    %1658 = vadd.xlane.f32.xlu0 %v1595
    %v1659 = vpop.xlane.xlu0 %1658
    %1660 = vadd.xlane.f32.xlu0 %v1597
    %v1661 = vpop.xlane.xlu0 %1660
    %1662 = vadd.xlane.f32.xlu0 %v1599
    %v1663 = vpop.xlane.xlu0 %1662
    %1664 = vadd.xlane.f32.xlu0 %v1601
    %v1665 = vpop.xlane.xlu0 %1664
    %1666 = vadd.xlane.f32.xlu0 %v1603
    %v1667 = vpop.xlane.xlu0 %1666
    %1668 = vadd.xlane.f32.xlu0 %v1605
    %v1669 = vpop.xlane.xlu0 %1668
    %1670 = vadd.xlane.f32.xlu0 %v1607
    %v1671 = vpop.xlane.xlu0 %1670
    %1672 = vadd.xlane.f32.xlu0 %v1609
    %v1673 = vpop.xlane.xlu0 %1672
    %1674 = vadd.xlane.f32.xlu0 %v1611
    %v1675 = vpop.xlane.xlu0 %1674
    %1676 = vadd.xlane.f32.xlu0 %v1613
    %v1677 = vpop.xlane.xlu0 %1676
    %1678 = vadd.xlane.f32.xlu0 %v1615
    %v1679 = vpop.xlane.xlu0 %1678
    %1680 = vadd.xlane.f32.xlu0 %v1617
    %v1681 = vpop.xlane.xlu0 %1680
    %1682 = vadd.xlane.f32.xlu0 %v1619
    %v1683 = vpop.xlane.xlu0 %1682
    %1684 = vadd.xlane.f32.xlu0 %v1621
    %v1685 = vpop.xlane.xlu0 %1684
    %1686 = vadd.xlane.f32.xlu0 %v1623
    %v1687 = vpop.xlane.xlu0 %1686
    %v1688 = vlog2.pop %v1625
    %v1689 = vmul.f32 %v1688, 0.6931472
    %v1690 = vlog2.pop %v1627
    %v1691 = vmul.f32 %v1690, 0.6931472
    %v1692 = vlog2.pop %v1629
    %v1693 = vmul.f32 %v1692, 0.6931472
    %v1694 = vlog2.pop %v1631
    %v1695 = vmul.f32 %v1694, 0.6931472
    %v1696 = vlog2.pop %v1633
    %v1697 = vmul.f32 %v1696, 0.6931472
    %v1698 = vlog2.pop %v1635
    %v1699 = vmul.f32 %v1698, 0.6931472
    %v1700 = vlog2.pop %v1637
    %v1701 = vmul.f32 %v1700, 0.6931472
    %v1702 = vlog2.pop %v1639
    %v1703 = vmul.f32 %v1702, 0.6931472
    %v1704 = vlog2.pop %v1641
    %v1705 = vmul.f32 %v1704, 0.6931472
    %v1706 = vlog2.pop %v1643
    %v1707 = vmul.f32 %v1706, 0.6931472
    %v1708 = vlog2.pop %v1645
    %v1709 = vmul.f32 %v1708, 0.6931472
    %v1710 = vlog2.pop %v1647
    %v1711 = vmul.f32 %v1710, 0.6931472
    %v1712 = vlog2.pop %v1649
    %v1713 = vmul.f32 %v1712, 0.6931472
    %v1714 = vlog2.pop %v1651
    %v1715 = vmul.f32 %v1714, 0.6931472
    %v1716 = vlog2.pop %v1653
    %v1717 = vmul.f32 %v1716, 0.6931472
    %v1718 = vlog2.pop %v1655
    %v1719 = vmul.f32 %v1718, 0.6931472
    %v1720 = vlog2.pop %v1657
    %v1721 = vmul.f32 %v1720, 0.6931472
    %v1722 = vlog2.pop %v1659
    %v1723 = vmul.f32 %v1722, 0.6931472
    %v1724 = vlog2.pop %v1661
    %v1725 = vmul.f32 %v1724, 0.6931472
    %v1726 = vlog2.pop %v1663
    %v1727 = vmul.f32 %v1726, 0.6931472
    %v1728 = vlog2.pop %v1665
    %v1729 = vmul.f32 %v1728, 0.6931472
    %v1730 = vlog2.pop %v1667
    %v1731 = vmul.f32 %v1730, 0.6931472
    %v1732 = vlog2.pop %v1669
    %v1733 = vmul.f32 %v1732, 0.6931472
    %v1734 = vlog2.pop %v1671
    %v1735 = vmul.f32 %v1734, 0.6931472
    %v1736 = vlog2.pop %v1673
    %v1737 = vmul.f32 %v1736, 0.6931472
    %v1738 = vlog2.pop %v1675
    %v1739 = vmul.f32 %v1738, 0.6931472
    %v1740 = vlog2.pop %v1677
    %v1741 = vmul.f32 %v1740, 0.6931472
    %v1742 = vlog2.pop %v1679
    %v1743 = vmul.f32 %v1742, 0.6931472
    %v1744 = vlog2.pop %v1681
    %v1745 = vmul.f32 %v1744, 0.6931472
    %v1746 = vlog2.pop %v1683
    %v1747 = vmul.f32 %v1746, 0.6931472
    %v1748 = vlog2.pop %v1685
    %v1749 = vmul.f32 %v1748, 0.6931472
    %v1750 = vlog2.pop %v1687
    %v1751 = vmul.f32 %v1750, 0.6931472
    %v1752 = vsub.f32 %v1528, %v1689
    %v1753 = vsub.f32 %v1529, %v1691
    %v1754 = vsub.f32 %v1530, %v1693
    %v1755 = vsub.f32 %v1531, %v1695
    %v1756 = vsub.f32 %v1532, %v1697
    %v1757 = vsub.f32 %v1533, %v1699
    %v1758 = vsub.f32 %v1534, %v1701
    %v1759 = vsub.f32 %v1535, %v1703
    %v1760 = vsub.f32 %v1536, %v1705
    %v1761 = vsub.f32 %v1537, %v1707
    %v1762 = vsub.f32 %v1538, %v1709
    %v1763 = vsub.f32 %v1539, %v1711
    %v1764 = vsub.f32 %v1540, %v1713
    %v1765 = vsub.f32 %v1541, %v1715
    %v1766 = vsub.f32 %v1542, %v1717
    %v1767 = vsub.f32 %v1543, %v1719
    %v1768 = vsub.f32 %v1544, %v1721
    %v1769 = vsub.f32 %v1545, %v1723
    %v1770 = vsub.f32 %v1546, %v1725
    %v1771 = vsub.f32 %v1547, %v1727
    %v1772 = vsub.f32 %v1548, %v1729
    %v1773 = vsub.f32 %v1549, %v1731
    %v1774 = vsub.f32 %v1550, %v1733
    %v1775 = vsub.f32 %v1551, %v1735
    %v1776 = vsub.f32 %v1552, %v1737
    %v1777 = vsub.f32 %v1553, %v1739
    %v1778 = vsub.f32 %v1554, %v1741
    %v1779 = vsub.f32 %v1555, %v1743
    %v1780 = vsub.f32 %v1556, %v1745
    %v1781 = vsub.f32 %v1557, %v1747
    %v1782 = vsub.f32 %v1558, %v1749
    %v1783 = vsub.f32 %v1559, %v1751
    %1784 = vst [vmem:[#allocation2] sm:$0xff] %v1752
    %1785 = vst [vmem:[#allocation2 + $0x8] sm:$0xff] %v1753
    %1786 = vst [vmem:[#allocation2 + $0x10] sm:$0xff] %v1754
    %1787 = vst [vmem:[#allocation2 + $0x18] sm:$0xff] %v1755
    %1788 = vst [vmem:[#allocation2 + $0x20] sm:$0xff] %v1756
    %1789 = vst [vmem:[#allocation2 + $0x28] sm:$0xff] %v1757
    %1790 = vst [vmem:[#allocation2 + $0x30] sm:$0xff] %v1758
    %1791 = vst [vmem:[#allocation2 + $0x38] sm:$0xff] %v1759
    %1792 = vst [vmem:[#allocation2 + $0x40] sm:$0xff] %v1760
    %1793 = vst [vmem:[#allocation2 + $0x48] sm:$0xff] %v1761
    %1794 = vst [vmem:[#allocation2 + $0x50] sm:$0xff] %v1762
    %1795 = vst [vmem:[#allocation2 + $0x58] sm:$0xff] %v1763
    %1796 = vst [vmem:[#allocation2 + $0x60] sm:$0xff] %v1764
    %1797 = vst [vmem:[#allocation2 + $0x68] sm:$0xff] %v1765
    %1798 = vst [vmem:[#allocation2 + $0x70] sm:$0xff] %v1766
    %1799 = vst [vmem:[#allocation2 + $0x78] sm:$0xff] %v1767
    %1800 = vst [vmem:[#allocation2 + $0x80] sm:$0xff] %v1768
    %1801 = vst [vmem:[#allocation2 + $0x88] sm:$0xff] %v1769
    %1802 = vst [vmem:[#allocation2 + $0x90] sm:$0xff] %v1770
    %1803 = vst [vmem:[#allocation2 + $0x98] sm:$0xff] %v1771
    %1804 = vst [vmem:[#allocation2 + $0xa0] sm:$0xff] %v1772
    %1805 = vst [vmem:[#allocation2 + $0xa8] sm:$0xff] %v1773
    %1806 = vst [vmem:[#allocation2 + $0xb0] sm:$0xff] %v1774
    %1807 = vst [vmem:[#allocation2 + $0xb8] sm:$0xff] %v1775
    %1808 = vst [vmem:[#allocation2 + $0xc0] sm:$0xff] %v1776
    %1809 = vst [vmem:[#allocation2 + $0xc8] sm:$0xff] %v1777
    %1810 = vst [vmem:[#allocation2 + $0xd0] sm:$0xff] %v1778
    %1811 = vst [vmem:[#allocation2 + $0xd8] sm:$0xff] %v1779
    %1812 = vst [vmem:[#allocation2 + $0xe0] sm:$0xff] %v1780
    %1813 = vst [vmem:[#allocation2 + $0xe8] sm:$0xff] %v1781
    %1814 = vst [vmem:[#allocation2 + $0xf0] sm:$0xff] %v1782
    %1815 = vst [vmem:[#allocation2 + $0xf8] sm:$0xff] %v1783
    // Predicated region
    $region22: #{tpu_custom_call.1} parent=1 // pred_check
      _
    $region23: #{tpu_custom_call.1} parent=1 // pred_check_branch
      %1817 = sbr.rel (0) target = $region25
    $region24: #{tpu_custom_call.1} parent=1 // pred_region
      %s1819 = ssub.s32 4096, 4096
      %1820 = vsyncadd [#allocation3], %s1819
      %s1821 = sshll.u32 [#allocation2], 4
      %s1822 = int_to_ptr.vmem [resolvable:$true] %s1821
      %1827 = dma.vmem_to_hbm [thread:$0]  %s1822, 4096, %s5, [#allocation3], 128, 128, 8
    $region25: #{tpu_custom_call.1} parent=1 // pred_fallthru
      _
    // Predicated region
    $region26: #{tpu_custom_call.1} parent=1 // pred_check
      _
    $region27: #{tpu_custom_call.1} parent=1 // pred_check_branch
      %1829 = sbr.rel (0) target = $region29
    $region28: #{tpu_custom_call.1} parent=1 // pred_region
      %1830 = dma.done [#allocation3], 4096
    $region29: #{tpu_custom_call.1} parent=1 // pred_fallthru
      _
    %1831 = vsyncpa [#allocation3], 1

</llo_original>
